<compile_context>
chip_gen: v7x
topology: tpu7x:2x2x1
jax: 0.10.0
libtpu: 0.0.40
codegen_flags: <defaults>
</compile_context>

<pallas_src>
import math
import functools

import jax
import jax.numpy as jnp
from jax.experimental import pallas as pl
from jax.experimental.pallas import tpu as pltpu


_SUBLANE = 8     # f32 sublane tile
_LANE = 128      # lane tile


def _round_up(n, m):
    return ((n + m - 1) // m) * m


# -----------------------------------------------------------------------------
# Fused Pallas kernel: nb_layer ReLU-RNN layers (wavefront schedule) + Linear
# -----------------------------------------------------------------------------
def fused_rnn_kernel(nb_layer, T, Bp, x_ref, *refs):
    """Inputs (all VMEM, padded):
         x_ref : (T*Bp, D)         time-major flattened input, bf16
         refs  : [w_ih_0, w_hh_0, b_ih_0, b_hh_0, ... x nb_layer,
                  w_out, b_out, o_ref]
       w_ih_0  : (D,  Hp) bf16     w_ih_l>=1 : (Hp, Hp) bf16
       w_hh_l  : (Hp, Hp) bf16     b_ih_l/b_hh_l : (1, Hp) f32 (zero-padded)
       w_out   : (Hp, Lp) bf16     b_out : (1, Lp) f32
       o_ref   : (Bp, Lp) f32      lane-dense padded output block
    """
    o_ref = refs[-1]
    w_out_ref, b_out_ref = refs[-3], refs[-2]
    lr = refs[:-3]
    w_ih = [lr[4 * l + 0] for l in range(nb_layer)]
    w_hh = [lr[4 * l + 1] for l in range(nb_layer)]
    b_ih = [lr[4 * l + 2] for l in range(nb_layer)]
    b_hh = [lr[4 * l + 3] for l in range(nb_layer)]
    Hp = w_hh[0].shape[0]

    # Hoisted layer-0 input projection: one well-shaped (T*Bp, D)x(D, Hp)
    # matmul, off the serial recurrence path.  f32 accumulation.
    gi0 = jnp.dot(x_ref[...], w_ih[0][...], preferred_element_type=jnp.float32)

    # Per-layer fused bias, broadcast once (JAX does not CSE broadcast_in_dim).
    bias = [jnp.broadcast_to(b_ih[l][...] + b_hh[l][...], (Bp, Hp))
            for l in range(nb_layer)]

    # Hidden-state carries, kept in vregs; bf16 copies feed the MXU directly.
    h = [jnp.zeros((Bp, Hp), jnp.bfloat16) for _ in range(nb_layer)]

    # Wavefront schedule: at wave w, layer l processes timestep t = w - l.
    # All (l, t) cells of one wave depend only on wave w-1 results, so up to
    # min(nb_layer, T) matmuls per wave are independent and can overlap on the
    # MXU.  Fully unrolled (T, nb_layer static and small).
    for w in range(T + nb_layer - 1):
        prev = list(h)                                  # snapshot wave w-1
        for l in range(nb_layer):
            t = w - l
            if not (0 <= t < T):
                continue
            if l == 0:
                # Aligned (Bp, Hp) = one (8,128) tile of the hoisted projection.
                xin = gi0[t * Bp:(t + 1) * Bp, :]
            else:
                xin = jnp.dot(prev[l - 1], w_ih[l][...],
                              preferred_element_type=jnp.float32)
            gh = jnp.dot(prev[l], w_hh[l][...],
                         preferred_element_type=jnp.float32)
            # h_t = relu(x_t @ W_ih^T + b_ih + h_{t-1} @ W_hh^T + b_hh)
            h[l] = jnp.maximum(xin + gh + bias[l], 0.0).astype(jnp.bfloat16)

    # Linear head on the last layer's final hidden state; lane-dense padded
    # output block -> unmasked stores.
    o_ref[...] = jnp.dot(h[nb_layer - 1], w_out_ref[...],
                         preferred_element_type=jnp.float32) + b_out_ref[...]


# -----------------------------------------------------------------------------
# Wrapper
# -----------------------------------------------------------------------------
_VMEM = pl.BlockSpec(memory_space=pltpu.MemorySpace.VMEM)


@jax.jit
def rnn_forward(x, layer_params, w_out_t, b_out):
    """x: (B, T, D) batch_first.  Returns (B, nb_labels), float32."""
    B, T, D = x.shape
    H, L = w_out_t.shape
    nb_layer = len(layer_params)
    Bp = _round_up(max(B, _SUBLANE), _SUBLANE)
    Hp = _round_up(max(H, _LANE), _LANE)
    Lp = _round_up(max(L, _LANE), _LANE)

    # Pad batch to a full sublane tile, go time-major, flatten, cast the matmul
    # operand to bf16.  Single small XLA fusion.
    xp = jnp.pad(x, ((0, Bp - B), (0, 0), (0, 0)))
    x_tm = jnp.transpose(xp, (1, 0, 2)).reshape(T * Bp, D).astype(jnp.bfloat16)

    # Zero-pad weights/biases to lane-tile-aligned shapes (mathematically exact:
    # padded hidden lanes stay identically 0 through ReLU).
    flat = []
    for li, (w_ih_t, w_hh_t, b_ih, b_hh) in enumerate(layer_params):
        d_in = w_ih_t.shape[0]
        d_in_p = d_in if li == 0 else Hp        # layers >= 1 consume padded h
        flat += [
            jnp.pad(w_ih_t, ((0, d_in_p - d_in), (0, Hp - H))).astype(jnp.bfloat16),
            jnp.pad(w_hh_t, ((0, Hp - H), (0, Hp - H))).astype(jnp.bfloat16),
            jnp.pad(b_ih, ((0, 0), (0, Hp - H))),
            jnp.pad(b_hh, ((0, 0), (0, Hp - H))),
        ]
    flat += [
        jnp.pad(w_out_t, ((0, Hp - H), (0, Lp - L))).astype(jnp.bfloat16),
        jnp.pad(b_out, ((0, 0), (0, Lp - L))),
    ]

    kernel = functools.partial(fused_rnn_kernel, nb_layer, T, Bp)
    out_p = pl.pallas_call(
        kernel,
        out_shape=jax.ShapeDtypeStruct((Bp, Lp), jnp.float32),
        in_specs=[_VMEM] * (1 + len(flat)),
        out_specs=_VMEM,
    )(x_tm, *flat)
    return out_p[:B, :L]


# -----------------------------------------------------------------------------
# Pure-JAX reference (same math as torch.nn.RNN(relu) eval forward + Linear)
# -----------------------------------------------------------------------------
def rnn_ref(x, layer_params, w_out_t, b_out):
    seq = x  # (B, T, D)
    for (w_ih_t, w_hh_t, b_ih, b_hh) in layer_params:
        B, T, _ = seq.shape
        H = w_hh_t.shape[0]
        h = jnp.zeros((B, H), jnp.float32)
        outs = []
        for t in range(T):
            h = jnp.maximum(seq[:, t, :] @ w_ih_t + b_ih + h @ w_hh_t + b_hh, 0.0)
            outs.append(h)
        seq = jnp.stack(outs, axis=1)
    return seq[:, -1, :] @ w_out_t + b_out


# -----------------------------------------------------------------------------
# Deterministic parameter init (shapes follow nn.RNN / nn.Linear)
# -----------------------------------------------------------------------------
def init_params(key, input_size, hidden, nb_layer, nb_labels):
    stdv = 1.0 / math.sqrt(hidden)
    layer_params = []
    for layer in range(nb_layer):
        d_in = input_size if layer == 0 else hidden
        key, k1, k2, k3, k4 = jax.random.split(key, 5)
        # PyTorch stores (H, d_in) / (H, H); we pre-transpose for x @ W.T
        w_ih_t = jax.random.uniform(k1, (d_in, hidden), jnp.float32, -stdv, stdv)
        w_hh_t = jax.random.uniform(k2, (hidden, hidden), jnp.float32, -stdv, stdv)
        b_ih = jax.random.uniform(k3, (1, hidden), jnp.float32, -stdv, stdv)
        b_hh = jax.random.uniform(k4, (1, hidden), jnp.float32, -stdv, stdv)
        layer_params.append((w_ih_t, w_hh_t, b_ih, b_hh))
    key, k5, k6 = jax.random.split(key, 3)
    stdv_out = 1.0 / math.sqrt(hidden)
    w_out_t = jax.random.uniform(k5, (hidden, nb_labels), jnp.float32,
                                 -stdv_out, stdv_out)
    b_out = jax.random.uniform(k6, (1, nb_labels), jnp.float32,
                               -stdv_out, stdv_out)
    return tuple(layer_params), w_out_t, b_out


# -----------------------------------------------------------------------------
if __name__ == "__main__":
    B, T = 2, 8
    input_size = 16
    hidden_units = 32
    nb_layer = 6
    nb_labels = 4

    key = jax.random.PRNGKey(0)
    key, kx, kp = jax.random.split(key, 3)

    x = jax.random.normal(kx, (B, T, input_size), jnp.float32)
    layer_params, w_out_t, b_out = init_params(kp, input_size, hidden_units,
                                               nb_layer, nb_labels)

    out = rnn_forward(x, layer_params, w_out_t, b_out)
    out = jax.block_until_ready(out)

    ref = rnn_ref(x, layer_params, w_out_t, b_out)
    assert out.shape == (B, nb_labels)
    # bf16 MXU operands across a 6-layer x 8-step recurrence -> loosened tol.
    assert jnp.allclose(out, ref, atol=5e-2, rtol=5e-2), (out, ref)

    print("KERNEL_OK")
</pallas_src>

<mosaic_0001>
module attributes {stable_mosaic.version = 11 : i64} {
  func.func @fused_rnn_kernel(%arg0: memref<64x16xbf16, #tpu.memory_space<vmem>>, %arg1: memref<16x128xbf16, #tpu.memory_space<vmem>>, %arg2: memref<128x128xbf16, #tpu.memory_space<vmem>>, %arg3: memref<1x128xf32, #tpu.memory_space<vmem>>, %arg4: memref<1x128xf32, #tpu.memory_space<vmem>>, %arg5: memref<128x128xbf16, #tpu.memory_space<vmem>>, %arg6: memref<128x128xbf16, #tpu.memory_space<vmem>>, %arg7: memref<1x128xf32, #tpu.memory_space<vmem>>, %arg8: memref<1x128xf32, #tpu.memory_space<vmem>>, %arg9: memref<128x128xbf16, #tpu.memory_space<vmem>>, %arg10: memref<128x128xbf16, #tpu.memory_space<vmem>>, %arg11: memref<1x128xf32, #tpu.memory_space<vmem>>, %arg12: memref<1x128xf32, #tpu.memory_space<vmem>>, %arg13: memref<128x128xbf16, #tpu.memory_space<vmem>>, %arg14: memref<128x128xbf16, #tpu.memory_space<vmem>>, %arg15: memref<1x128xf32, #tpu.memory_space<vmem>>, %arg16: memref<1x128xf32, #tpu.memory_space<vmem>>, %arg17: memref<128x128xbf16, #tpu.memory_space<vmem>>, %arg18: memref<128x128xbf16, #tpu.memory_space<vmem>>, %arg19: memref<1x128xf32, #tpu.memory_space<vmem>>, %arg20: memref<1x128xf32, #tpu.memory_space<vmem>>, %arg21: memref<128x128xbf16, #tpu.memory_space<vmem>>, %arg22: memref<128x128xbf16, #tpu.memory_space<vmem>>, %arg23: memref<1x128xf32, #tpu.memory_space<vmem>>, %arg24: memref<1x128xf32, #tpu.memory_space<vmem>>, %arg25: memref<128x128xbf16, #tpu.memory_space<vmem>>, %arg26: memref<1x128xf32, #tpu.memory_space<vmem>>, %arg27: memref<8x128xf32, #tpu.memory_space<vmem>>) attributes {dimension_semantics = [], scalar_prefetch = 0 : i64, scratch_operands = 0 : i64, tpu.core_type = #tpu.core_type<tc>} {
    %c0 = arith.constant 0 : index
    %c0_0 = arith.constant 0 : index
    %0 = vector.load %arg0[%c0, %c0_0] : memref<64x16xbf16, #tpu.memory_space<vmem>>, vector<64x16xbf16>
    %c0_1 = arith.constant 0 : index
    %c0_2 = arith.constant 0 : index
    %1 = vector.load %arg1[%c0_1, %c0_2] : memref<16x128xbf16, #tpu.memory_space<vmem>>, vector<16x128xbf16>
    %cst = arith.constant dense<0.000000e+00> : vector<64x128xf32>
    %2 = tpu.matmul %0, %1, %cst {dimension_numbers = #tpu.dot_dimension_numbers<[1], [0], [0], [1], [0, 0, 1, 1], [], []>} : vector<64x16xbf16>, vector<16x128xbf16>, vector<64x128xf32> -> vector<64x128xf32>
    %c0_3 = arith.constant 0 : index
    %c0_4 = arith.constant 0 : index
    %3 = vector.load %arg3[%c0_3, %c0_4] : memref<1x128xf32, #tpu.memory_space<vmem>>, vector<1x128xf32>
    %c0_5 = arith.constant 0 : index
    %c0_6 = arith.constant 0 : index
    %4 = vector.load %arg4[%c0_5, %c0_6] : memref<1x128xf32, #tpu.memory_space<vmem>>, vector<1x128xf32>
    %5 = arith.addf %3, %4 : vector<1x128xf32>
    %6 = vector.shape_cast %5 : vector<1x128xf32> to vector<1x128xf32>
    %7 = vector.broadcast %6 : vector<1x128xf32> to vector<8x128xf32>
    %c0_7 = arith.constant 0 : index
    %c0_8 = arith.constant 0 : index
    %8 = vector.load %arg7[%c0_7, %c0_8] : memref<1x128xf32, #tpu.memory_space<vmem>>, vector<1x128xf32>
    %c0_9 = arith.constant 0 : index
    %c0_10 = arith.constant 0 : index
    %9 = vector.load %arg8[%c0_9, %c0_10] : memref<1x128xf32, #tpu.memory_space<vmem>>, vector<1x128xf32>
    %10 = arith.addf %8, %9 : vector<1x128xf32>
    %11 = vector.shape_cast %10 : vector<1x128xf32> to vector<1x128xf32>
    %12 = vector.broadcast %11 : vector<1x128xf32> to vector<8x128xf32>
    %c0_11 = arith.constant 0 : index
    %c0_12 = arith.constant 0 : index
    %13 = vector.load %arg11[%c0_11, %c0_12] : memref<1x128xf32, #tpu.memory_space<vmem>>, vector<1x128xf32>
    %c0_13 = arith.constant 0 : index
    %c0_14 = arith.constant 0 : index
    %14 = vector.load %arg12[%c0_13, %c0_14] : memref<1x128xf32, #tpu.memory_space<vmem>>, vector<1x128xf32>
    %15 = arith.addf %13, %14 : vector<1x128xf32>
    %16 = vector.shape_cast %15 : vector<1x128xf32> to vector<1x128xf32>
    %17 = vector.broadcast %16 : vector<1x128xf32> to vector<8x128xf32>
    %c0_15 = arith.constant 0 : index
    %c0_16 = arith.constant 0 : index
    %18 = vector.load %arg15[%c0_15, %c0_16] : memref<1x128xf32, #tpu.memory_space<vmem>>, vector<1x128xf32>
    %c0_17 = arith.constant 0 : index
    %c0_18 = arith.constant 0 : index
    %19 = vector.load %arg16[%c0_17, %c0_18] : memref<1x128xf32, #tpu.memory_space<vmem>>, vector<1x128xf32>
    %20 = arith.addf %18, %19 : vector<1x128xf32>
    %21 = vector.shape_cast %20 : vector<1x128xf32> to vector<1x128xf32>
    %22 = vector.broadcast %21 : vector<1x128xf32> to vector<8x128xf32>
    %c0_19 = arith.constant 0 : index
    %c0_20 = arith.constant 0 : index
    %23 = vector.load %arg19[%c0_19, %c0_20] : memref<1x128xf32, #tpu.memory_space<vmem>>, vector<1x128xf32>
    %c0_21 = arith.constant 0 : index
    %c0_22 = arith.constant 0 : index
    %24 = vector.load %arg20[%c0_21, %c0_22] : memref<1x128xf32, #tpu.memory_space<vmem>>, vector<1x128xf32>
    %25 = arith.addf %23, %24 : vector<1x128xf32>
    %26 = vector.shape_cast %25 : vector<1x128xf32> to vector<1x128xf32>
    %27 = vector.broadcast %26 : vector<1x128xf32> to vector<8x128xf32>
    %c0_23 = arith.constant 0 : index
    %c0_24 = arith.constant 0 : index
    %28 = vector.load %arg23[%c0_23, %c0_24] : memref<1x128xf32, #tpu.memory_space<vmem>>, vector<1x128xf32>
    %c0_25 = arith.constant 0 : index
    %c0_26 = arith.constant 0 : index
    %29 = vector.load %arg24[%c0_25, %c0_26] : memref<1x128xf32, #tpu.memory_space<vmem>>, vector<1x128xf32>
    %30 = arith.addf %28, %29 : vector<1x128xf32>
    %31 = vector.shape_cast %30 : vector<1x128xf32> to vector<1x128xf32>
    %32 = vector.broadcast %31 : vector<1x128xf32> to vector<8x128xf32>
    %cst_27 = arith.constant 0.000000e+00 : bf16
    %33 = vector.broadcast %cst_27 : bf16 to vector<8x128xbf16>
    %cst_28 = arith.constant 0.000000e+00 : bf16
    %34 = vector.broadcast %cst_28 : bf16 to vector<8x128xbf16>
    %cst_29 = arith.constant 0.000000e+00 : bf16
    %35 = vector.broadcast %cst_29 : bf16 to vector<8x128xbf16>
    %cst_30 = arith.constant 0.000000e+00 : bf16
    %36 = vector.broadcast %cst_30 : bf16 to vector<8x128xbf16>
    %cst_31 = arith.constant 0.000000e+00 : bf16
    %37 = vector.broadcast %cst_31 : bf16 to vector<8x128xbf16>
    %cst_32 = arith.constant 0.000000e+00 : bf16
    %38 = vector.broadcast %cst_32 : bf16 to vector<8x128xbf16>
    %39 = vector.extract_strided_slice %2 {offsets = [0, 0], sizes = [8, 128], strides = [1, 1]} : vector<64x128xf32> to vector<8x128xf32>
    %c0_33 = arith.constant 0 : index
    %c0_34 = arith.constant 0 : index
    %40 = vector.load %arg2[%c0_33, %c0_34] : memref<128x128xbf16, #tpu.memory_space<vmem>>, vector<128x128xbf16>
    %cst_35 = arith.constant dense<0.000000e+00> : vector<8x128xf32>
    %41 = tpu.matmul %33, %40, %cst_35 {dimension_numbers = #tpu.dot_dimension_numbers<[1], [0], [0], [1], [0, 0, 1, 1], [], []>} : vector<8x128xbf16>, vector<128x128xbf16>, vector<8x128xf32> -> vector<8x128xf32>
    %42 = arith.addf %39, %41 : vector<8x128xf32>
    %43 = arith.addf %42, %7 : vector<8x128xf32>
    %cst_36 = arith.constant 0.000000e+00 : f32
    %44 = vector.broadcast %cst_36 : f32 to vector<8x128xf32>
    %45 = arith.maximumf %43, %44 : vector<8x128xf32>
    %46 = arith.truncf %45 : vector<8x128xf32> to vector<8x128xbf16>
    %47 = vector.extract_strided_slice %2 {offsets = [8, 0], sizes = [8, 128], strides = [1, 1]} : vector<64x128xf32> to vector<8x128xf32>
    %c0_37 = arith.constant 0 : index
    %c0_38 = arith.constant 0 : index
    %48 = vector.load %arg2[%c0_37, %c0_38] : memref<128x128xbf16, #tpu.memory_space<vmem>>, vector<128x128xbf16>
    %cst_39 = arith.constant dense<0.000000e+00> : vector<8x128xf32>
    %49 = tpu.matmul %46, %48, %cst_39 {dimension_numbers = #tpu.dot_dimension_numbers<[1], [0], [0], [1], [0, 0, 1, 1], [], []>} : vector<8x128xbf16>, vector<128x128xbf16>, vector<8x128xf32> -> vector<8x128xf32>
    %50 = arith.addf %47, %49 : vector<8x128xf32>
    %51 = arith.addf %50, %7 : vector<8x128xf32>
    %cst_40 = arith.constant 0.000000e+00 : f32
    %52 = vector.broadcast %cst_40 : f32 to vector<8x128xf32>
    %53 = arith.maximumf %51, %52 : vector<8x128xf32>
    %54 = arith.truncf %53 : vector<8x128xf32> to vector<8x128xbf16>
    %c0_41 = arith.constant 0 : index
    %c0_42 = arith.constant 0 : index
    %55 = vector.load %arg5[%c0_41, %c0_42] : memref<128x128xbf16, #tpu.memory_space<vmem>>, vector<128x128xbf16>
    %cst_43 = arith.constant dense<0.000000e+00> : vector<8x128xf32>
    %56 = tpu.matmul %46, %55, %cst_43 {dimension_numbers = #tpu.dot_dimension_numbers<[1], [0], [0], [1], [0, 0, 1, 1], [], []>} : vector<8x128xbf16>, vector<128x128xbf16>, vector<8x128xf32> -> vector<8x128xf32>
    %c0_44 = arith.constant 0 : index
    %c0_45 = arith.constant 0 : index
    %57 = vector.load %arg6[%c0_44, %c0_45] : memref<128x128xbf16, #tpu.memory_space<vmem>>, vector<128x128xbf16>
    %cst_46 = arith.constant dense<0.000000e+00> : vector<8x128xf32>
    %58 = tpu.matmul %34, %57, %cst_46 {dimension_numbers = #tpu.dot_dimension_numbers<[1], [0], [0], [1], [0, 0, 1, 1], [], []>} : vector<8x128xbf16>, vector<128x128xbf16>, vector<8x128xf32> -> vector<8x128xf32>
    %59 = arith.addf %56, %58 : vector<8x128xf32>
    %60 = arith.addf %59, %12 : vector<8x128xf32>
    %cst_47 = arith.constant 0.000000e+00 : f32
    %61 = vector.broadcast %cst_47 : f32 to vector<8x128xf32>
    %62 = arith.maximumf %60, %61 : vector<8x128xf32>
    %63 = arith.truncf %62 : vector<8x128xf32> to vector<8x128xbf16>
    %64 = vector.extract_strided_slice %2 {offsets = [16, 0], sizes = [8, 128], strides = [1, 1]} : vector<64x128xf32> to vector<8x128xf32>
    %c0_48 = arith.constant 0 : index
    %c0_49 = arith.constant 0 : index
    %65 = vector.load %arg2[%c0_48, %c0_49] : memref<128x128xbf16, #tpu.memory_space<vmem>>, vector<128x128xbf16>
    %cst_50 = arith.constant dense<0.000000e+00> : vector<8x128xf32>
    %66 = tpu.matmul %54, %65, %cst_50 {dimension_numbers = #tpu.dot_dimension_numbers<[1], [0], [0], [1], [0, 0, 1, 1], [], []>} : vector<8x128xbf16>, vector<128x128xbf16>, vector<8x128xf32> -> vector<8x128xf32>
    %67 = arith.addf %64, %66 : vector<8x128xf32>
    %68 = arith.addf %67, %7 : vector<8x128xf32>
    %cst_51 = arith.constant 0.000000e+00 : f32
    %69 = vector.broadcast %cst_51 : f32 to vector<8x128xf32>
    %70 = arith.maximumf %68, %69 : vector<8x128xf32>
    %71 = arith.truncf %70 : vector<8x128xf32> to vector<8x128xbf16>
    %c0_52 = arith.constant 0 : index
    %c0_53 = arith.constant 0 : index
    %72 = vector.load %arg5[%c0_52, %c0_53] : memref<128x128xbf16, #tpu.memory_space<vmem>>, vector<128x128xbf16>
    %cst_54 = arith.constant dense<0.000000e+00> : vector<8x128xf32>
    %73 = tpu.matmul %54, %72, %cst_54 {dimension_numbers = #tpu.dot_dimension_numbers<[1], [0], [0], [1], [0, 0, 1, 1], [], []>} : vector<8x128xbf16>, vector<128x128xbf16>, vector<8x128xf32> -> vector<8x128xf32>
    %c0_55 = arith.constant 0 : index
    %c0_56 = arith.constant 0 : index
    %74 = vector.load %arg6[%c0_55, %c0_56] : memref<128x128xbf16, #tpu.memory_space<vmem>>, vector<128x128xbf16>
    %cst_57 = arith.constant dense<0.000000e+00> : vector<8x128xf32>
    %75 = tpu.matmul %63, %74, %cst_57 {dimension_numbers = #tpu.dot_dimension_numbers<[1], [0], [0], [1], [0, 0, 1, 1], [], []>} : vector<8x128xbf16>, vector<128x128xbf16>, vector<8x128xf32> -> vector<8x128xf32>
    %76 = arith.addf %73, %75 : vector<8x128xf32>
    %77 = arith.addf %76, %12 : vector<8x128xf32>
    %cst_58 = arith.constant 0.000000e+00 : f32
    %78 = vector.broadcast %cst_58 : f32 to vector<8x128xf32>
    %79 = arith.maximumf %77, %78 : vector<8x128xf32>
    %80 = arith.truncf %79 : vector<8x128xf32> to vector<8x128xbf16>
    %c0_59 = arith.constant 0 : index
    %c0_60 = arith.constant 0 : index
    %81 = vector.load %arg9[%c0_59, %c0_60] : memref<128x128xbf16, #tpu.memory_space<vmem>>, vector<128x128xbf16>
    %cst_61 = arith.constant dense<0.000000e+00> : vector<8x128xf32>
    %82 = tpu.matmul %63, %81, %cst_61 {dimension_numbers = #tpu.dot_dimension_numbers<[1], [0], [0], [1], [0, 0, 1, 1], [], []>} : vector<8x128xbf16>, vector<128x128xbf16>, vector<8x128xf32> -> vector<8x128xf32>
    %c0_62 = arith.constant 0 : index
    %c0_63 = arith.constant 0 : index
    %83 = vector.load %arg10[%c0_62, %c0_63] : memref<128x128xbf16, #tpu.memory_space<vmem>>, vector<128x128xbf16>
    %cst_64 = arith.constant dense<0.000000e+00> : vector<8x128xf32>
    %84 = tpu.matmul %35, %83, %cst_64 {dimension_numbers = #tpu.dot_dimension_numbers<[1], [0], [0], [1], [0, 0, 1, 1], [], []>} : vector<8x128xbf16>, vector<128x128xbf16>, vector<8x128xf32> -> vector<8x128xf32>
    %85 = arith.addf %82, %84 : vector<8x128xf32>
    %86 = arith.addf %85, %17 : vector<8x128xf32>
    %cst_65 = arith.constant 0.000000e+00 : f32
    %87 = vector.broadcast %cst_65 : f32 to vector<8x128xf32>
    %88 = arith.maximumf %86, %87 : vector<8x128xf32>
    %89 = arith.truncf %88 : vector<8x128xf32> to vector<8x128xbf16>
    %90 = vector.extract_strided_slice %2 {offsets = [24, 0], sizes = [8, 128], strides = [1, 1]} : vector<64x128xf32> to vector<8x128xf32>
    %c0_66 = arith.constant 0 : index
    %c0_67 = arith.constant 0 : index
    %91 = vector.load %arg2[%c0_66, %c0_67] : memref<128x128xbf16, #tpu.memory_space<vmem>>, vector<128x128xbf16>
    %cst_68 = arith.constant dense<0.000000e+00> : vector<8x128xf32>
    %92 = tpu.matmul %71, %91, %cst_68 {dimension_numbers = #tpu.dot_dimension_numbers<[1], [0], [0], [1], [0, 0, 1, 1], [], []>} : vector<8x128xbf16>, vector<128x128xbf16>, vector<8x128xf32> -> vector<8x128xf32>
    %93 = arith.addf %90, %92 : vector<8x128xf32>
    %94 = arith.addf %93, %7 : vector<8x128xf32>
    %cst_69 = arith.constant 0.000000e+00 : f32
    %95 = vector.broadcast %cst_69 : f32 to vector<8x128xf32>
    %96 = arith.maximumf %94, %95 : vector<8x128xf32>
    %97 = arith.truncf %96 : vector<8x128xf32> to vector<8x128xbf16>
    %c0_70 = arith.constant 0 : index
    %c0_71 = arith.constant 0 : index
    %98 = vector.load %arg5[%c0_70, %c0_71] : memref<128x128xbf16, #tpu.memory_space<vmem>>, vector<128x128xbf16>
    %cst_72 = arith.constant dense<0.000000e+00> : vector<8x128xf32>
    %99 = tpu.matmul %71, %98, %cst_72 {dimension_numbers = #tpu.dot_dimension_numbers<[1], [0], [0], [1], [0, 0, 1, 1], [], []>} : vector<8x128xbf16>, vector<128x128xbf16>, vector<8x128xf32> -> vector<8x128xf32>
    %c0_73 = arith.constant 0 : index
    %c0_74 = arith.constant 0 : index
    %100 = vector.load %arg6[%c0_73, %c0_74] : memref<128x128xbf16, #tpu.memory_space<vmem>>, vector<128x128xbf16>
    %cst_75 = arith.constant dense<0.000000e+00> : vector<8x128xf32>
    %101 = tpu.matmul %80, %100, %cst_75 {dimension_numbers = #tpu.dot_dimension_numbers<[1], [0], [0], [1], [0, 0, 1, 1], [], []>} : vector<8x128xbf16>, vector<128x128xbf16>, vector<8x128xf32> -> vector<8x128xf32>
    %102 = arith.addf %99, %101 : vector<8x128xf32>
    %103 = arith.addf %102, %12 : vector<8x128xf32>
    %cst_76 = arith.constant 0.000000e+00 : f32
    %104 = vector.broadcast %cst_76 : f32 to vector<8x128xf32>
    %105 = arith.maximumf %103, %104 : vector<8x128xf32>
    %106 = arith.truncf %105 : vector<8x128xf32> to vector<8x128xbf16>
    %c0_77 = arith.constant 0 : index
    %c0_78 = arith.constant 0 : index
    %107 = vector.load %arg9[%c0_77, %c0_78] : memref<128x128xbf16, #tpu.memory_space<vmem>>, vector<128x128xbf16>
    %cst_79 = arith.constant dense<0.000000e+00> : vector<8x128xf32>
    %108 = tpu.matmul %80, %107, %cst_79 {dimension_numbers = #tpu.dot_dimension_numbers<[1], [0], [0], [1], [0, 0, 1, 1], [], []>} : vector<8x128xbf16>, vector<128x128xbf16>, vector<8x128xf32> -> vector<8x128xf32>
    %c0_80 = arith.constant 0 : index
    %c0_81 = arith.constant 0 : index
    %109 = vector.load %arg10[%c0_80, %c0_81] : memref<128x128xbf16, #tpu.memory_space<vmem>>, vector<128x128xbf16>
    %cst_82 = arith.constant dense<0.000000e+00> : vector<8x128xf32>
    %110 = tpu.matmul %89, %109, %cst_82 {dimension_numbers = #tpu.dot_dimension_numbers<[1], [0], [0], [1], [0, 0, 1, 1], [], []>} : vector<8x128xbf16>, vector<128x128xbf16>, vector<8x128xf32> -> vector<8x128xf32>
    %111 = arith.addf %108, %110 : vector<8x128xf32>
    %112 = arith.addf %111, %17 : vector<8x128xf32>
    %cst_83 = arith.constant 0.000000e+00 : f32
    %113 = vector.broadcast %cst_83 : f32 to vector<8x128xf32>
    %114 = arith.maximumf %112, %113 : vector<8x128xf32>
    %115 = arith.truncf %114 : vector<8x128xf32> to vector<8x128xbf16>
    %c0_84 = arith.constant 0 : index
    %c0_85 = arith.constant 0 : index
    %116 = vector.load %arg13[%c0_84, %c0_85] : memref<128x128xbf16, #tpu.memory_space<vmem>>, vector<128x128xbf16>
    %cst_86 = arith.constant dense<0.000000e+00> : vector<8x128xf32>
    %117 = tpu.matmul %89, %116, %cst_86 {dimension_numbers = #tpu.dot_dimension_numbers<[1], [0], [0], [1], [0, 0, 1, 1], [], []>} : vector<8x128xbf16>, vector<128x128xbf16>, vector<8x128xf32> -> vector<8x128xf32>
    %c0_87 = arith.constant 0 : index
    %c0_88 = arith.constant 0 : index
    %118 = vector.load %arg14[%c0_87, %c0_88] : memref<128x128xbf16, #tpu.memory_space<vmem>>, vector<128x128xbf16>
    %cst_89 = arith.constant dense<0.000000e+00> : vector<8x128xf32>
    %119 = tpu.matmul %36, %118, %cst_89 {dimension_numbers = #tpu.dot_dimension_numbers<[1], [0], [0], [1], [0, 0, 1, 1], [], []>} : vector<8x128xbf16>, vector<128x128xbf16>, vector<8x128xf32> -> vector<8x128xf32>
    %120 = arith.addf %117, %119 : vector<8x128xf32>
    %121 = arith.addf %120, %22 : vector<8x128xf32>
    %cst_90 = arith.constant 0.000000e+00 : f32
    %122 = vector.broadcast %cst_90 : f32 to vector<8x128xf32>
    %123 = arith.maximumf %121, %122 : vector<8x128xf32>
    %124 = arith.truncf %123 : vector<8x128xf32> to vector<8x128xbf16>
    %125 = vector.extract_strided_slice %2 {offsets = [32, 0], sizes = [8, 128], strides = [1, 1]} : vector<64x128xf32> to vector<8x128xf32>
    %c0_91 = arith.constant 0 : index
    %c0_92 = arith.constant 0 : index
    %126 = vector.load %arg2[%c0_91, %c0_92] : memref<128x128xbf16, #tpu.memory_space<vmem>>, vector<128x128xbf16>
    %cst_93 = arith.constant dense<0.000000e+00> : vector<8x128xf32>
    %127 = tpu.matmul %97, %126, %cst_93 {dimension_numbers = #tpu.dot_dimension_numbers<[1], [0], [0], [1], [0, 0, 1, 1], [], []>} : vector<8x128xbf16>, vector<128x128xbf16>, vector<8x128xf32> -> vector<8x128xf32>
    %128 = arith.addf %125, %127 : vector<8x128xf32>
    %129 = arith.addf %128, %7 : vector<8x128xf32>
    %cst_94 = arith.constant 0.000000e+00 : f32
    %130 = vector.broadcast %cst_94 : f32 to vector<8x128xf32>
    %131 = arith.maximumf %129, %130 : vector<8x128xf32>
    %132 = arith.truncf %131 : vector<8x128xf32> to vector<8x128xbf16>
    %c0_95 = arith.constant 0 : index
    %c0_96 = arith.constant 0 : index
    %133 = vector.load %arg5[%c0_95, %c0_96] : memref<128x128xbf16, #tpu.memory_space<vmem>>, vector<128x128xbf16>
    %cst_97 = arith.constant dense<0.000000e+00> : vector<8x128xf32>
    %134 = tpu.matmul %97, %133, %cst_97 {dimension_numbers = #tpu.dot_dimension_numbers<[1], [0], [0], [1], [0, 0, 1, 1], [], []>} : vector<8x128xbf16>, vector<128x128xbf16>, vector<8x128xf32> -> vector<8x128xf32>
    %c0_98 = arith.constant 0 : index
    %c0_99 = arith.constant 0 : index
    %135 = vector.load %arg6[%c0_98, %c0_99] : memref<128x128xbf16, #tpu.memory_space<vmem>>, vector<128x128xbf16>
    %cst_100 = arith.constant dense<0.000000e+00> : vector<8x128xf32>
    %136 = tpu.matmul %106, %135, %cst_100 {dimension_numbers = #tpu.dot_dimension_numbers<[1], [0], [0], [1], [0, 0, 1, 1], [], []>} : vector<8x128xbf16>, vector<128x128xbf16>, vector<8x128xf32> -> vector<8x128xf32>
    %137 = arith.addf %134, %136 : vector<8x128xf32>
    %138 = arith.addf %137, %12 : vector<8x128xf32>
    %cst_101 = arith.constant 0.000000e+00 : f32
    %139 = vector.broadcast %cst_101 : f32 to vector<8x128xf32>
    %140 = arith.maximumf %138, %139 : vector<8x128xf32>
    %141 = arith.truncf %140 : vector<8x128xf32> to vector<8x128xbf16>
    %c0_102 = arith.constant 0 : index
    %c0_103 = arith.constant 0 : index
    %142 = vector.load %arg9[%c0_102, %c0_103] : memref<128x128xbf16, #tpu.memory_space<vmem>>, vector<128x128xbf16>
    %cst_104 = arith.constant dense<0.000000e+00> : vector<8x128xf32>
    %143 = tpu.matmul %106, %142, %cst_104 {dimension_numbers = #tpu.dot_dimension_numbers<[1], [0], [0], [1], [0, 0, 1, 1], [], []>} : vector<8x128xbf16>, vector<128x128xbf16>, vector<8x128xf32> -> vector<8x128xf32>
    %c0_105 = arith.constant 0 : index
    %c0_106 = arith.constant 0 : index
    %144 = vector.load %arg10[%c0_105, %c0_106] : memref<128x128xbf16, #tpu.memory_space<vmem>>, vector<128x128xbf16>
    %cst_107 = arith.constant dense<0.000000e+00> : vector<8x128xf32>
    %145 = tpu.matmul %115, %144, %cst_107 {dimension_numbers = #tpu.dot_dimension_numbers<[1], [0], [0], [1], [0, 0, 1, 1], [], []>} : vector<8x128xbf16>, vector<128x128xbf16>, vector<8x128xf32> -> vector<8x128xf32>
    %146 = arith.addf %143, %145 : vector<8x128xf32>
    %147 = arith.addf %146, %17 : vector<8x128xf32>
    %cst_108 = arith.constant 0.000000e+00 : f32
    %148 = vector.broadcast %cst_108 : f32 to vector<8x128xf32>
    %149 = arith.maximumf %147, %148 : vector<8x128xf32>
    %150 = arith.truncf %149 : vector<8x128xf32> to vector<8x128xbf16>
    %c0_109 = arith.constant 0 : index
    %c0_110 = arith.constant 0 : index
    %151 = vector.load %arg13[%c0_109, %c0_110] : memref<128x128xbf16, #tpu.memory_space<vmem>>, vector<128x128xbf16>
    %cst_111 = arith.constant dense<0.000000e+00> : vector<8x128xf32>
    %152 = tpu.matmul %115, %151, %cst_111 {dimension_numbers = #tpu.dot_dimension_numbers<[1], [0], [0], [1], [0, 0, 1, 1], [], []>} : vector<8x128xbf16>, vector<128x128xbf16>, vector<8x128xf32> -> vector<8x128xf32>
    %c0_112 = arith.constant 0 : index
    %c0_113 = arith.constant 0 : index
    %153 = vector.load %arg14[%c0_112, %c0_113] : memref<128x128xbf16, #tpu.memory_space<vmem>>, vector<128x128xbf16>
    %cst_114 = arith.constant dense<0.000000e+00> : vector<8x128xf32>
    %154 = tpu.matmul %124, %153, %cst_114 {dimension_numbers = #tpu.dot_dimension_numbers<[1], [0], [0], [1], [0, 0, 1, 1], [], []>} : vector<8x128xbf16>, vector<128x128xbf16>, vector<8x128xf32> -> vector<8x128xf32>
    %155 = arith.addf %152, %154 : vector<8x128xf32>
    %156 = arith.addf %155, %22 : vector<8x128xf32>
    %cst_115 = arith.constant 0.000000e+00 : f32
    %157 = vector.broadcast %cst_115 : f32 to vector<8x128xf32>
    %158 = arith.maximumf %156, %157 : vector<8x128xf32>
    %159 = arith.truncf %158 : vector<8x128xf32> to vector<8x128xbf16>
    %c0_116 = arith.constant 0 : index
    %c0_117 = arith.constant 0 : index
    %160 = vector.load %arg17[%c0_116, %c0_117] : memref<128x128xbf16, #tpu.memory_space<vmem>>, vector<128x128xbf16>
    %cst_118 = arith.constant dense<0.000000e+00> : vector<8x128xf32>
    %161 = tpu.matmul %124, %160, %cst_118 {dimension_numbers = #tpu.dot_dimension_numbers<[1], [0], [0], [1], [0, 0, 1, 1], [], []>} : vector<8x128xbf16>, vector<128x128xbf16>, vector<8x128xf32> -> vector<8x128xf32>
    %c0_119 = arith.constant 0 : index
    %c0_120 = arith.constant 0 : index
    %162 = vector.load %arg18[%c0_119, %c0_120] : memref<128x128xbf16, #tpu.memory_space<vmem>>, vector<128x128xbf16>
    %cst_121 = arith.constant dense<0.000000e+00> : vector<8x128xf32>
    %163 = tpu.matmul %37, %162, %cst_121 {dimension_numbers = #tpu.dot_dimension_numbers<[1], [0], [0], [1], [0, 0, 1, 1], [], []>} : vector<8x128xbf16>, vector<128x128xbf16>, vector<8x128xf32> -> vector<8x128xf32>
    %164 = arith.addf %161, %163 : vector<8x128xf32>
    %165 = arith.addf %164, %27 : vector<8x128xf32>
    %cst_122 = arith.constant 0.000000e+00 : f32
    %166 = vector.broadcast %cst_122 : f32 to vector<8x128xf32>
    %167 = arith.maximumf %165, %166 : vector<8x128xf32>
    %168 = arith.truncf %167 : vector<8x128xf32> to vector<8x128xbf16>
    %169 = vector.extract_strided_slice %2 {offsets = [40, 0], sizes = [8, 128], strides = [1, 1]} : vector<64x128xf32> to vector<8x128xf32>
    %c0_123 = arith.constant 0 : index
    %c0_124 = arith.constant 0 : index
    %170 = vector.load %arg2[%c0_123, %c0_124] : memref<128x128xbf16, #tpu.memory_space<vmem>>, vector<128x128xbf16>
    %cst_125 = arith.constant dense<0.000000e+00> : vector<8x128xf32>
    %171 = tpu.matmul %132, %170, %cst_125 {dimension_numbers = #tpu.dot_dimension_numbers<[1], [0], [0], [1], [0, 0, 1, 1], [], []>} : vector<8x128xbf16>, vector<128x128xbf16>, vector<8x128xf32> -> vector<8x128xf32>
    %172 = arith.addf %169, %171 : vector<8x128xf32>
    %173 = arith.addf %172, %7 : vector<8x128xf32>
    %cst_126 = arith.constant 0.000000e+00 : f32
    %174 = vector.broadcast %cst_126 : f32 to vector<8x128xf32>
    %175 = arith.maximumf %173, %174 : vector<8x128xf32>
    %176 = arith.truncf %175 : vector<8x128xf32> to vector<8x128xbf16>
    %c0_127 = arith.constant 0 : index
    %c0_128 = arith.constant 0 : index
    %177 = vector.load %arg5[%c0_127, %c0_128] : memref<128x128xbf16, #tpu.memory_space<vmem>>, vector<128x128xbf16>
    %cst_129 = arith.constant dense<0.000000e+00> : vector<8x128xf32>
    %178 = tpu.matmul %132, %177, %cst_129 {dimension_numbers = #tpu.dot_dimension_numbers<[1], [0], [0], [1], [0, 0, 1, 1], [], []>} : vector<8x128xbf16>, vector<128x128xbf16>, vector<8x128xf32> -> vector<8x128xf32>
    %c0_130 = arith.constant 0 : index
    %c0_131 = arith.constant 0 : index
    %179 = vector.load %arg6[%c0_130, %c0_131] : memref<128x128xbf16, #tpu.memory_space<vmem>>, vector<128x128xbf16>
    %cst_132 = arith.constant dense<0.000000e+00> : vector<8x128xf32>
    %180 = tpu.matmul %141, %179, %cst_132 {dimension_numbers = #tpu.dot_dimension_numbers<[1], [0], [0], [1], [0, 0, 1, 1], [], []>} : vector<8x128xbf16>, vector<128x128xbf16>, vector<8x128xf32> -> vector<8x128xf32>
    %181 = arith.addf %178, %180 : vector<8x128xf32>
    %182 = arith.addf %181, %12 : vector<8x128xf32>
    %cst_133 = arith.constant 0.000000e+00 : f32
    %183 = vector.broadcast %cst_133 : f32 to vector<8x128xf32>
    %184 = arith.maximumf %182, %183 : vector<8x128xf32>
    %185 = arith.truncf %184 : vector<8x128xf32> to vector<8x128xbf16>
    %c0_134 = arith.constant 0 : index
    %c0_135 = arith.constant 0 : index
    %186 = vector.load %arg9[%c0_134, %c0_135] : memref<128x128xbf16, #tpu.memory_space<vmem>>, vector<128x128xbf16>
    %cst_136 = arith.constant dense<0.000000e+00> : vector<8x128xf32>
    %187 = tpu.matmul %141, %186, %cst_136 {dimension_numbers = #tpu.dot_dimension_numbers<[1], [0], [0], [1], [0, 0, 1, 1], [], []>} : vector<8x128xbf16>, vector<128x128xbf16>, vector<8x128xf32> -> vector<8x128xf32>
    %c0_137 = arith.constant 0 : index
    %c0_138 = arith.constant 0 : index
    %188 = vector.load %arg10[%c0_137, %c0_138] : memref<128x128xbf16, #tpu.memory_space<vmem>>, vector<128x128xbf16>
    %cst_139 = arith.constant dense<0.000000e+00> : vector<8x128xf32>
    %189 = tpu.matmul %150, %188, %cst_139 {dimension_numbers = #tpu.dot_dimension_numbers<[1], [0], [0], [1], [0, 0, 1, 1], [], []>} : vector<8x128xbf16>, vector<128x128xbf16>, vector<8x128xf32> -> vector<8x128xf32>
    %190 = arith.addf %187, %189 : vector<8x128xf32>
    %191 = arith.addf %190, %17 : vector<8x128xf32>
    %cst_140 = arith.constant 0.000000e+00 : f32
    %192 = vector.broadcast %cst_140 : f32 to vector<8x128xf32>
    %193 = arith.maximumf %191, %192 : vector<8x128xf32>
    %194 = arith.truncf %193 : vector<8x128xf32> to vector<8x128xbf16>
    %c0_141 = arith.constant 0 : index
    %c0_142 = arith.constant 0 : index
    %195 = vector.load %arg13[%c0_141, %c0_142] : memref<128x128xbf16, #tpu.memory_space<vmem>>, vector<128x128xbf16>
    %cst_143 = arith.constant dense<0.000000e+00> : vector<8x128xf32>
    %196 = tpu.matmul %150, %195, %cst_143 {dimension_numbers = #tpu.dot_dimension_numbers<[1], [0], [0], [1], [0, 0, 1, 1], [], []>} : vector<8x128xbf16>, vector<128x128xbf16>, vector<8x128xf32> -> vector<8x128xf32>
    %c0_144 = arith.constant 0 : index
    %c0_145 = arith.constant 0 : index
    %197 = vector.load %arg14[%c0_144, %c0_145] : memref<128x128xbf16, #tpu.memory_space<vmem>>, vector<128x128xbf16>
    %cst_146 = arith.constant dense<0.000000e+00> : vector<8x128xf32>
    %198 = tpu.matmul %159, %197, %cst_146 {dimension_numbers = #tpu.dot_dimension_numbers<[1], [0], [0], [1], [0, 0, 1, 1], [], []>} : vector<8x128xbf16>, vector<128x128xbf16>, vector<8x128xf32> -> vector<8x128xf32>
    %199 = arith.addf %196, %198 : vector<8x128xf32>
    %200 = arith.addf %199, %22 : vector<8x128xf32>
    %cst_147 = arith.constant 0.000000e+00 : f32
    %201 = vector.broadcast %cst_147 : f32 to vector<8x128xf32>
    %202 = arith.maximumf %200, %201 : vector<8x128xf32>
    %203 = arith.truncf %202 : vector<8x128xf32> to vector<8x128xbf16>
    %c0_148 = arith.constant 0 : index
    %c0_149 = arith.constant 0 : index
    %204 = vector.load %arg17[%c0_148, %c0_149] : memref<128x128xbf16, #tpu.memory_space<vmem>>, vector<128x128xbf16>
    %cst_150 = arith.constant dense<0.000000e+00> : vector<8x128xf32>
    %205 = tpu.matmul %159, %204, %cst_150 {dimension_numbers = #tpu.dot_dimension_numbers<[1], [0], [0], [1], [0, 0, 1, 1], [], []>} : vector<8x128xbf16>, vector<128x128xbf16>, vector<8x128xf32> -> vector<8x128xf32>
    %c0_151 = arith.constant 0 : index
    %c0_152 = arith.constant 0 : index
    %206 = vector.load %arg18[%c0_151, %c0_152] : memref<128x128xbf16, #tpu.memory_space<vmem>>, vector<128x128xbf16>
    %cst_153 = arith.constant dense<0.000000e+00> : vector<8x128xf32>
    %207 = tpu.matmul %168, %206, %cst_153 {dimension_numbers = #tpu.dot_dimension_numbers<[1], [0], [0], [1], [0, 0, 1, 1], [], []>} : vector<8x128xbf16>, vector<128x128xbf16>, vector<8x128xf32> -> vector<8x128xf32>
    %208 = arith.addf %205, %207 : vector<8x128xf32>
    %209 = arith.addf %208, %27 : vector<8x128xf32>
    %cst_154 = arith.constant 0.000000e+00 : f32
    %210 = vector.broadcast %cst_154 : f32 to vector<8x128xf32>
    %211 = arith.maximumf %209, %210 : vector<8x128xf32>
    %212 = arith.truncf %211 : vector<8x128xf32> to vector<8x128xbf16>
    %c0_155 = arith.constant 0 : index
    %c0_156 = arith.constant 0 : index
    %213 = vector.load %arg21[%c0_155, %c0_156] : memref<128x128xbf16, #tpu.memory_space<vmem>>, vector<128x128xbf16>
    %cst_157 = arith.constant dense<0.000000e+00> : vector<8x128xf32>
    %214 = tpu.matmul %168, %213, %cst_157 {dimension_numbers = #tpu.dot_dimension_numbers<[1], [0], [0], [1], [0, 0, 1, 1], [], []>} : vector<8x128xbf16>, vector<128x128xbf16>, vector<8x128xf32> -> vector<8x128xf32>
    %c0_158 = arith.constant 0 : index
    %c0_159 = arith.constant 0 : index
    %215 = vector.load %arg22[%c0_158, %c0_159] : memref<128x128xbf16, #tpu.memory_space<vmem>>, vector<128x128xbf16>
    %cst_160 = arith.constant dense<0.000000e+00> : vector<8x128xf32>
    %216 = tpu.matmul %38, %215, %cst_160 {dimension_numbers = #tpu.dot_dimension_numbers<[1], [0], [0], [1], [0, 0, 1, 1], [], []>} : vector<8x128xbf16>, vector<128x128xbf16>, vector<8x128xf32> -> vector<8x128xf32>
    %217 = arith.addf %214, %216 : vector<8x128xf32>
    %218 = arith.addf %217, %32 : vector<8x128xf32>
    %cst_161 = arith.constant 0.000000e+00 : f32
    %219 = vector.broadcast %cst_161 : f32 to vector<8x128xf32>
    %220 = arith.maximumf %218, %219 : vector<8x128xf32>
    %221 = arith.truncf %220 : vector<8x128xf32> to vector<8x128xbf16>
    %222 = vector.extract_strided_slice %2 {offsets = [48, 0], sizes = [8, 128], strides = [1, 1]} : vector<64x128xf32> to vector<8x128xf32>
    %c0_162 = arith.constant 0 : index
    %c0_163 = arith.constant 0 : index
    %223 = vector.load %arg2[%c0_162, %c0_163] : memref<128x128xbf16, #tpu.memory_space<vmem>>, vector<128x128xbf16>
    %cst_164 = arith.constant dense<0.000000e+00> : vector<8x128xf32>
    %224 = tpu.matmul %176, %223, %cst_164 {dimension_numbers = #tpu.dot_dimension_numbers<[1], [0], [0], [1], [0, 0, 1, 1], [], []>} : vector<8x128xbf16>, vector<128x128xbf16>, vector<8x128xf32> -> vector<8x128xf32>
    %225 = arith.addf %222, %224 : vector<8x128xf32>
    %226 = arith.addf %225, %7 : vector<8x128xf32>
    %cst_165 = arith.constant 0.000000e+00 : f32
    %227 = vector.broadcast %cst_165 : f32 to vector<8x128xf32>
    %228 = arith.maximumf %226, %227 : vector<8x128xf32>
    %229 = arith.truncf %228 : vector<8x128xf32> to vector<8x128xbf16>
    %c0_166 = arith.constant 0 : index
    %c0_167 = arith.constant 0 : index
    %230 = vector.load %arg5[%c0_166, %c0_167] : memref<128x128xbf16, #tpu.memory_space<vmem>>, vector<128x128xbf16>
    %cst_168 = arith.constant dense<0.000000e+00> : vector<8x128xf32>
    %231 = tpu.matmul %176, %230, %cst_168 {dimension_numbers = #tpu.dot_dimension_numbers<[1], [0], [0], [1], [0, 0, 1, 1], [], []>} : vector<8x128xbf16>, vector<128x128xbf16>, vector<8x128xf32> -> vector<8x128xf32>
    %c0_169 = arith.constant 0 : index
    %c0_170 = arith.constant 0 : index
    %232 = vector.load %arg6[%c0_169, %c0_170] : memref<128x128xbf16, #tpu.memory_space<vmem>>, vector<128x128xbf16>
    %cst_171 = arith.constant dense<0.000000e+00> : vector<8x128xf32>
    %233 = tpu.matmul %185, %232, %cst_171 {dimension_numbers = #tpu.dot_dimension_numbers<[1], [0], [0], [1], [0, 0, 1, 1], [], []>} : vector<8x128xbf16>, vector<128x128xbf16>, vector<8x128xf32> -> vector<8x128xf32>
    %234 = arith.addf %231, %233 : vector<8x128xf32>
    %235 = arith.addf %234, %12 : vector<8x128xf32>
    %cst_172 = arith.constant 0.000000e+00 : f32
    %236 = vector.broadcast %cst_172 : f32 to vector<8x128xf32>
    %237 = arith.maximumf %235, %236 : vector<8x128xf32>
    %238 = arith.truncf %237 : vector<8x128xf32> to vector<8x128xbf16>
    %c0_173 = arith.constant 0 : index
    %c0_174 = arith.constant 0 : index
    %239 = vector.load %arg9[%c0_173, %c0_174] : memref<128x128xbf16, #tpu.memory_space<vmem>>, vector<128x128xbf16>
    %cst_175 = arith.constant dense<0.000000e+00> : vector<8x128xf32>
    %240 = tpu.matmul %185, %239, %cst_175 {dimension_numbers = #tpu.dot_dimension_numbers<[1], [0], [0], [1], [0, 0, 1, 1], [], []>} : vector<8x128xbf16>, vector<128x128xbf16>, vector<8x128xf32> -> vector<8x128xf32>
    %c0_176 = arith.constant 0 : index
    %c0_177 = arith.constant 0 : index
    %241 = vector.load %arg10[%c0_176, %c0_177] : memref<128x128xbf16, #tpu.memory_space<vmem>>, vector<128x128xbf16>
    %cst_178 = arith.constant dense<0.000000e+00> : vector<8x128xf32>
    %242 = tpu.matmul %194, %241, %cst_178 {dimension_numbers = #tpu.dot_dimension_numbers<[1], [0], [0], [1], [0, 0, 1, 1], [], []>} : vector<8x128xbf16>, vector<128x128xbf16>, vector<8x128xf32> -> vector<8x128xf32>
    %243 = arith.addf %240, %242 : vector<8x128xf32>
    %244 = arith.addf %243, %17 : vector<8x128xf32>
    %cst_179 = arith.constant 0.000000e+00 : f32
    %245 = vector.broadcast %cst_179 : f32 to vector<8x128xf32>
    %246 = arith.maximumf %244, %245 : vector<8x128xf32>
    %247 = arith.truncf %246 : vector<8x128xf32> to vector<8x128xbf16>
    %c0_180 = arith.constant 0 : index
    %c0_181 = arith.constant 0 : index
    %248 = vector.load %arg13[%c0_180, %c0_181] : memref<128x128xbf16, #tpu.memory_space<vmem>>, vector<128x128xbf16>
    %cst_182 = arith.constant dense<0.000000e+00> : vector<8x128xf32>
    %249 = tpu.matmul %194, %248, %cst_182 {dimension_numbers = #tpu.dot_dimension_numbers<[1], [0], [0], [1], [0, 0, 1, 1], [], []>} : vector<8x128xbf16>, vector<128x128xbf16>, vector<8x128xf32> -> vector<8x128xf32>
    %c0_183 = arith.constant 0 : index
    %c0_184 = arith.constant 0 : index
    %250 = vector.load %arg14[%c0_183, %c0_184] : memref<128x128xbf16, #tpu.memory_space<vmem>>, vector<128x128xbf16>
    %cst_185 = arith.constant dense<0.000000e+00> : vector<8x128xf32>
    %251 = tpu.matmul %203, %250, %cst_185 {dimension_numbers = #tpu.dot_dimension_numbers<[1], [0], [0], [1], [0, 0, 1, 1], [], []>} : vector<8x128xbf16>, vector<128x128xbf16>, vector<8x128xf32> -> vector<8x128xf32>
    %252 = arith.addf %249, %251 : vector<8x128xf32>
    %253 = arith.addf %252, %22 : vector<8x128xf32>
    %cst_186 = arith.constant 0.000000e+00 : f32
    %254 = vector.broadcast %cst_186 : f32 to vector<8x128xf32>
    %255 = arith.maximumf %253, %254 : vector<8x128xf32>
    %256 = arith.truncf %255 : vector<8x128xf32> to vector<8x128xbf16>
    %c0_187 = arith.constant 0 : index
    %c0_188 = arith.constant 0 : index
    %257 = vector.load %arg17[%c0_187, %c0_188] : memref<128x128xbf16, #tpu.memory_space<vmem>>, vector<128x128xbf16>
    %cst_189 = arith.constant dense<0.000000e+00> : vector<8x128xf32>
    %258 = tpu.matmul %203, %257, %cst_189 {dimension_numbers = #tpu.dot_dimension_numbers<[1], [0], [0], [1], [0, 0, 1, 1], [], []>} : vector<8x128xbf16>, vector<128x128xbf16>, vector<8x128xf32> -> vector<8x128xf32>
    %c0_190 = arith.constant 0 : index
    %c0_191 = arith.constant 0 : index
    %259 = vector.load %arg18[%c0_190, %c0_191] : memref<128x128xbf16, #tpu.memory_space<vmem>>, vector<128x128xbf16>
    %cst_192 = arith.constant dense<0.000000e+00> : vector<8x128xf32>
    %260 = tpu.matmul %212, %259, %cst_192 {dimension_numbers = #tpu.dot_dimension_numbers<[1], [0], [0], [1], [0, 0, 1, 1], [], []>} : vector<8x128xbf16>, vector<128x128xbf16>, vector<8x128xf32> -> vector<8x128xf32>
    %261 = arith.addf %258, %260 : vector<8x128xf32>
    %262 = arith.addf %261, %27 : vector<8x128xf32>
    %cst_193 = arith.constant 0.000000e+00 : f32
    %263 = vector.broadcast %cst_193 : f32 to vector<8x128xf32>
    %264 = arith.maximumf %262, %263 : vector<8x128xf32>
    %265 = arith.truncf %264 : vector<8x128xf32> to vector<8x128xbf16>
    %c0_194 = arith.constant 0 : index
    %c0_195 = arith.constant 0 : index
    %266 = vector.load %arg21[%c0_194, %c0_195] : memref<128x128xbf16, #tpu.memory_space<vmem>>, vector<128x128xbf16>
    %cst_196 = arith.constant dense<0.000000e+00> : vector<8x128xf32>
    %267 = tpu.matmul %212, %266, %cst_196 {dimension_numbers = #tpu.dot_dimension_numbers<[1], [0], [0], [1], [0, 0, 1, 1], [], []>} : vector<8x128xbf16>, vector<128x128xbf16>, vector<8x128xf32> -> vector<8x128xf32>
    %c0_197 = arith.constant 0 : index
    %c0_198 = arith.constant 0 : index
    %268 = vector.load %arg22[%c0_197, %c0_198] : memref<128x128xbf16, #tpu.memory_space<vmem>>, vector<128x128xbf16>
    %cst_199 = arith.constant dense<0.000000e+00> : vector<8x128xf32>
    %269 = tpu.matmul %221, %268, %cst_199 {dimension_numbers = #tpu.dot_dimension_numbers<[1], [0], [0], [1], [0, 0, 1, 1], [], []>} : vector<8x128xbf16>, vector<128x128xbf16>, vector<8x128xf32> -> vector<8x128xf32>
    %270 = arith.addf %267, %269 : vector<8x128xf32>
    %271 = arith.addf %270, %32 : vector<8x128xf32>
    %cst_200 = arith.constant 0.000000e+00 : f32
    %272 = vector.broadcast %cst_200 : f32 to vector<8x128xf32>
    %273 = arith.maximumf %271, %272 : vector<8x128xf32>
    %274 = arith.truncf %273 : vector<8x128xf32> to vector<8x128xbf16>
    %275 = vector.extract_strided_slice %2 {offsets = [56, 0], sizes = [8, 128], strides = [1, 1]} : vector<64x128xf32> to vector<8x128xf32>
    %c0_201 = arith.constant 0 : index
    %c0_202 = arith.constant 0 : index
    %276 = vector.load %arg2[%c0_201, %c0_202] : memref<128x128xbf16, #tpu.memory_space<vmem>>, vector<128x128xbf16>
    %cst_203 = arith.constant dense<0.000000e+00> : vector<8x128xf32>
    %277 = tpu.matmul %229, %276, %cst_203 {dimension_numbers = #tpu.dot_dimension_numbers<[1], [0], [0], [1], [0, 0, 1, 1], [], []>} : vector<8x128xbf16>, vector<128x128xbf16>, vector<8x128xf32> -> vector<8x128xf32>
    %278 = arith.addf %275, %277 : vector<8x128xf32>
    %279 = arith.addf %278, %7 : vector<8x128xf32>
    %cst_204 = arith.constant 0.000000e+00 : f32
    %280 = vector.broadcast %cst_204 : f32 to vector<8x128xf32>
    %281 = arith.maximumf %279, %280 : vector<8x128xf32>
    %282 = arith.truncf %281 : vector<8x128xf32> to vector<8x128xbf16>
    %c0_205 = arith.constant 0 : index
    %c0_206 = arith.constant 0 : index
    %283 = vector.load %arg5[%c0_205, %c0_206] : memref<128x128xbf16, #tpu.memory_space<vmem>>, vector<128x128xbf16>
    %cst_207 = arith.constant dense<0.000000e+00> : vector<8x128xf32>
    %284 = tpu.matmul %229, %283, %cst_207 {dimension_numbers = #tpu.dot_dimension_numbers<[1], [0], [0], [1], [0, 0, 1, 1], [], []>} : vector<8x128xbf16>, vector<128x128xbf16>, vector<8x128xf32> -> vector<8x128xf32>
    %c0_208 = arith.constant 0 : index
    %c0_209 = arith.constant 0 : index
    %285 = vector.load %arg6[%c0_208, %c0_209] : memref<128x128xbf16, #tpu.memory_space<vmem>>, vector<128x128xbf16>
    %cst_210 = arith.constant dense<0.000000e+00> : vector<8x128xf32>
    %286 = tpu.matmul %238, %285, %cst_210 {dimension_numbers = #tpu.dot_dimension_numbers<[1], [0], [0], [1], [0, 0, 1, 1], [], []>} : vector<8x128xbf16>, vector<128x128xbf16>, vector<8x128xf32> -> vector<8x128xf32>
    %287 = arith.addf %284, %286 : vector<8x128xf32>
    %288 = arith.addf %287, %12 : vector<8x128xf32>
    %cst_211 = arith.constant 0.000000e+00 : f32
    %289 = vector.broadcast %cst_211 : f32 to vector<8x128xf32>
    %290 = arith.maximumf %288, %289 : vector<8x128xf32>
    %291 = arith.truncf %290 : vector<8x128xf32> to vector<8x128xbf16>
    %c0_212 = arith.constant 0 : index
    %c0_213 = arith.constant 0 : index
    %292 = vector.load %arg9[%c0_212, %c0_213] : memref<128x128xbf16, #tpu.memory_space<vmem>>, vector<128x128xbf16>
    %cst_214 = arith.constant dense<0.000000e+00> : vector<8x128xf32>
    %293 = tpu.matmul %238, %292, %cst_214 {dimension_numbers = #tpu.dot_dimension_numbers<[1], [0], [0], [1], [0, 0, 1, 1], [], []>} : vector<8x128xbf16>, vector<128x128xbf16>, vector<8x128xf32> -> vector<8x128xf32>
    %c0_215 = arith.constant 0 : index
    %c0_216 = arith.constant 0 : index
    %294 = vector.load %arg10[%c0_215, %c0_216] : memref<128x128xbf16, #tpu.memory_space<vmem>>, vector<128x128xbf16>
    %cst_217 = arith.constant dense<0.000000e+00> : vector<8x128xf32>
    %295 = tpu.matmul %247, %294, %cst_217 {dimension_numbers = #tpu.dot_dimension_numbers<[1], [0], [0], [1], [0, 0, 1, 1], [], []>} : vector<8x128xbf16>, vector<128x128xbf16>, vector<8x128xf32> -> vector<8x128xf32>
    %296 = arith.addf %293, %295 : vector<8x128xf32>
    %297 = arith.addf %296, %17 : vector<8x128xf32>
    %cst_218 = arith.constant 0.000000e+00 : f32
    %298 = vector.broadcast %cst_218 : f32 to vector<8x128xf32>
    %299 = arith.maximumf %297, %298 : vector<8x128xf32>
    %300 = arith.truncf %299 : vector<8x128xf32> to vector<8x128xbf16>
    %c0_219 = arith.constant 0 : index
    %c0_220 = arith.constant 0 : index
    %301 = vector.load %arg13[%c0_219, %c0_220] : memref<128x128xbf16, #tpu.memory_space<vmem>>, vector<128x128xbf16>
    %cst_221 = arith.constant dense<0.000000e+00> : vector<8x128xf32>
    %302 = tpu.matmul %247, %301, %cst_221 {dimension_numbers = #tpu.dot_dimension_numbers<[1], [0], [0], [1], [0, 0, 1, 1], [], []>} : vector<8x128xbf16>, vector<128x128xbf16>, vector<8x128xf32> -> vector<8x128xf32>
    %c0_222 = arith.constant 0 : index
    %c0_223 = arith.constant 0 : index
    %303 = vector.load %arg14[%c0_222, %c0_223] : memref<128x128xbf16, #tpu.memory_space<vmem>>, vector<128x128xbf16>
    %cst_224 = arith.constant dense<0.000000e+00> : vector<8x128xf32>
    %304 = tpu.matmul %256, %303, %cst_224 {dimension_numbers = #tpu.dot_dimension_numbers<[1], [0], [0], [1], [0, 0, 1, 1], [], []>} : vector<8x128xbf16>, vector<128x128xbf16>, vector<8x128xf32> -> vector<8x128xf32>
    %305 = arith.addf %302, %304 : vector<8x128xf32>
    %306 = arith.addf %305, %22 : vector<8x128xf32>
    %cst_225 = arith.constant 0.000000e+00 : f32
    %307 = vector.broadcast %cst_225 : f32 to vector<8x128xf32>
    %308 = arith.maximumf %306, %307 : vector<8x128xf32>
    %309 = arith.truncf %308 : vector<8x128xf32> to vector<8x128xbf16>
    %c0_226 = arith.constant 0 : index
    %c0_227 = arith.constant 0 : index
    %310 = vector.load %arg17[%c0_226, %c0_227] : memref<128x128xbf16, #tpu.memory_space<vmem>>, vector<128x128xbf16>
    %cst_228 = arith.constant dense<0.000000e+00> : vector<8x128xf32>
    %311 = tpu.matmul %256, %310, %cst_228 {dimension_numbers = #tpu.dot_dimension_numbers<[1], [0], [0], [1], [0, 0, 1, 1], [], []>} : vector<8x128xbf16>, vector<128x128xbf16>, vector<8x128xf32> -> vector<8x128xf32>
    %c0_229 = arith.constant 0 : index
    %c0_230 = arith.constant 0 : index
    %312 = vector.load %arg18[%c0_229, %c0_230] : memref<128x128xbf16, #tpu.memory_space<vmem>>, vector<128x128xbf16>
    %cst_231 = arith.constant dense<0.000000e+00> : vector<8x128xf32>
    %313 = tpu.matmul %265, %312, %cst_231 {dimension_numbers = #tpu.dot_dimension_numbers<[1], [0], [0], [1], [0, 0, 1, 1], [], []>} : vector<8x128xbf16>, vector<128x128xbf16>, vector<8x128xf32> -> vector<8x128xf32>
    %314 = arith.addf %311, %313 : vector<8x128xf32>
    %315 = arith.addf %314, %27 : vector<8x128xf32>
    %cst_232 = arith.constant 0.000000e+00 : f32
    %316 = vector.broadcast %cst_232 : f32 to vector<8x128xf32>
    %317 = arith.maximumf %315, %316 : vector<8x128xf32>
    %318 = arith.truncf %317 : vector<8x128xf32> to vector<8x128xbf16>
    %c0_233 = arith.constant 0 : index
    %c0_234 = arith.constant 0 : index
    %319 = vector.load %arg21[%c0_233, %c0_234] : memref<128x128xbf16, #tpu.memory_space<vmem>>, vector<128x128xbf16>
    %cst_235 = arith.constant dense<0.000000e+00> : vector<8x128xf32>
    %320 = tpu.matmul %265, %319, %cst_235 {dimension_numbers = #tpu.dot_dimension_numbers<[1], [0], [0], [1], [0, 0, 1, 1], [], []>} : vector<8x128xbf16>, vector<128x128xbf16>, vector<8x128xf32> -> vector<8x128xf32>
    %c0_236 = arith.constant 0 : index
    %c0_237 = arith.constant 0 : index
    %321 = vector.load %arg22[%c0_236, %c0_237] : memref<128x128xbf16, #tpu.memory_space<vmem>>, vector<128x128xbf16>
    %cst_238 = arith.constant dense<0.000000e+00> : vector<8x128xf32>
    %322 = tpu.matmul %274, %321, %cst_238 {dimension_numbers = #tpu.dot_dimension_numbers<[1], [0], [0], [1], [0, 0, 1, 1], [], []>} : vector<8x128xbf16>, vector<128x128xbf16>, vector<8x128xf32> -> vector<8x128xf32>
    %323 = arith.addf %320, %322 : vector<8x128xf32>
    %324 = arith.addf %323, %32 : vector<8x128xf32>
    %cst_239 = arith.constant 0.000000e+00 : f32
    %325 = vector.broadcast %cst_239 : f32 to vector<8x128xf32>
    %326 = arith.maximumf %324, %325 : vector<8x128xf32>
    %327 = arith.truncf %326 : vector<8x128xf32> to vector<8x128xbf16>
    %c0_240 = arith.constant 0 : index
    %c0_241 = arith.constant 0 : index
    %328 = vector.load %arg5[%c0_240, %c0_241] : memref<128x128xbf16, #tpu.memory_space<vmem>>, vector<128x128xbf16>
    %cst_242 = arith.constant dense<0.000000e+00> : vector<8x128xf32>
    %329 = tpu.matmul %282, %328, %cst_242 {dimension_numbers = #tpu.dot_dimension_numbers<[1], [0], [0], [1], [0, 0, 1, 1], [], []>} : vector<8x128xbf16>, vector<128x128xbf16>, vector<8x128xf32> -> vector<8x128xf32>
    %c0_243 = arith.constant 0 : index
    %c0_244 = arith.constant 0 : index
    %330 = vector.load %arg6[%c0_243, %c0_244] : memref<128x128xbf16, #tpu.memory_space<vmem>>, vector<128x128xbf16>
    %cst_245 = arith.constant dense<0.000000e+00> : vector<8x128xf32>
    %331 = tpu.matmul %291, %330, %cst_245 {dimension_numbers = #tpu.dot_dimension_numbers<[1], [0], [0], [1], [0, 0, 1, 1], [], []>} : vector<8x128xbf16>, vector<128x128xbf16>, vector<8x128xf32> -> vector<8x128xf32>
    %332 = arith.addf %329, %331 : vector<8x128xf32>
    %333 = arith.addf %332, %12 : vector<8x128xf32>
    %cst_246 = arith.constant 0.000000e+00 : f32
    %334 = vector.broadcast %cst_246 : f32 to vector<8x128xf32>
    %335 = arith.maximumf %333, %334 : vector<8x128xf32>
    %336 = arith.truncf %335 : vector<8x128xf32> to vector<8x128xbf16>
    %c0_247 = arith.constant 0 : index
    %c0_248 = arith.constant 0 : index
    %337 = vector.load %arg9[%c0_247, %c0_248] : memref<128x128xbf16, #tpu.memory_space<vmem>>, vector<128x128xbf16>
    %cst_249 = arith.constant dense<0.000000e+00> : vector<8x128xf32>
    %338 = tpu.matmul %291, %337, %cst_249 {dimension_numbers = #tpu.dot_dimension_numbers<[1], [0], [0], [1], [0, 0, 1, 1], [], []>} : vector<8x128xbf16>, vector<128x128xbf16>, vector<8x128xf32> -> vector<8x128xf32>
    %c0_250 = arith.constant 0 : index
    %c0_251 = arith.constant 0 : index
    %339 = vector.load %arg10[%c0_250, %c0_251] : memref<128x128xbf16, #tpu.memory_space<vmem>>, vector<128x128xbf16>
    %cst_252 = arith.constant dense<0.000000e+00> : vector<8x128xf32>
    %340 = tpu.matmul %300, %339, %cst_252 {dimension_numbers = #tpu.dot_dimension_numbers<[1], [0], [0], [1], [0, 0, 1, 1], [], []>} : vector<8x128xbf16>, vector<128x128xbf16>, vector<8x128xf32> -> vector<8x128xf32>
    %341 = arith.addf %338, %340 : vector<8x128xf32>
    %342 = arith.addf %341, %17 : vector<8x128xf32>
    %cst_253 = arith.constant 0.000000e+00 : f32
    %343 = vector.broadcast %cst_253 : f32 to vector<8x128xf32>
    %344 = arith.maximumf %342, %343 : vector<8x128xf32>
    %345 = arith.truncf %344 : vector<8x128xf32> to vector<8x128xbf16>
    %c0_254 = arith.constant 0 : index
    %c0_255 = arith.constant 0 : index
    %346 = vector.load %arg13[%c0_254, %c0_255] : memref<128x128xbf16, #tpu.memory_space<vmem>>, vector<128x128xbf16>
    %cst_256 = arith.constant dense<0.000000e+00> : vector<8x128xf32>
    %347 = tpu.matmul %300, %346, %cst_256 {dimension_numbers = #tpu.dot_dimension_numbers<[1], [0], [0], [1], [0, 0, 1, 1], [], []>} : vector<8x128xbf16>, vector<128x128xbf16>, vector<8x128xf32> -> vector<8x128xf32>
    %c0_257 = arith.constant 0 : index
    %c0_258 = arith.constant 0 : index
    %348 = vector.load %arg14[%c0_257, %c0_258] : memref<128x128xbf16, #tpu.memory_space<vmem>>, vector<128x128xbf16>
    %cst_259 = arith.constant dense<0.000000e+00> : vector<8x128xf32>
    %349 = tpu.matmul %309, %348, %cst_259 {dimension_numbers = #tpu.dot_dimension_numbers<[1], [0], [0], [1], [0, 0, 1, 1], [], []>} : vector<8x128xbf16>, vector<128x128xbf16>, vector<8x128xf32> -> vector<8x128xf32>
    %350 = arith.addf %347, %349 : vector<8x128xf32>
    %351 = arith.addf %350, %22 : vector<8x128xf32>
    %cst_260 = arith.constant 0.000000e+00 : f32
    %352 = vector.broadcast %cst_260 : f32 to vector<8x128xf32>
    %353 = arith.maximumf %351, %352 : vector<8x128xf32>
    %354 = arith.truncf %353 : vector<8x128xf32> to vector<8x128xbf16>
    %c0_261 = arith.constant 0 : index
    %c0_262 = arith.constant 0 : index
    %355 = vector.load %arg17[%c0_261, %c0_262] : memref<128x128xbf16, #tpu.memory_space<vmem>>, vector<128x128xbf16>
    %cst_263 = arith.constant dense<0.000000e+00> : vector<8x128xf32>
    %356 = tpu.matmul %309, %355, %cst_263 {dimension_numbers = #tpu.dot_dimension_numbers<[1], [0], [0], [1], [0, 0, 1, 1], [], []>} : vector<8x128xbf16>, vector<128x128xbf16>, vector<8x128xf32> -> vector<8x128xf32>
    %c0_264 = arith.constant 0 : index
    %c0_265 = arith.constant 0 : index
    %357 = vector.load %arg18[%c0_264, %c0_265] : memref<128x128xbf16, #tpu.memory_space<vmem>>, vector<128x128xbf16>
    %cst_266 = arith.constant dense<0.000000e+00> : vector<8x128xf32>
    %358 = tpu.matmul %318, %357, %cst_266 {dimension_numbers = #tpu.dot_dimension_numbers<[1], [0], [0], [1], [0, 0, 1, 1], [], []>} : vector<8x128xbf16>, vector<128x128xbf16>, vector<8x128xf32> -> vector<8x128xf32>
    %359 = arith.addf %356, %358 : vector<8x128xf32>
    %360 = arith.addf %359, %27 : vector<8x128xf32>
    %cst_267 = arith.constant 0.000000e+00 : f32
    %361 = vector.broadcast %cst_267 : f32 to vector<8x128xf32>
    %362 = arith.maximumf %360, %361 : vector<8x128xf32>
    %363 = arith.truncf %362 : vector<8x128xf32> to vector<8x128xbf16>
    %c0_268 = arith.constant 0 : index
    %c0_269 = arith.constant 0 : index
    %364 = vector.load %arg21[%c0_268, %c0_269] : memref<128x128xbf16, #tpu.memory_space<vmem>>, vector<128x128xbf16>
    %cst_270 = arith.constant dense<0.000000e+00> : vector<8x128xf32>
    %365 = tpu.matmul %318, %364, %cst_270 {dimension_numbers = #tpu.dot_dimension_numbers<[1], [0], [0], [1], [0, 0, 1, 1], [], []>} : vector<8x128xbf16>, vector<128x128xbf16>, vector<8x128xf32> -> vector<8x128xf32>
    %c0_271 = arith.constant 0 : index
    %c0_272 = arith.constant 0 : index
    %366 = vector.load %arg22[%c0_271, %c0_272] : memref<128x128xbf16, #tpu.memory_space<vmem>>, vector<128x128xbf16>
    %cst_273 = arith.constant dense<0.000000e+00> : vector<8x128xf32>
    %367 = tpu.matmul %327, %366, %cst_273 {dimension_numbers = #tpu.dot_dimension_numbers<[1], [0], [0], [1], [0, 0, 1, 1], [], []>} : vector<8x128xbf16>, vector<128x128xbf16>, vector<8x128xf32> -> vector<8x128xf32>
    %368 = arith.addf %365, %367 : vector<8x128xf32>
    %369 = arith.addf %368, %32 : vector<8x128xf32>
    %cst_274 = arith.constant 0.000000e+00 : f32
    %370 = vector.broadcast %cst_274 : f32 to vector<8x128xf32>
    %371 = arith.maximumf %369, %370 : vector<8x128xf32>
    %372 = arith.truncf %371 : vector<8x128xf32> to vector<8x128xbf16>
    %c0_275 = arith.constant 0 : index
    %c0_276 = arith.constant 0 : index
    %373 = vector.load %arg9[%c0_275, %c0_276] : memref<128x128xbf16, #tpu.memory_space<vmem>>, vector<128x128xbf16>
    %cst_277 = arith.constant dense<0.000000e+00> : vector<8x128xf32>
    %374 = tpu.matmul %336, %373, %cst_277 {dimension_numbers = #tpu.dot_dimension_numbers<[1], [0], [0], [1], [0, 0, 1, 1], [], []>} : vector<8x128xbf16>, vector<128x128xbf16>, vector<8x128xf32> -> vector<8x128xf32>
    %c0_278 = arith.constant 0 : index
    %c0_279 = arith.constant 0 : index
    %375 = vector.load %arg10[%c0_278, %c0_279] : memref<128x128xbf16, #tpu.memory_space<vmem>>, vector<128x128xbf16>
    %cst_280 = arith.constant dense<0.000000e+00> : vector<8x128xf32>
    %376 = tpu.matmul %345, %375, %cst_280 {dimension_numbers = #tpu.dot_dimension_numbers<[1], [0], [0], [1], [0, 0, 1, 1], [], []>} : vector<8x128xbf16>, vector<128x128xbf16>, vector<8x128xf32> -> vector<8x128xf32>
    %377 = arith.addf %374, %376 : vector<8x128xf32>
    %378 = arith.addf %377, %17 : vector<8x128xf32>
    %cst_281 = arith.constant 0.000000e+00 : f32
    %379 = vector.broadcast %cst_281 : f32 to vector<8x128xf32>
    %380 = arith.maximumf %378, %379 : vector<8x128xf32>
    %381 = arith.truncf %380 : vector<8x128xf32> to vector<8x128xbf16>
    %c0_282 = arith.constant 0 : index
    %c0_283 = arith.constant 0 : index
    %382 = vector.load %arg13[%c0_282, %c0_283] : memref<128x128xbf16, #tpu.memory_space<vmem>>, vector<128x128xbf16>
    %cst_284 = arith.constant dense<0.000000e+00> : vector<8x128xf32>
    %383 = tpu.matmul %345, %382, %cst_284 {dimension_numbers = #tpu.dot_dimension_numbers<[1], [0], [0], [1], [0, 0, 1, 1], [], []>} : vector<8x128xbf16>, vector<128x128xbf16>, vector<8x128xf32> -> vector<8x128xf32>
    %c0_285 = arith.constant 0 : index
    %c0_286 = arith.constant 0 : index
    %384 = vector.load %arg14[%c0_285, %c0_286] : memref<128x128xbf16, #tpu.memory_space<vmem>>, vector<128x128xbf16>
    %cst_287 = arith.constant dense<0.000000e+00> : vector<8x128xf32>
    %385 = tpu.matmul %354, %384, %cst_287 {dimension_numbers = #tpu.dot_dimension_numbers<[1], [0], [0], [1], [0, 0, 1, 1], [], []>} : vector<8x128xbf16>, vector<128x128xbf16>, vector<8x128xf32> -> vector<8x128xf32>
    %386 = arith.addf %383, %385 : vector<8x128xf32>
    %387 = arith.addf %386, %22 : vector<8x128xf32>
    %cst_288 = arith.constant 0.000000e+00 : f32
    %388 = vector.broadcast %cst_288 : f32 to vector<8x128xf32>
    %389 = arith.maximumf %387, %388 : vector<8x128xf32>
    %390 = arith.truncf %389 : vector<8x128xf32> to vector<8x128xbf16>
    %c0_289 = arith.constant 0 : index
    %c0_290 = arith.constant 0 : index
    %391 = vector.load %arg17[%c0_289, %c0_290] : memref<128x128xbf16, #tpu.memory_space<vmem>>, vector<128x128xbf16>
    %cst_291 = arith.constant dense<0.000000e+00> : vector<8x128xf32>
    %392 = tpu.matmul %354, %391, %cst_291 {dimension_numbers = #tpu.dot_dimension_numbers<[1], [0], [0], [1], [0, 0, 1, 1], [], []>} : vector<8x128xbf16>, vector<128x128xbf16>, vector<8x128xf32> -> vector<8x128xf32>
    %c0_292 = arith.constant 0 : index
    %c0_293 = arith.constant 0 : index
    %393 = vector.load %arg18[%c0_292, %c0_293] : memref<128x128xbf16, #tpu.memory_space<vmem>>, vector<128x128xbf16>
    %cst_294 = arith.constant dense<0.000000e+00> : vector<8x128xf32>
    %394 = tpu.matmul %363, %393, %cst_294 {dimension_numbers = #tpu.dot_dimension_numbers<[1], [0], [0], [1], [0, 0, 1, 1], [], []>} : vector<8x128xbf16>, vector<128x128xbf16>, vector<8x128xf32> -> vector<8x128xf32>
    %395 = arith.addf %392, %394 : vector<8x128xf32>
    %396 = arith.addf %395, %27 : vector<8x128xf32>
    %cst_295 = arith.constant 0.000000e+00 : f32
    %397 = vector.broadcast %cst_295 : f32 to vector<8x128xf32>
    %398 = arith.maximumf %396, %397 : vector<8x128xf32>
    %399 = arith.truncf %398 : vector<8x128xf32> to vector<8x128xbf16>
    %c0_296 = arith.constant 0 : index
    %c0_297 = arith.constant 0 : index
    %400 = vector.load %arg21[%c0_296, %c0_297] : memref<128x128xbf16, #tpu.memory_space<vmem>>, vector<128x128xbf16>
    %cst_298 = arith.constant dense<0.000000e+00> : vector<8x128xf32>
    %401 = tpu.matmul %363, %400, %cst_298 {dimension_numbers = #tpu.dot_dimension_numbers<[1], [0], [0], [1], [0, 0, 1, 1], [], []>} : vector<8x128xbf16>, vector<128x128xbf16>, vector<8x128xf32> -> vector<8x128xf32>
    %c0_299 = arith.constant 0 : index
    %c0_300 = arith.constant 0 : index
    %402 = vector.load %arg22[%c0_299, %c0_300] : memref<128x128xbf16, #tpu.memory_space<vmem>>, vector<128x128xbf16>
    %cst_301 = arith.constant dense<0.000000e+00> : vector<8x128xf32>
    %403 = tpu.matmul %372, %402, %cst_301 {dimension_numbers = #tpu.dot_dimension_numbers<[1], [0], [0], [1], [0, 0, 1, 1], [], []>} : vector<8x128xbf16>, vector<128x128xbf16>, vector<8x128xf32> -> vector<8x128xf32>
    %404 = arith.addf %401, %403 : vector<8x128xf32>
    %405 = arith.addf %404, %32 : vector<8x128xf32>
    %cst_302 = arith.constant 0.000000e+00 : f32
    %406 = vector.broadcast %cst_302 : f32 to vector<8x128xf32>
    %407 = arith.maximumf %405, %406 : vector<8x128xf32>
    %408 = arith.truncf %407 : vector<8x128xf32> to vector<8x128xbf16>
    %c0_303 = arith.constant 0 : index
    %c0_304 = arith.constant 0 : index
    %409 = vector.load %arg13[%c0_303, %c0_304] : memref<128x128xbf16, #tpu.memory_space<vmem>>, vector<128x128xbf16>
    %cst_305 = arith.constant dense<0.000000e+00> : vector<8x128xf32>
    %410 = tpu.matmul %381, %409, %cst_305 {dimension_numbers = #tpu.dot_dimension_numbers<[1], [0], [0], [1], [0, 0, 1, 1], [], []>} : vector<8x128xbf16>, vector<128x128xbf16>, vector<8x128xf32> -> vector<8x128xf32>
    %c0_306 = arith.constant 0 : index
    %c0_307 = arith.constant 0 : index
    %411 = vector.load %arg14[%c0_306, %c0_307] : memref<128x128xbf16, #tpu.memory_space<vmem>>, vector<128x128xbf16>
    %cst_308 = arith.constant dense<0.000000e+00> : vector<8x128xf32>
    %412 = tpu.matmul %390, %411, %cst_308 {dimension_numbers = #tpu.dot_dimension_numbers<[1], [0], [0], [1], [0, 0, 1, 1], [], []>} : vector<8x128xbf16>, vector<128x128xbf16>, vector<8x128xf32> -> vector<8x128xf32>
    %413 = arith.addf %410, %412 : vector<8x128xf32>
    %414 = arith.addf %413, %22 : vector<8x128xf32>
    %cst_309 = arith.constant 0.000000e+00 : f32
    %415 = vector.broadcast %cst_309 : f32 to vector<8x128xf32>
    %416 = arith.maximumf %414, %415 : vector<8x128xf32>
    %417 = arith.truncf %416 : vector<8x128xf32> to vector<8x128xbf16>
    %c0_310 = arith.constant 0 : index
    %c0_311 = arith.constant 0 : index
    %418 = vector.load %arg17[%c0_310, %c0_311] : memref<128x128xbf16, #tpu.memory_space<vmem>>, vector<128x128xbf16>
    %cst_312 = arith.constant dense<0.000000e+00> : vector<8x128xf32>
    %419 = tpu.matmul %390, %418, %cst_312 {dimension_numbers = #tpu.dot_dimension_numbers<[1], [0], [0], [1], [0, 0, 1, 1], [], []>} : vector<8x128xbf16>, vector<128x128xbf16>, vector<8x128xf32> -> vector<8x128xf32>
    %c0_313 = arith.constant 0 : index
    %c0_314 = arith.constant 0 : index
    %420 = vector.load %arg18[%c0_313, %c0_314] : memref<128x128xbf16, #tpu.memory_space<vmem>>, vector<128x128xbf16>
    %cst_315 = arith.constant dense<0.000000e+00> : vector<8x128xf32>
    %421 = tpu.matmul %399, %420, %cst_315 {dimension_numbers = #tpu.dot_dimension_numbers<[1], [0], [0], [1], [0, 0, 1, 1], [], []>} : vector<8x128xbf16>, vector<128x128xbf16>, vector<8x128xf32> -> vector<8x128xf32>
    %422 = arith.addf %419, %421 : vector<8x128xf32>
    %423 = arith.addf %422, %27 : vector<8x128xf32>
    %cst_316 = arith.constant 0.000000e+00 : f32
    %424 = vector.broadcast %cst_316 : f32 to vector<8x128xf32>
    %425 = arith.maximumf %423, %424 : vector<8x128xf32>
    %426 = arith.truncf %425 : vector<8x128xf32> to vector<8x128xbf16>
    %c0_317 = arith.constant 0 : index
    %c0_318 = arith.constant 0 : index
    %427 = vector.load %arg21[%c0_317, %c0_318] : memref<128x128xbf16, #tpu.memory_space<vmem>>, vector<128x128xbf16>
    %cst_319 = arith.constant dense<0.000000e+00> : vector<8x128xf32>
    %428 = tpu.matmul %399, %427, %cst_319 {dimension_numbers = #tpu.dot_dimension_numbers<[1], [0], [0], [1], [0, 0, 1, 1], [], []>} : vector<8x128xbf16>, vector<128x128xbf16>, vector<8x128xf32> -> vector<8x128xf32>
    %c0_320 = arith.constant 0 : index
    %c0_321 = arith.constant 0 : index
    %429 = vector.load %arg22[%c0_320, %c0_321] : memref<128x128xbf16, #tpu.memory_space<vmem>>, vector<128x128xbf16>
    %cst_322 = arith.constant dense<0.000000e+00> : vector<8x128xf32>
    %430 = tpu.matmul %408, %429, %cst_322 {dimension_numbers = #tpu.dot_dimension_numbers<[1], [0], [0], [1], [0, 0, 1, 1], [], []>} : vector<8x128xbf16>, vector<128x128xbf16>, vector<8x128xf32> -> vector<8x128xf32>
    %431 = arith.addf %428, %430 : vector<8x128xf32>
    %432 = arith.addf %431, %32 : vector<8x128xf32>
    %cst_323 = arith.constant 0.000000e+00 : f32
    %433 = vector.broadcast %cst_323 : f32 to vector<8x128xf32>
    %434 = arith.maximumf %432, %433 : vector<8x128xf32>
    %435 = arith.truncf %434 : vector<8x128xf32> to vector<8x128xbf16>
    %c0_324 = arith.constant 0 : index
    %c0_325 = arith.constant 0 : index
    %436 = vector.load %arg17[%c0_324, %c0_325] : memref<128x128xbf16, #tpu.memory_space<vmem>>, vector<128x128xbf16>
    %cst_326 = arith.constant dense<0.000000e+00> : vector<8x128xf32>
    %437 = tpu.matmul %417, %436, %cst_326 {dimension_numbers = #tpu.dot_dimension_numbers<[1], [0], [0], [1], [0, 0, 1, 1], [], []>} : vector<8x128xbf16>, vector<128x128xbf16>, vector<8x128xf32> -> vector<8x128xf32>
    %c0_327 = arith.constant 0 : index
    %c0_328 = arith.constant 0 : index
    %438 = vector.load %arg18[%c0_327, %c0_328] : memref<128x128xbf16, #tpu.memory_space<vmem>>, vector<128x128xbf16>
    %cst_329 = arith.constant dense<0.000000e+00> : vector<8x128xf32>
    %439 = tpu.matmul %426, %438, %cst_329 {dimension_numbers = #tpu.dot_dimension_numbers<[1], [0], [0], [1], [0, 0, 1, 1], [], []>} : vector<8x128xbf16>, vector<128x128xbf16>, vector<8x128xf32> -> vector<8x128xf32>
    %440 = arith.addf %437, %439 : vector<8x128xf32>
    %441 = arith.addf %440, %27 : vector<8x128xf32>
    %cst_330 = arith.constant 0.000000e+00 : f32
    %442 = vector.broadcast %cst_330 : f32 to vector<8x128xf32>
    %443 = arith.maximumf %441, %442 : vector<8x128xf32>
    %444 = arith.truncf %443 : vector<8x128xf32> to vector<8x128xbf16>
    %c0_331 = arith.constant 0 : index
    %c0_332 = arith.constant 0 : index
    %445 = vector.load %arg21[%c0_331, %c0_332] : memref<128x128xbf16, #tpu.memory_space<vmem>>, vector<128x128xbf16>
    %cst_333 = arith.constant dense<0.000000e+00> : vector<8x128xf32>
    %446 = tpu.matmul %426, %445, %cst_333 {dimension_numbers = #tpu.dot_dimension_numbers<[1], [0], [0], [1], [0, 0, 1, 1], [], []>} : vector<8x128xbf16>, vector<128x128xbf16>, vector<8x128xf32> -> vector<8x128xf32>
    %c0_334 = arith.constant 0 : index
    %c0_335 = arith.constant 0 : index
    %447 = vector.load %arg22[%c0_334, %c0_335] : memref<128x128xbf16, #tpu.memory_space<vmem>>, vector<128x128xbf16>
    %cst_336 = arith.constant dense<0.000000e+00> : vector<8x128xf32>
    %448 = tpu.matmul %435, %447, %cst_336 {dimension_numbers = #tpu.dot_dimension_numbers<[1], [0], [0], [1], [0, 0, 1, 1], [], []>} : vector<8x128xbf16>, vector<128x128xbf16>, vector<8x128xf32> -> vector<8x128xf32>
    %449 = arith.addf %446, %448 : vector<8x128xf32>
    %450 = arith.addf %449, %32 : vector<8x128xf32>
    %cst_337 = arith.constant 0.000000e+00 : f32
    %451 = vector.broadcast %cst_337 : f32 to vector<8x128xf32>
    %452 = arith.maximumf %450, %451 : vector<8x128xf32>
    %453 = arith.truncf %452 : vector<8x128xf32> to vector<8x128xbf16>
    %c0_338 = arith.constant 0 : index
    %c0_339 = arith.constant 0 : index
    %454 = vector.load %arg21[%c0_338, %c0_339] : memref<128x128xbf16, #tpu.memory_space<vmem>>, vector<128x128xbf16>
    %cst_340 = arith.constant dense<0.000000e+00> : vector<8x128xf32>
    %455 = tpu.matmul %444, %454, %cst_340 {dimension_numbers = #tpu.dot_dimension_numbers<[1], [0], [0], [1], [0, 0, 1, 1], [], []>} : vector<8x128xbf16>, vector<128x128xbf16>, vector<8x128xf32> -> vector<8x128xf32>
    %c0_341 = arith.constant 0 : index
    %c0_342 = arith.constant 0 : index
    %456 = vector.load %arg22[%c0_341, %c0_342] : memref<128x128xbf16, #tpu.memory_space<vmem>>, vector<128x128xbf16>
    %cst_343 = arith.constant dense<0.000000e+00> : vector<8x128xf32>
    %457 = tpu.matmul %453, %456, %cst_343 {dimension_numbers = #tpu.dot_dimension_numbers<[1], [0], [0], [1], [0, 0, 1, 1], [], []>} : vector<8x128xbf16>, vector<128x128xbf16>, vector<8x128xf32> -> vector<8x128xf32>
    %458 = arith.addf %455, %457 : vector<8x128xf32>
    %459 = arith.addf %458, %32 : vector<8x128xf32>
    %cst_344 = arith.constant 0.000000e+00 : f32
    %460 = vector.broadcast %cst_344 : f32 to vector<8x128xf32>
    %461 = arith.maximumf %459, %460 : vector<8x128xf32>
    %462 = arith.truncf %461 : vector<8x128xf32> to vector<8x128xbf16>
    %c0_345 = arith.constant 0 : index
    %c0_346 = arith.constant 0 : index
    %463 = vector.load %arg25[%c0_345, %c0_346] : memref<128x128xbf16, #tpu.memory_space<vmem>>, vector<128x128xbf16>
    %cst_347 = arith.constant dense<0.000000e+00> : vector<8x128xf32>
    %464 = tpu.matmul %462, %463, %cst_347 {dimension_numbers = #tpu.dot_dimension_numbers<[1], [0], [0], [1], [0, 0, 1, 1], [], []>} : vector<8x128xbf16>, vector<128x128xbf16>, vector<8x128xf32> -> vector<8x128xf32>
    %c0_348 = arith.constant 0 : index
    %c0_349 = arith.constant 0 : index
    %465 = vector.load %arg26[%c0_348, %c0_349] : memref<1x128xf32, #tpu.memory_space<vmem>>, vector<1x128xf32>
    %466 = vector.broadcast %465 : vector<1x128xf32> to vector<8x128xf32>
    %467 = arith.addf %464, %466 : vector<8x128xf32>
    %c0_350 = arith.constant 0 : index
    %c0_351 = arith.constant 0 : index
    %468 = vector.load %arg27[%c0_350, %c0_351] : memref<8x128xf32, #tpu.memory_space<vmem>>, vector<8x128xf32>
    tpu.vector_store %arg27[%c0_350, %c0_351], %467 {strides = array<i32>} : memref<8x128xf32, #tpu.memory_space<vmem>>, vector<8x128xf32>,
    return
  }
}

</mosaic_0001>

<llo_original>
// kernel: rnn_forward.1
$region0: #{rnn_forward.1}
  #allocation0 [shape = 'u32[]', space=smem, size = 0x4, offset = 0x4, fixed_abs, tag = 'smem constant byte address 0x4 - core index']
  #allocation1 [shape = 'u32[144,128]{1,0:T(1,128)}', space=vmem, size = 0x12000, scoped, tag = 'internal scratch']
  %s0 = inlined_call_operand.vmem [shape: bf16[64,16], index: 0, kind: input, shape index: {}]
  %s1 = inlined_call_operand.vmem [shape: bf16[16,128], index: 1, kind: input, shape index: {}]
  %s2 = inlined_call_operand.vmem [shape: bf16[128,128], index: 2, kind: input, shape index: {}]
  %s3 = inlined_call_operand.vmem [shape: f32[1,128], index: 3, kind: input, shape index: {}]
  %s4 = inlined_call_operand.vmem [shape: f32[1,128], index: 4, kind: input, shape index: {}]
  %s5 = inlined_call_operand.vmem [shape: bf16[128,128], index: 5, kind: input, shape index: {}]
  %s6 = inlined_call_operand.vmem [shape: bf16[128,128], index: 6, kind: input, shape index: {}]
  %s7 = inlined_call_operand.vmem [shape: f32[1,128], index: 7, kind: input, shape index: {}]
  %s8 = inlined_call_operand.vmem [shape: f32[1,128], index: 8, kind: input, shape index: {}]
  %s9 = inlined_call_operand.vmem [shape: bf16[128,128], index: 9, kind: input, shape index: {}]
  %s10 = inlined_call_operand.vmem [shape: bf16[128,128], index: 10, kind: input, shape index: {}]
  %s11 = inlined_call_operand.vmem [shape: f32[1,128], index: 11, kind: input, shape index: {}]
  %s12 = inlined_call_operand.vmem [shape: f32[1,128], index: 12, kind: input, shape index: {}]
  %s13 = inlined_call_operand.vmem [shape: bf16[128,128], index: 13, kind: input, shape index: {}]
  %s14 = inlined_call_operand.vmem [shape: bf16[128,128], index: 14, kind: input, shape index: {}]
  %s15 = inlined_call_operand.vmem [shape: f32[1,128], index: 15, kind: input, shape index: {}]
  %s16 = inlined_call_operand.vmem [shape: f32[1,128], index: 16, kind: input, shape index: {}]
  %s17 = inlined_call_operand.vmem [shape: bf16[128,128], index: 17, kind: input, shape index: {}]
  %s18 = inlined_call_operand.vmem [shape: bf16[128,128], index: 18, kind: input, shape index: {}]
  %s19 = inlined_call_operand.vmem [shape: f32[1,128], index: 19, kind: input, shape index: {}]
  %s20 = inlined_call_operand.vmem [shape: f32[1,128], index: 20, kind: input, shape index: {}]
  %s21 = inlined_call_operand.vmem [shape: bf16[128,128], index: 21, kind: input, shape index: {}]
  %s22 = inlined_call_operand.vmem [shape: bf16[128,128], index: 22, kind: input, shape index: {}]
  %s23 = inlined_call_operand.vmem [shape: f32[1,128], index: 23, kind: input, shape index: {}]
  %s24 = inlined_call_operand.vmem [shape: f32[1,128], index: 24, kind: input, shape index: {}]
  %s25 = inlined_call_operand.vmem [shape: bf16[128,128], index: 25, kind: input, shape index: {}]
  %s26 = inlined_call_operand.vmem [shape: f32[1,128], index: 26, kind: input, shape index: {}]
  %s27 = inlined_call_operand.vmem [shape: f32[8,128], index: 27, kind: output, shape index: {}]
  %s28 = sld [smem:[#allocation0]]
  $region118: #{rnn_forward.1} parent=0
    _
  %s30 = ssub.s32 1, %s28
  %s31 = scalar_select 0, %s30, %s28
  // Predicated region
  $region2: #{rnn_forward.1} parent=0 // pred_check
    _
  $region3: #{rnn_forward.1} parent=0 // pred_check_branch
    %33 = sbr.rel (0) target = $region5
  $region4: #{rnn_forward.1} parent=0 // pred_region
    _
  $region5: #{rnn_forward.1} parent=0 // pred_fallthru
    _
  // Predicated region
  $region6: #{rnn_forward.1} parent=0 // pred_check
    _
  $region7: #{rnn_forward.1} parent=0 // pred_check_branch
    %35 = sbr.rel (0) target = $region9
  $region8: #{rnn_forward.1} parent=0 // pred_region
    _
  $region9: #{rnn_forward.1} parent=0 // pred_fallthru
    _
  // Predicated region
  $region10: #{rnn_forward.1} parent=0 // pred_check
    _
  $region11: #{rnn_forward.1} parent=0 // pred_check_branch
    %37 = sbr.rel (0) target = $region13
  $region12: #{rnn_forward.1} parent=0 // pred_region
    _
  $region13: #{rnn_forward.1} parent=0 // pred_fallthru
    _
  // Predicated region
  $region14: #{rnn_forward.1} parent=0 // pred_check
    _
  $region15: #{rnn_forward.1} parent=0 // pred_check_branch
    %39 = sbr.rel (0) target = $region17
  $region16: #{rnn_forward.1} parent=0 // pred_region
    _
  $region17: #{rnn_forward.1} parent=0 // pred_fallthru
    _
  // Predicated region
  $region18: #{rnn_forward.1} parent=0 // pred_check
    _
  $region19: #{rnn_forward.1} parent=0 // pred_check_branch
    %41 = sbr.rel (0) target = $region21
  $region20: #{rnn_forward.1} parent=0 // pred_region
    _
  $region21: #{rnn_forward.1} parent=0 // pred_fallthru
    _
  // Predicated region
  $region22: #{rnn_forward.1} parent=0 // pred_check
    _
  $region23: #{rnn_forward.1} parent=0 // pred_check_branch
    %43 = sbr.rel (0) target = $region25
  $region24: #{rnn_forward.1} parent=0 // pred_region
    _
  $region25: #{rnn_forward.1} parent=0 // pred_fallthru
    _
  // Predicated region
  $region26: #{rnn_forward.1} parent=0 // pred_check
    _
  $region27: #{rnn_forward.1} parent=0 // pred_check_branch
    %45 = sbr.rel (0) target = $region29
  $region28: #{rnn_forward.1} parent=0 // pred_region
    _
  $region29: #{rnn_forward.1} parent=0 // pred_fallthru
    _
  // Predicated region
  $region30: #{rnn_forward.1} parent=0 // pred_check
    _
  $region31: #{rnn_forward.1} parent=0 // pred_check_branch
    %47 = sbr.rel (0) target = $region33
  $region32: #{rnn_forward.1} parent=0 // pred_region
    _
  $region33: #{rnn_forward.1} parent=0 // pred_fallthru
    _
  // Predicated region
  $region34: #{rnn_forward.1} parent=0 // pred_check
    _
  $region35: #{rnn_forward.1} parent=0 // pred_check_branch
    %49 = sbr.rel (0) target = $region37
  $region36: #{rnn_forward.1} parent=0 // pred_region
    _
  $region37: #{rnn_forward.1} parent=0 // pred_fallthru
    _
  // Predicated region
  $region38: #{rnn_forward.1} parent=0 // pred_check
    _
  $region39: #{rnn_forward.1} parent=0 // pred_check_branch
    %51 = sbr.rel (0) target = $region41
  $region40: #{rnn_forward.1} parent=0 // pred_region
    _
  $region41: #{rnn_forward.1} parent=0 // pred_fallthru
    _
  // Predicated region
  $region42: #{rnn_forward.1} parent=0 // pred_check
    _
  $region43: #{rnn_forward.1} parent=0 // pred_check_branch
    %53 = sbr.rel (0) target = $region45
  $region44: #{rnn_forward.1} parent=0 // pred_region
    _
  $region45: #{rnn_forward.1} parent=0 // pred_fallthru
    _
  // Predicated region
  $region46: #{rnn_forward.1} parent=0 // pred_check
    _
  $region47: #{rnn_forward.1} parent=0 // pred_check_branch
    %55 = sbr.rel (0) target = $region49
  $region48: #{rnn_forward.1} parent=0 // pred_region
    _
  $region49: #{rnn_forward.1} parent=0 // pred_fallthru
    _
  // Predicated region
  $region50: #{rnn_forward.1} parent=0 // pred_check
    _
  $region51: #{rnn_forward.1} parent=0 // pred_check_branch
    %57 = sbr.rel (0) target = $region53
  $region52: #{rnn_forward.1} parent=0 // pred_region
    _
  $region53: #{rnn_forward.1} parent=0 // pred_fallthru
    _
  // Predicated region
  $region54: #{rnn_forward.1} parent=0 // pred_check
    _
  $region55: #{rnn_forward.1} parent=0 // pred_check_branch
    %59 = sbr.rel (0) target = $region57
  $region56: #{rnn_forward.1} parent=0 // pred_region
    _
  $region57: #{rnn_forward.1} parent=0 // pred_fallthru
    _
  // Predicated region
  $region58: #{rnn_forward.1} parent=0 // pred_check
    _
  $region59: #{rnn_forward.1} parent=0 // pred_check_branch
    %61 = sbr.rel (0) target = $region61
  $region60: #{rnn_forward.1} parent=0 // pred_region
    _
  $region61: #{rnn_forward.1} parent=0 // pred_fallthru
    _
  // Predicated region
  $region62: #{rnn_forward.1} parent=0 // pred_check
    _
  $region63: #{rnn_forward.1} parent=0 // pred_check_branch
    %63 = sbr.rel (0) target = $region65
  $region64: #{rnn_forward.1} parent=0 // pred_region
    _
  $region65: #{rnn_forward.1} parent=0 // pred_fallthru
    _
  // Predicated region
  $region66: #{rnn_forward.1} parent=0 // pred_check
    _
  $region67: #{rnn_forward.1} parent=0 // pred_check_branch
    %65 = sbr.rel (0) target = $region69
  $region68: #{rnn_forward.1} parent=0 // pred_region
    _
  $region69: #{rnn_forward.1} parent=0 // pred_fallthru
    _
  // Predicated region
  $region70: #{rnn_forward.1} parent=0 // pred_check
    _
  $region71: #{rnn_forward.1} parent=0 // pred_check_branch
    %67 = sbr.rel (0) target = $region73
  $region72: #{rnn_forward.1} parent=0 // pred_region
    _
  $region73: #{rnn_forward.1} parent=0 // pred_fallthru
    _
  // Predicated region
  $region74: #{rnn_forward.1} parent=0 // pred_check
    _
  $region75: #{rnn_forward.1} parent=0 // pred_check_branch
    %69 = sbr.rel (0) target = $region77
  $region76: #{rnn_forward.1} parent=0 // pred_region
    _
  $region77: #{rnn_forward.1} parent=0 // pred_fallthru
    _
  // Predicated region
  $region78: #{rnn_forward.1} parent=0 // pred_check
    _
  $region79: #{rnn_forward.1} parent=0 // pred_check_branch
    %71 = sbr.rel (0) target = $region81
  $region80: #{rnn_forward.1} parent=0 // pred_region
    _
  $region81: #{rnn_forward.1} parent=0 // pred_fallthru
    _
  // Predicated region
  $region82: #{rnn_forward.1} parent=0 // pred_check
    _
  $region83: #{rnn_forward.1} parent=0 // pred_check_branch
    %73 = sbr.rel (0) target = $region85
  $region84: #{rnn_forward.1} parent=0 // pred_region
    _
  $region85: #{rnn_forward.1} parent=0 // pred_fallthru
    _
  // Predicated region
  $region86: #{rnn_forward.1} parent=0 // pred_check
    _
  $region87: #{rnn_forward.1} parent=0 // pred_check_branch
    %75 = sbr.rel (0) target = $region89
  $region88: #{rnn_forward.1} parent=0 // pred_region
    _
  $region89: #{rnn_forward.1} parent=0 // pred_fallthru
    _
  // Predicated region
  $region90: #{rnn_forward.1} parent=0 // pred_check
    _
  $region91: #{rnn_forward.1} parent=0 // pred_check_branch
    %77 = sbr.rel (0) target = $region93
  $region92: #{rnn_forward.1} parent=0 // pred_region
    _
  $region93: #{rnn_forward.1} parent=0 // pred_fallthru
    _
  // Predicated region
  $region94: #{rnn_forward.1} parent=0 // pred_check
    _
  $region95: #{rnn_forward.1} parent=0 // pred_check_branch
    %79 = sbr.rel (0) target = $region97
  $region96: #{rnn_forward.1} parent=0 // pred_region
    _
  $region97: #{rnn_forward.1} parent=0 // pred_fallthru
    _
  // Predicated region
  $region98: #{rnn_forward.1} parent=0 // pred_check
    _
  $region99: #{rnn_forward.1} parent=0 // pred_check_branch
    %81 = sbr.rel (0) target = $region101
  $region100: #{rnn_forward.1} parent=0 // pred_region
    _
  $region101: #{rnn_forward.1} parent=0 // pred_fallthru
    _
  // Predicated region
  $region102: #{rnn_forward.1} parent=0 // pred_check
    _
  $region103: #{rnn_forward.1} parent=0 // pred_check_branch
    %83 = sbr.rel (0) target = $region105
  $region104: #{rnn_forward.1} parent=0 // pred_region
    _
  $region105: #{rnn_forward.1} parent=0 // pred_fallthru
    _
  // Predicated region
  $region106: #{rnn_forward.1} parent=0 // pred_check
    _
  $region107: #{rnn_forward.1} parent=0 // pred_check_branch
    %85 = sbr.rel (0) target = $region109
  $region108: #{rnn_forward.1} parent=0 // pred_region
    _
  $region109: #{rnn_forward.1} parent=0 // pred_fallthru
    _
  %v87 = vld [vmem:[%s0] sm:$0xf]
  %v88 = vld [vmem:[%s0 + $0x4] sm:$0xf]
  %v89 = vld [vmem:[%s0 + $0x8] sm:$0xf]
  %v90 = vld [vmem:[%s0 + $0xc] sm:$0xf]
  %v91 = vld [vmem:[%s0 + $0x10] sm:$0xf]
  %v92 = vld [vmem:[%s0 + $0x14] sm:$0xf]
  %v93 = vld [vmem:[%s0 + $0x18] sm:$0xf]
  %v94 = vld [vmem:[%s0 + $0x1c] sm:$0xf]
  %v95 = vld [vmem:[%s1] sm:$0xf]
  %v96 = vld [vmem:[%s1 + $0x4] sm:$0xf]
  %v105 = vunpack.c.l.b16 %v87
  %v106 = vunpack.c.l.b16 %v88
  %v107 = vunpack.c.l.b16 %v89
  %v108 = vunpack.c.l.b16 %v90
  %v109 = vunpack.c.l.b16 %v91
  %v110 = vunpack.c.l.b16 %v92
  %v111 = vunpack.c.l.b16 %v93
  %v112 = vunpack.c.l.b16 %v94
  %v113 = vpack.c.b16 %v106, %v105
  %v114 = vpack.c.b16 %v108, %v107
  %v115 = vpack.c.b16 %v110, %v109
  %v116 = vpack.c.b16 %v112, %v111
  %v119 = vunpack.c.l.b16 %v95
  %v120 = vunpack.c.l.b16 %v96
  %v121 = vpack.c.b16 %v120, %v119
  %vm123 = vcmask 130048
  %v125 = vsel %vm123, %v113, 0
  %v128 = vsel %vm123, %v114, 0
  %v131 = vsel %vm123, %v115, 0
  %v134 = vsel %vm123, %v116, 0
  %136 = vmatprep.subr.bf16.mxu0 0
  %137 = vmatpush1.bf16.msra.mxu0 %v121
  %138 = vmatprep.subr.bf16.mxu0 0
  %139 = vmatpush1.bf16.msra.mxu0 0
  %140 = vmatprep.subr.bf16.mxu0 0
  %141 = vmatpush1.bf16.msra.mxu0 0
  %142 = vmatprep.subr.bf16.mxu0 0
  %143 = vmatpush1.bf16.msra.mxu0 0
  %144 = vmatprep.subr.bf16.mxu0 0
  %145 = vmatpush1.bf16.msra.mxu0 0
  %146 = vmatprep.subr.bf16.mxu0 0
  %147 = vmatpush1.bf16.msra.mxu0 0
  %148 = vmatprep.subr.bf16.mxu0 0
  %149 = vmatpush1.bf16.msra.mxu0 0
  %150 = vmatprep.subr.bf16.mxu0 0
  %151 = vmatpush1.bf16.msra.mxu0 0
  %152 = vmatprep.subr.bf16.mxu0 0
  %153 = vmatpush1.bf16.msra.mxu0 0
  %154 = vmatprep.subr.bf16.mxu0 0
  %155 = vmatpush1.bf16.msra.mxu0 0
  %156 = vmatprep.subr.bf16.mxu0 0
  %157 = vmatpush1.bf16.msra.mxu0 0
  %158 = vmatprep.subr.bf16.mxu0 0
  %159 = vmatpush1.bf16.msra.mxu0 0
  %160 = vmatprep.subr.bf16.mxu0 0
  %161 = vmatpush1.bf16.msra.mxu0 0
  %162 = vmatprep.subr.bf16.mxu0 0
  %163 = vmatpush1.bf16.msra.mxu0 0
  %164 = vmatprep.subr.bf16.mxu0 0
  %165 = vmatpush1.bf16.msra.mxu0 0
  %166 = vmatprep.subr.bf16.mxu0 0
  %167 = vmatpush1.bf16.msra.mxu0 0
  %168 = vmatprep.mubr.bf16.mxu0 0
  %169 = vmatmul.mubr.bf16.gmra.mrb[0].mxu0 %v125
  %v170 = vpop.f32.mrb[0].mxu0
  %v171 = vadd.f32 0.0, %v170
  %v172 = vpop.f32.mrb[0].mxu0
  %v173 = vpop.f32.mrb[0].mxu0
  %v174 = vadd.f32 0.0, %v173
  %v175 = vpop.f32.mrb[0].mxu0
  %176 = vmatprep.mubr.bf16.mxu0 0
  %177 = vmatmul.mubr.bf16.gmra.mrb[0].mxu0 %v128
  %v178 = vpop.f32.mrb[0].mxu0
  %v179 = vadd.f32 0.0, %v178
  %v180 = vpop.f32.mrb[0].mxu0
  %v181 = vpop.f32.mrb[0].mxu0
  %v182 = vadd.f32 0.0, %v181
  %v183 = vpop.f32.mrb[0].mxu0
  %184 = vmatprep.mubr.bf16.mxu0 0
  %185 = vmatmul.mubr.bf16.gmra.mrb[0].mxu0 %v131
  %v186 = vpop.f32.mrb[0].mxu0
  %v187 = vadd.f32 0.0, %v186
  %v188 = vpop.f32.mrb[0].mxu0
  %v189 = vpop.f32.mrb[0].mxu0
  %v190 = vadd.f32 0.0, %v189
  %v191 = vpop.f32.mrb[0].mxu0
  %192 = vmatprep.mubr.bf16.mxu0 0
  %193 = vmatmul.mubr.bf16.gmra.mrb[0].mxu0 %v134
  %v194 = vpop.f32.mrb[0].mxu0
  %v195 = vadd.f32 0.0, %v194
  %v196 = vpop.f32.mrb[0].mxu0
  %v197 = vpop.f32.mrb[0].mxu0
  %v198 = vadd.f32 0.0, %v197
  %v199 = vpop.f32.mrb[0].mxu0
  %200 = vdwg.mxu0
  %v201 = vld [vmem:[%s3] sm:$0x1]
  %v202 = vld [vmem:[%s4] sm:$0x1]
  %v203 = vadd.f32 %v201, %v202
  %v205 = vlaneseq
  %v206 = vshrl.u32 %v205, 7
  %v207 = vsub.s32 0, %v206
  %v208 = vrot.slane %v203, %v207
  %v210 = vld [vmem:[%s7] sm:$0x1]
  %v211 = vld [vmem:[%s8] sm:$0x1]
  %v212 = vadd.f32 %v210, %v211
  %v214 = vlaneseq
  %v215 = vshrl.u32 %v214, 7
  %v216 = vsub.s32 0, %v215
  %v217 = vrot.slane %v212, %v216
  %v219 = vld [vmem:[%s11] sm:$0x1]
  %v220 = vld [vmem:[%s12] sm:$0x1]
  %v221 = vadd.f32 %v219, %v220
  %v223 = vlaneseq
  %v224 = vshrl.u32 %v223, 7
  %v225 = vsub.s32 0, %v224
  %v226 = vrot.slane %v221, %v225
  %v228 = vld [vmem:[%s15] sm:$0x1]
  %v229 = vld [vmem:[%s16] sm:$0x1]
  %v230 = vadd.f32 %v228, %v229
  %v232 = vlaneseq
  %v233 = vshrl.u32 %v232, 7
  %v234 = vsub.s32 0, %v233
  %v235 = vrot.slane %v230, %v234
  %v237 = vld [vmem:[%s19] sm:$0x1]
  %v238 = vld [vmem:[%s20] sm:$0x1]
  %v239 = vadd.f32 %v237, %v238
  %v241 = vlaneseq
  %v242 = vshrl.u32 %v241, 7
  %v243 = vsub.s32 0, %v242
  %v244 = vrot.slane %v239, %v243
  %v246 = vld [vmem:[%s23] sm:$0x1]
  %v247 = vld [vmem:[%s24] sm:$0x1]
  %v248 = vadd.f32 %v246, %v247
  %v250 = vlaneseq
  %v251 = vshrl.u32 %v250, 7
  %v252 = vsub.s32 0, %v251
  %v253 = vrot.slane %v248, %v252
  %v255 = vld [vmem:[%s2] sm:$0xf]
  %v256 = vld [vmem:[%s2 + $0x4] sm:$0xf]
  %v257 = vld [vmem:[%s2 + $0x8] sm:$0xf]
  %v258 = vld [vmem:[%s2 + $0xc] sm:$0xf]
  %v259 = vld [vmem:[%s2 + $0x10] sm:$0xf]
  %v260 = vld [vmem:[%s2 + $0x14] sm:$0xf]
  %v261 = vld [vmem:[%s2 + $0x18] sm:$0xf]
  %v262 = vld [vmem:[%s2 + $0x1c] sm:$0xf]
  %v263 = vld [vmem:[%s2 + $0x20] sm:$0xf]
  %v264 = vld [vmem:[%s2 + $0x24] sm:$0xf]
  %v265 = vld [vmem:[%s2 + $0x28] sm:$0xf]
  %v266 = vld [vmem:[%s2 + $0x2c] sm:$0xf]
  %v267 = vld [vmem:[%s2 + $0x30] sm:$0xf]
  %v268 = vld [vmem:[%s2 + $0x34] sm:$0xf]
  %v269 = vld [vmem:[%s2 + $0x38] sm:$0xf]
  %v270 = vld [vmem:[%s2 + $0x3c] sm:$0xf]
  %v287 = vunpack.c.l.b16 %v255
  %v288 = vunpack.c.l.b16 %v256
  %v289 = vunpack.c.l.b16 %v257
  %v290 = vunpack.c.l.b16 %v258
  %v291 = vunpack.c.l.b16 %v259
  %v292 = vunpack.c.l.b16 %v260
  %v293 = vunpack.c.l.b16 %v261
  %v294 = vunpack.c.l.b16 %v262
  %v295 = vunpack.c.l.b16 %v263
  %v296 = vunpack.c.l.b16 %v264
  %v297 = vunpack.c.l.b16 %v265
  %v298 = vunpack.c.l.b16 %v266
  %v299 = vunpack.c.l.b16 %v267
  %v300 = vunpack.c.l.b16 %v268
  %v301 = vunpack.c.l.b16 %v269
  %v302 = vunpack.c.l.b16 %v270
  %v303 = vpack.c.b16 %v288, %v287
  %v304 = vpack.c.b16 %v290, %v289
  %v305 = vpack.c.b16 %v292, %v291
  %v306 = vpack.c.b16 %v294, %v293
  %v307 = vpack.c.b16 %v296, %v295
  %v308 = vpack.c.b16 %v298, %v297
  %v309 = vpack.c.b16 %v300, %v299
  %v310 = vpack.c.b16 %v302, %v301
  %319 = vmatprep.subr.bf16.mxu0 0
  %320 = vmatpush1.bf16.msra.mxu0 %v303
  %321 = vmatprep.subr.bf16.mxu0 0
  %322 = vmatpush1.bf16.msra.mxu0 %v304
  %323 = vmatprep.subr.bf16.mxu0 0
  %324 = vmatpush1.bf16.msra.mxu0 %v305
  %325 = vmatprep.subr.bf16.mxu0 0
  %326 = vmatpush1.bf16.msra.mxu0 %v306
  %327 = vmatprep.subr.bf16.mxu0 0
  %328 = vmatpush1.bf16.msra.mxu0 %v307
  %329 = vmatprep.subr.bf16.mxu0 0
  %330 = vmatpush1.bf16.msra.mxu0 %v308
  %331 = vmatprep.subr.bf16.mxu0 0
  %332 = vmatpush1.bf16.msra.mxu0 %v309
  %333 = vmatprep.subr.bf16.mxu0 0
  %334 = vmatpush1.bf16.msra.mxu0 %v310
  %335 = vmatprep.subr.bf16.mxu0 0
  %336 = vmatpush1.bf16.msra.mxu0 0
  %337 = vmatprep.subr.bf16.mxu0 0
  %338 = vmatpush1.bf16.msra.mxu0 0
  %339 = vmatprep.subr.bf16.mxu0 0
  %340 = vmatpush1.bf16.msra.mxu0 0
  %341 = vmatprep.subr.bf16.mxu0 0
  %342 = vmatpush1.bf16.msra.mxu0 0
  %343 = vmatprep.subr.bf16.mxu0 0
  %344 = vmatpush1.bf16.msra.mxu0 0
  %345 = vmatprep.subr.bf16.mxu0 0
  %346 = vmatpush1.bf16.msra.mxu0 0
  %347 = vmatprep.subr.bf16.mxu0 0
  %348 = vmatpush1.bf16.msra.mxu0 0
  %349 = vmatprep.subr.bf16.mxu0 0
  %350 = vmatpush1.bf16.msra.mxu0 0
  %351 = vmatprep.mubr.bf16.mxu0 0
  %352 = vmatmul.mubr.bf16.gmra.mrb[0].mxu0 0
  %v353 = vpop.f32.mrb[0].mxu0
  %v354 = vadd.f32 0.0, %v353
  %v355 = vpop.f32.mrb[0].mxu0
  %v356 = vpop.f32.mrb[0].mxu0
  %v357 = vpop.f32.mrb[0].mxu0
  %358 = vdwg.mxu0
  %v359 = vadd.f32 %v171, %v354
  %v360 = vadd.f32 %v359, %v208
  %v361 = vmax.f32 %v360, 0.0
  %v362 = vpack.c.bf16 %v361, %v361
  %363 = vmatprep.subr.bf16.mxu0 0
  %364 = vmatpush1.bf16.msra.mxu0 %v303
  %365 = vmatprep.subr.bf16.mxu0 0
  %366 = vmatpush1.bf16.msra.mxu0 %v304
  %367 = vmatprep.subr.bf16.mxu0 0
  %368 = vmatpush1.bf16.msra.mxu0 %v305
  %369 = vmatprep.subr.bf16.mxu0 0
  %370 = vmatpush1.bf16.msra.mxu0 %v306
  %371 = vmatprep.subr.bf16.mxu0 0
  %372 = vmatpush1.bf16.msra.mxu0 %v307
  %373 = vmatprep.subr.bf16.mxu0 0
  %374 = vmatpush1.bf16.msra.mxu0 %v308
  %375 = vmatprep.subr.bf16.mxu0 0
  %376 = vmatpush1.bf16.msra.mxu0 %v309
  %377 = vmatprep.subr.bf16.mxu0 0
  %378 = vmatpush1.bf16.msra.mxu0 %v310
  %379 = vmatprep.subr.bf16.mxu0 0
  %380 = vmatpush1.bf16.msra.mxu0 0
  %381 = vmatprep.subr.bf16.mxu0 0
  %382 = vmatpush1.bf16.msra.mxu0 0
  %383 = vmatprep.subr.bf16.mxu0 0
  %384 = vmatpush1.bf16.msra.mxu0 0
  %385 = vmatprep.subr.bf16.mxu0 0
  %386 = vmatpush1.bf16.msra.mxu0 0
  %387 = vmatprep.subr.bf16.mxu0 0
  %388 = vmatpush1.bf16.msra.mxu0 0
  %389 = vmatprep.subr.bf16.mxu0 0
  %390 = vmatpush1.bf16.msra.mxu0 0
  %391 = vmatprep.subr.bf16.mxu0 0
  %392 = vmatpush1.bf16.msra.mxu0 0
  %393 = vmatprep.subr.bf16.mxu0 0
  %394 = vmatpush1.bf16.msra.mxu0 0
  %395 = vmatprep.mubr.bf16.mxu0 0
  %396 = vmatmul.mubr.bf16.gmra.mrb[0].mxu0 %v362
  %v397 = vpop.f32.mrb[0].mxu0
  %v398 = vadd.f32 0.0, %v397
  %v399 = vpop.f32.mrb[0].mxu0
  %v400 = vpop.f32.mrb[0].mxu0
  %v401 = vpop.f32.mrb[0].mxu0
  %402 = vdwg.mxu0
  %v403 = vadd.f32 %v174, %v398
  %v404 = vadd.f32 %v403, %v208
  %v405 = vmax.f32 %v404, 0.0
  %v406 = vpack.c.bf16 %v405, %v405
  %v407 = vld [vmem:[%s5] sm:$0xf]
  %v408 = vld [vmem:[%s5 + $0x4] sm:$0xf]
  %v409 = vld [vmem:[%s5 + $0x8] sm:$0xf]
  %v410 = vld [vmem:[%s5 + $0xc] sm:$0xf]
  %v411 = vld [vmem:[%s5 + $0x10] sm:$0xf]
  %v412 = vld [vmem:[%s5 + $0x14] sm:$0xf]
  %v413 = vld [vmem:[%s5 + $0x18] sm:$0xf]
  %v414 = vld [vmem:[%s5 + $0x1c] sm:$0xf]
  %v415 = vld [vmem:[%s5 + $0x20] sm:$0xf]
  %v416 = vld [vmem:[%s5 + $0x24] sm:$0xf]
  %v417 = vld [vmem:[%s5 + $0x28] sm:$0xf]
  %v418 = vld [vmem:[%s5 + $0x2c] sm:$0xf]
  %v419 = vld [vmem:[%s5 + $0x30] sm:$0xf]
  %v420 = vld [vmem:[%s5 + $0x34] sm:$0xf]
  %v421 = vld [vmem:[%s5 + $0x38] sm:$0xf]
  %v422 = vld [vmem:[%s5 + $0x3c] sm:$0xf]
  %v423 = vld [vmem:[%s6] sm:$0xf]
  %v424 = vld [vmem:[%s6 + $0x4] sm:$0xf]
  %v425 = vld [vmem:[%s6 + $0x8] sm:$0xf]
  %v426 = vld [vmem:[%s6 + $0xc] sm:$0xf]
  %v427 = vld [vmem:[%s6 + $0x10] sm:$0xf]
  %v428 = vld [vmem:[%s6 + $0x14] sm:$0xf]
  %v429 = vld [vmem:[%s6 + $0x18] sm:$0xf]
  %v430 = vld [vmem:[%s6 + $0x1c] sm:$0xf]
  %v431 = vld [vmem:[%s6 + $0x20] sm:$0xf]
  %v432 = vld [vmem:[%s6 + $0x24] sm:$0xf]
  %v433 = vld [vmem:[%s6 + $0x28] sm:$0xf]
  %v434 = vld [vmem:[%s6 + $0x2c] sm:$0xf]
  %v435 = vld [vmem:[%s6 + $0x30] sm:$0xf]
  %v436 = vld [vmem:[%s6 + $0x34] sm:$0xf]
  %v437 = vld [vmem:[%s6 + $0x38] sm:$0xf]
  %v438 = vld [vmem:[%s6 + $0x3c] sm:$0xf]
  %v455 = vunpack.c.l.b16 %v423
  %v456 = vunpack.c.l.b16 %v424
  %v457 = vunpack.c.l.b16 %v425
  %v458 = vunpack.c.l.b16 %v426
  %v459 = vunpack.c.l.b16 %v427
  %v460 = vunpack.c.l.b16 %v428
  %v461 = vunpack.c.l.b16 %v429
  %v462 = vunpack.c.l.b16 %v430
  %v463 = vunpack.c.l.b16 %v431
  %v464 = vunpack.c.l.b16 %v432
  %v465 = vunpack.c.l.b16 %v433
  %v466 = vunpack.c.l.b16 %v434
  %v467 = vunpack.c.l.b16 %v435
  %v468 = vunpack.c.l.b16 %v436
  %v469 = vunpack.c.l.b16 %v437
  %v470 = vunpack.c.l.b16 %v438
  %v471 = vpack.c.b16 %v456, %v455
  %v472 = vpack.c.b16 %v458, %v457
  %v473 = vpack.c.b16 %v460, %v459
  %v474 = vpack.c.b16 %v462, %v461
  %v475 = vpack.c.b16 %v464, %v463
  %v476 = vpack.c.b16 %v466, %v465
  %v477 = vpack.c.b16 %v468, %v467
  %v478 = vpack.c.b16 %v470, %v469
  %487 = vmatprep.subr.bf16.mxu0 0
  %488 = vmatpush1.bf16.msra.mxu0 %v471
  %489 = vmatprep.subr.bf16.mxu0 0
  %490 = vmatpush1.bf16.msra.mxu0 %v472
  %491 = vmatprep.subr.bf16.mxu0 0
  %492 = vmatpush1.bf16.msra.mxu0 %v473
  %493 = vmatprep.subr.bf16.mxu0 0
  %494 = vmatpush1.bf16.msra.mxu0 %v474
  %495 = vmatprep.subr.bf16.mxu0 0
  %496 = vmatpush1.bf16.msra.mxu0 %v475
  %497 = vmatprep.subr.bf16.mxu0 0
  %498 = vmatpush1.bf16.msra.mxu0 %v476
  %499 = vmatprep.subr.bf16.mxu0 0
  %500 = vmatpush1.bf16.msra.mxu0 %v477
  %501 = vmatprep.subr.bf16.mxu0 0
  %502 = vmatpush1.bf16.msra.mxu0 %v478
  %503 = vmatprep.subr.bf16.mxu0 0
  %504 = vmatpush1.bf16.msra.mxu0 0
  %505 = vmatprep.subr.bf16.mxu0 0
  %506 = vmatpush1.bf16.msra.mxu0 0
  %507 = vmatprep.subr.bf16.mxu0 0
  %508 = vmatpush1.bf16.msra.mxu0 0
  %509 = vmatprep.subr.bf16.mxu0 0
  %510 = vmatpush1.bf16.msra.mxu0 0
  %511 = vmatprep.subr.bf16.mxu0 0
  %512 = vmatpush1.bf16.msra.mxu0 0
  %513 = vmatprep.subr.bf16.mxu0 0
  %514 = vmatpush1.bf16.msra.mxu0 0
  %515 = vmatprep.subr.bf16.mxu0 0
  %516 = vmatpush1.bf16.msra.mxu0 0
  %517 = vmatprep.subr.bf16.mxu0 0
  %518 = vmatpush1.bf16.msra.mxu0 0
  %519 = vmatprep.mubr.bf16.mxu0 0
  %520 = vmatmul.mubr.bf16.gmra.mrb[0].mxu0 0
  %v521 = vpop.f32.mrb[0].mxu0
  %v522 = vadd.f32 0.0, %v521
  %v523 = vpop.f32.mrb[0].mxu0
  %v524 = vpop.f32.mrb[0].mxu0
  %v525 = vpop.f32.mrb[0].mxu0
  %526 = vdwg.mxu0
  %v543 = vunpack.c.l.b16 %v407
  %v544 = vunpack.c.l.b16 %v408
  %v545 = vunpack.c.l.b16 %v409
  %v546 = vunpack.c.l.b16 %v410
  %v547 = vunpack.c.l.b16 %v411
  %v548 = vunpack.c.l.b16 %v412
  %v549 = vunpack.c.l.b16 %v413
  %v550 = vunpack.c.l.b16 %v414
  %v551 = vunpack.c.l.b16 %v415
  %v552 = vunpack.c.l.b16 %v416
  %v553 = vunpack.c.l.b16 %v417
  %v554 = vunpack.c.l.b16 %v418
  %v555 = vunpack.c.l.b16 %v419
  %v556 = vunpack.c.l.b16 %v420
  %v557 = vunpack.c.l.b16 %v421
  %v558 = vunpack.c.l.b16 %v422
  %v559 = vpack.c.b16 %v544, %v543
  %v560 = vpack.c.b16 %v546, %v545
  %v561 = vpack.c.b16 %v548, %v547
  %v562 = vpack.c.b16 %v550, %v549
  %v563 = vpack.c.b16 %v552, %v551
  %v564 = vpack.c.b16 %v554, %v553
  %v565 = vpack.c.b16 %v556, %v555
  %v566 = vpack.c.b16 %v558, %v557
  %575 = vmatprep.subr.bf16.mxu0 0
  %576 = vmatpush1.bf16.msra.mxu0 %v559
  %577 = vmatprep.subr.bf16.mxu0 0
  %578 = vmatpush1.bf16.msra.mxu0 %v560
  %579 = vmatprep.subr.bf16.mxu0 0
  %580 = vmatpush1.bf16.msra.mxu0 %v561
  %581 = vmatprep.subr.bf16.mxu0 0
  %582 = vmatpush1.bf16.msra.mxu0 %v562
  %583 = vmatprep.subr.bf16.mxu0 0
  %584 = vmatpush1.bf16.msra.mxu0 %v563
  %585 = vmatprep.subr.bf16.mxu0 0
  %586 = vmatpush1.bf16.msra.mxu0 %v564
  %587 = vmatprep.subr.bf16.mxu0 0
  %588 = vmatpush1.bf16.msra.mxu0 %v565
  %589 = vmatprep.subr.bf16.mxu0 0
  %590 = vmatpush1.bf16.msra.mxu0 %v566
  %591 = vmatprep.subr.bf16.mxu0 0
  %592 = vmatpush1.bf16.msra.mxu0 0
  %593 = vmatprep.subr.bf16.mxu0 0
  %594 = vmatpush1.bf16.msra.mxu0 0
  %595 = vmatprep.subr.bf16.mxu0 0
  %596 = vmatpush1.bf16.msra.mxu0 0
  %597 = vmatprep.subr.bf16.mxu0 0
  %598 = vmatpush1.bf16.msra.mxu0 0
  %599 = vmatprep.subr.bf16.mxu0 0
  %600 = vmatpush1.bf16.msra.mxu0 0
  %601 = vmatprep.subr.bf16.mxu0 0
  %602 = vmatpush1.bf16.msra.mxu0 0
  %603 = vmatprep.subr.bf16.mxu0 0
  %604 = vmatpush1.bf16.msra.mxu0 0
  %605 = vmatprep.subr.bf16.mxu0 0
  %606 = vmatpush1.bf16.msra.mxu0 0
  %607 = vmatprep.mubr.bf16.mxu0 0
  %608 = vmatmul.mubr.bf16.gmra.mrb[0].mxu0 %v362
  %v609 = vpop.f32.mrb[0].mxu0
  %v610 = vadd.f32 %v522, %v609
  %v611 = vpop.f32.mrb[0].mxu0
  %v612 = vpop.f32.mrb[0].mxu0
  %v613 = vpop.f32.mrb[0].mxu0
  %614 = vdwg.mxu0
  %v615 = vadd.f32 %v610, %v217
  %v616 = vmax.f32 %v615, 0.0
  %v617 = vpack.c.bf16 %v616, %v616
  %618 = vmatprep.subr.bf16.mxu0 0
  %619 = vmatpush1.bf16.msra.mxu0 %v303
  %620 = vmatprep.subr.bf16.mxu0 0
  %621 = vmatpush1.bf16.msra.mxu0 %v304
  %622 = vmatprep.subr.bf16.mxu0 0
  %623 = vmatpush1.bf16.msra.mxu0 %v305
  %624 = vmatprep.subr.bf16.mxu0 0
  %625 = vmatpush1.bf16.msra.mxu0 %v306
  %626 = vmatprep.subr.bf16.mxu0 0
  %627 = vmatpush1.bf16.msra.mxu0 %v307
  %628 = vmatprep.subr.bf16.mxu0 0
  %629 = vmatpush1.bf16.msra.mxu0 %v308
  %630 = vmatprep.subr.bf16.mxu0 0
  %631 = vmatpush1.bf16.msra.mxu0 %v309
  %632 = vmatprep.subr.bf16.mxu0 0
  %633 = vmatpush1.bf16.msra.mxu0 %v310
  %634 = vmatprep.subr.bf16.mxu0 0
  %635 = vmatpush1.bf16.msra.mxu0 0
  %636 = vmatprep.subr.bf16.mxu0 0
  %637 = vmatpush1.bf16.msra.mxu0 0
  %638 = vmatprep.subr.bf16.mxu0 0
  %639 = vmatpush1.bf16.msra.mxu0 0
  %640 = vmatprep.subr.bf16.mxu0 0
  %641 = vmatpush1.bf16.msra.mxu0 0
  %642 = vmatprep.subr.bf16.mxu0 0
  %643 = vmatpush1.bf16.msra.mxu0 0
  %644 = vmatprep.subr.bf16.mxu0 0
  %645 = vmatpush1.bf16.msra.mxu0 0
  %646 = vmatprep.subr.bf16.mxu0 0
  %647 = vmatpush1.bf16.msra.mxu0 0
  %648 = vmatprep.subr.bf16.mxu0 0
  %649 = vmatpush1.bf16.msra.mxu0 0
  %650 = vmatprep.mubr.bf16.mxu0 0
  %651 = vmatmul.mubr.bf16.gmra.mrb[0].mxu0 %v406
  %v652 = vpop.f32.mrb[0].mxu0
  %v653 = vadd.f32 0.0, %v652
  %v654 = vpop.f32.mrb[0].mxu0
  %v655 = vpop.f32.mrb[0].mxu0
  %v656 = vpop.f32.mrb[0].mxu0
  %657 = vdwg.mxu0
  %v658 = vadd.f32 %v179, %v653
  %v659 = vadd.f32 %v658, %v208
  %v660 = vmax.f32 %v659, 0.0
  %v661 = vpack.c.bf16 %v660, %v660
  %662 = vmatprep.subr.bf16.mxu0 0
  %663 = vmatpush1.bf16.msra.mxu0 %v471
  %664 = vmatprep.subr.bf16.mxu0 0
  %665 = vmatpush1.bf16.msra.mxu0 %v472
  %666 = vmatprep.subr.bf16.mxu0 0
  %667 = vmatpush1.bf16.msra.mxu0 %v473
  %668 = vmatprep.subr.bf16.mxu0 0
  %669 = vmatpush1.bf16.msra.mxu0 %v474
  %670 = vmatprep.subr.bf16.mxu0 0
  %671 = vmatpush1.bf16.msra.mxu0 %v475
  %672 = vmatprep.subr.bf16.mxu0 0
  %673 = vmatpush1.bf16.msra.mxu0 %v476
  %674 = vmatprep.subr.bf16.mxu0 0
  %675 = vmatpush1.bf16.msra.mxu0 %v477
  %676 = vmatprep.subr.bf16.mxu0 0
  %677 = vmatpush1.bf16.msra.mxu0 %v478
  %678 = vmatprep.subr.bf16.mxu0 0
  %679 = vmatpush1.bf16.msra.mxu0 0
  %680 = vmatprep.subr.bf16.mxu0 0
  %681 = vmatpush1.bf16.msra.mxu0 0
  %682 = vmatprep.subr.bf16.mxu0 0
  %683 = vmatpush1.bf16.msra.mxu0 0
  %684 = vmatprep.subr.bf16.mxu0 0
  %685 = vmatpush1.bf16.msra.mxu0 0
  %686 = vmatprep.subr.bf16.mxu0 0
  %687 = vmatpush1.bf16.msra.mxu0 0
  %688 = vmatprep.subr.bf16.mxu0 0
  %689 = vmatpush1.bf16.msra.mxu0 0
  %690 = vmatprep.subr.bf16.mxu0 0
  %691 = vmatpush1.bf16.msra.mxu0 0
  %692 = vmatprep.subr.bf16.mxu0 0
  %693 = vmatpush1.bf16.msra.mxu0 0
  %694 = vmatprep.mubr.bf16.mxu0 0
  %695 = vmatmul.mubr.bf16.gmra.mrb[0].mxu0 %v617
  %v696 = vpop.f32.mrb[0].mxu0
  %v697 = vadd.f32 0.0, %v696
  %v698 = vpop.f32.mrb[0].mxu0
  %v699 = vpop.f32.mrb[0].mxu0
  %v700 = vpop.f32.mrb[0].mxu0
  %701 = vdwg.mxu0
  %702 = vmatprep.subr.bf16.mxu0 0
  %703 = vmatpush1.bf16.msra.mxu0 %v559
  %704 = vmatprep.subr.bf16.mxu0 0
  %705 = vmatpush1.bf16.msra.mxu0 %v560
  %706 = vmatprep.subr.bf16.mxu0 0
  %707 = vmatpush1.bf16.msra.mxu0 %v561
  %708 = vmatprep.subr.bf16.mxu0 0
  %709 = vmatpush1.bf16.msra.mxu0 %v562
  %710 = vmatprep.subr.bf16.mxu0 0
  %711 = vmatpush1.bf16.msra.mxu0 %v563
  %712 = vmatprep.subr.bf16.mxu0 0
  %713 = vmatpush1.bf16.msra.mxu0 %v564
  %714 = vmatprep.subr.bf16.mxu0 0
  %715 = vmatpush1.bf16.msra.mxu0 %v565
  %716 = vmatprep.subr.bf16.mxu0 0
  %717 = vmatpush1.bf16.msra.mxu0 %v566
  %718 = vmatprep.subr.bf16.mxu0 0
  %719 = vmatpush1.bf16.msra.mxu0 0
  %720 = vmatprep.subr.bf16.mxu0 0
  %721 = vmatpush1.bf16.msra.mxu0 0
  %722 = vmatprep.subr.bf16.mxu0 0
  %723 = vmatpush1.bf16.msra.mxu0 0
  %724 = vmatprep.subr.bf16.mxu0 0
  %725 = vmatpush1.bf16.msra.mxu0 0
  %726 = vmatprep.subr.bf16.mxu0 0
  %727 = vmatpush1.bf16.msra.mxu0 0
  %728 = vmatprep.subr.bf16.mxu0 0
  %729 = vmatpush1.bf16.msra.mxu0 0
  %730 = vmatprep.subr.bf16.mxu0 0
  %731 = vmatpush1.bf16.msra.mxu0 0
  %732 = vmatprep.subr.bf16.mxu0 0
  %733 = vmatpush1.bf16.msra.mxu0 0
  %734 = vmatprep.mubr.bf16.mxu0 0
  %735 = vmatmul.mubr.bf16.gmra.mrb[0].mxu0 %v406
  %v736 = vpop.f32.mrb[0].mxu0
  %v737 = vadd.f32 %v697, %v736
  %v738 = vpop.f32.mrb[0].mxu0
  %v739 = vpop.f32.mrb[0].mxu0
  %v740 = vpop.f32.mrb[0].mxu0
  %741 = vdwg.mxu0
  %v742 = vadd.f32 %v737, %v217
  %v743 = vmax.f32 %v742, 0.0
  %v744 = vpack.c.bf16 %v743, %v743
  %v745 = vld [vmem:[%s9] sm:$0xf]
  %v746 = vld [vmem:[%s9 + $0x4] sm:$0xf]
  %v747 = vld [vmem:[%s9 + $0x8] sm:$0xf]
  %v748 = vld [vmem:[%s9 + $0xc] sm:$0xf]
  %v749 = vld [vmem:[%s9 + $0x10] sm:$0xf]
  %v750 = vld [vmem:[%s9 + $0x14] sm:$0xf]
  %v751 = vld [vmem:[%s9 + $0x18] sm:$0xf]
  %v752 = vld [vmem:[%s9 + $0x1c] sm:$0xf]
  %v753 = vld [vmem:[%s9 + $0x20] sm:$0xf]
  %v754 = vld [vmem:[%s9 + $0x24] sm:$0xf]
  %v755 = vld [vmem:[%s9 + $0x28] sm:$0xf]
  %v756 = vld [vmem:[%s9 + $0x2c] sm:$0xf]
  %v757 = vld [vmem:[%s9 + $0x30] sm:$0xf]
  %v758 = vld [vmem:[%s9 + $0x34] sm:$0xf]
  %v759 = vld [vmem:[%s9 + $0x38] sm:$0xf]
  %v760 = vld [vmem:[%s9 + $0x3c] sm:$0xf]
  %v761 = vld [vmem:[%s10] sm:$0xf]
  %v762 = vld [vmem:[%s10 + $0x4] sm:$0xf]
  %v763 = vld [vmem:[%s10 + $0x8] sm:$0xf]
  %v764 = vld [vmem:[%s10 + $0xc] sm:$0xf]
  %v765 = vld [vmem:[%s10 + $0x10] sm:$0xf]
  %v766 = vld [vmem:[%s10 + $0x14] sm:$0xf]
  %v767 = vld [vmem:[%s10 + $0x18] sm:$0xf]
  %v768 = vld [vmem:[%s10 + $0x1c] sm:$0xf]
  %v769 = vld [vmem:[%s10 + $0x20] sm:$0xf]
  %v770 = vld [vmem:[%s10 + $0x24] sm:$0xf]
  %v771 = vld [vmem:[%s10 + $0x28] sm:$0xf]
  %v772 = vld [vmem:[%s10 + $0x2c] sm:$0xf]
  %v773 = vld [vmem:[%s10 + $0x30] sm:$0xf]
  %v774 = vld [vmem:[%s10 + $0x34] sm:$0xf]
  %v775 = vld [vmem:[%s10 + $0x38] sm:$0xf]
  %v776 = vld [vmem:[%s10 + $0x3c] sm:$0xf]
  %v793 = vunpack.c.l.b16 %v761
  %v794 = vunpack.c.l.b16 %v762
  %v795 = vunpack.c.l.b16 %v763
  %v796 = vunpack.c.l.b16 %v764
  %v797 = vunpack.c.l.b16 %v765
  %v798 = vunpack.c.l.b16 %v766
  %v799 = vunpack.c.l.b16 %v767
  %v800 = vunpack.c.l.b16 %v768
  %v801 = vunpack.c.l.b16 %v769
  %v802 = vunpack.c.l.b16 %v770
  %v803 = vunpack.c.l.b16 %v771
  %v804 = vunpack.c.l.b16 %v772
  %v805 = vunpack.c.l.b16 %v773
  %v806 = vunpack.c.l.b16 %v774
  %v807 = vunpack.c.l.b16 %v775
  %v808 = vunpack.c.l.b16 %v776
  %v809 = vpack.c.b16 %v794, %v793
  %v810 = vpack.c.b16 %v796, %v795
  %v811 = vpack.c.b16 %v798, %v797
  %v812 = vpack.c.b16 %v800, %v799
  %v813 = vpack.c.b16 %v802, %v801
  %v814 = vpack.c.b16 %v804, %v803
  %v815 = vpack.c.b16 %v806, %v805
  %v816 = vpack.c.b16 %v808, %v807
  %825 = vmatprep.subr.bf16.mxu0 0
  %826 = vmatpush1.bf16.msra.mxu0 %v809
  %827 = vmatprep.subr.bf16.mxu0 0
  %828 = vmatpush1.bf16.msra.mxu0 %v810
  %829 = vmatprep.subr.bf16.mxu0 0
  %830 = vmatpush1.bf16.msra.mxu0 %v811
  %831 = vmatprep.subr.bf16.mxu0 0
  %832 = vmatpush1.bf16.msra.mxu0 %v812
  %833 = vmatprep.subr.bf16.mxu0 0
  %834 = vmatpush1.bf16.msra.mxu0 %v813
  %835 = vmatprep.subr.bf16.mxu0 0
  %836 = vmatpush1.bf16.msra.mxu0 %v814
  %837 = vmatprep.subr.bf16.mxu0 0
  %838 = vmatpush1.bf16.msra.mxu0 %v815
  %839 = vmatprep.subr.bf16.mxu0 0
  %840 = vmatpush1.bf16.msra.mxu0 %v816
  %841 = vmatprep.subr.bf16.mxu0 0
  %842 = vmatpush1.bf16.msra.mxu0 0
  %843 = vmatprep.subr.bf16.mxu0 0
  %844 = vmatpush1.bf16.msra.mxu0 0
  %845 = vmatprep.subr.bf16.mxu0 0
  %846 = vmatpush1.bf16.msra.mxu0 0
  %847 = vmatprep.subr.bf16.mxu0 0
  %848 = vmatpush1.bf16.msra.mxu0 0
  %849 = vmatprep.subr.bf16.mxu0 0
  %850 = vmatpush1.bf16.msra.mxu0 0
  %851 = vmatprep.subr.bf16.mxu0 0
  %852 = vmatpush1.bf16.msra.mxu0 0
  %853 = vmatprep.subr.bf16.mxu0 0
  %854 = vmatpush1.bf16.msra.mxu0 0
  %855 = vmatprep.subr.bf16.mxu0 0
  %856 = vmatpush1.bf16.msra.mxu0 0
  %857 = vmatprep.mubr.bf16.mxu0 0
  %858 = vmatmul.mubr.bf16.gmra.mrb[0].mxu0 0
  %v859 = vpop.f32.mrb[0].mxu0
  %v860 = vadd.f32 0.0, %v859
  %v861 = vpop.f32.mrb[0].mxu0
  %v862 = vpop.f32.mrb[0].mxu0
  %v863 = vpop.f32.mrb[0].mxu0
  %864 = vdwg.mxu0
  %v881 = vunpack.c.l.b16 %v745
  %v882 = vunpack.c.l.b16 %v746
  %v883 = vunpack.c.l.b16 %v747
  %v884 = vunpack.c.l.b16 %v748
  %v885 = vunpack.c.l.b16 %v749
  %v886 = vunpack.c.l.b16 %v750
  %v887 = vunpack.c.l.b16 %v751
  %v888 = vunpack.c.l.b16 %v752
  %v889 = vunpack.c.l.b16 %v753
  %v890 = vunpack.c.l.b16 %v754
  %v891 = vunpack.c.l.b16 %v755
  %v892 = vunpack.c.l.b16 %v756
  %v893 = vunpack.c.l.b16 %v757
  %v894 = vunpack.c.l.b16 %v758
  %v895 = vunpack.c.l.b16 %v759
  %v896 = vunpack.c.l.b16 %v760
  %v897 = vpack.c.b16 %v882, %v881
  %v898 = vpack.c.b16 %v884, %v883
  %v899 = vpack.c.b16 %v886, %v885
  %v900 = vpack.c.b16 %v888, %v887
  %v901 = vpack.c.b16 %v890, %v889
  %v902 = vpack.c.b16 %v892, %v891
  %v903 = vpack.c.b16 %v894, %v893
  %v904 = vpack.c.b16 %v896, %v895
  %913 = vmatprep.subr.bf16.mxu0 0
  %914 = vmatpush1.bf16.msra.mxu0 %v897
  %915 = vmatprep.subr.bf16.mxu0 0
  %916 = vmatpush1.bf16.msra.mxu0 %v898
  %917 = vmatprep.subr.bf16.mxu0 0
  %918 = vmatpush1.bf16.msra.mxu0 %v899
  %919 = vmatprep.subr.bf16.mxu0 0
  %920 = vmatpush1.bf16.msra.mxu0 %v900
  %921 = vmatprep.subr.bf16.mxu0 0
  %922 = vmatpush1.bf16.msra.mxu0 %v901
  %923 = vmatprep.subr.bf16.mxu0 0
  %924 = vmatpush1.bf16.msra.mxu0 %v902
  %925 = vmatprep.subr.bf16.mxu0 0
  %926 = vmatpush1.bf16.msra.mxu0 %v903
  %927 = vmatprep.subr.bf16.mxu0 0
  %928 = vmatpush1.bf16.msra.mxu0 %v904
  %929 = vmatprep.subr.bf16.mxu0 0
  %930 = vmatpush1.bf16.msra.mxu0 0
  %931 = vmatprep.subr.bf16.mxu0 0
  %932 = vmatpush1.bf16.msra.mxu0 0
  %933 = vmatprep.subr.bf16.mxu0 0
  %934 = vmatpush1.bf16.msra.mxu0 0
  %935 = vmatprep.subr.bf16.mxu0 0
  %936 = vmatpush1.bf16.msra.mxu0 0
  %937 = vmatprep.subr.bf16.mxu0 0
  %938 = vmatpush1.bf16.msra.mxu0 0
  %939 = vmatprep.subr.bf16.mxu0 0
  %940 = vmatpush1.bf16.msra.mxu0 0
  %941 = vmatprep.subr.bf16.mxu0 0
  %942 = vmatpush1.bf16.msra.mxu0 0
  %943 = vmatprep.subr.bf16.mxu0 0
  %944 = vmatpush1.bf16.msra.mxu0 0
  %945 = vmatprep.mubr.bf16.mxu0 0
  %946 = vmatmul.mubr.bf16.gmra.mrb[0].mxu0 %v617
  %v947 = vpop.f32.mrb[0].mxu0
  %v948 = vadd.f32 %v860, %v947
  %v949 = vpop.f32.mrb[0].mxu0
  %v950 = vpop.f32.mrb[0].mxu0
  %v951 = vpop.f32.mrb[0].mxu0
  %952 = vdwg.mxu0
  %v953 = vadd.f32 %v948, %v226
  %v954 = vmax.f32 %v953, 0.0
  %v955 = vpack.c.bf16 %v954, %v954
  %956 = vmatprep.subr.bf16.mxu0 0
  %957 = vmatpush1.bf16.msra.mxu0 %v303
  %958 = vmatprep.subr.bf16.mxu0 0
  %959 = vmatpush1.bf16.msra.mxu0 %v304
  %960 = vmatprep.subr.bf16.mxu0 0
  %961 = vmatpush1.bf16.msra.mxu0 %v305
  %962 = vmatprep.subr.bf16.mxu0 0
  %963 = vmatpush1.bf16.msra.mxu0 %v306
  %964 = vmatprep.subr.bf16.mxu0 0
  %965 = vmatpush1.bf16.msra.mxu0 %v307
  %966 = vmatprep.subr.bf16.mxu0 0
  %967 = vmatpush1.bf16.msra.mxu0 %v308
  %968 = vmatprep.subr.bf16.mxu0 0
  %969 = vmatpush1.bf16.msra.mxu0 %v309
  %970 = vmatprep.subr.bf16.mxu0 0
  %971 = vmatpush1.bf16.msra.mxu0 %v310
  %972 = vmatprep.subr.bf16.mxu0 0
  %973 = vmatpush1.bf16.msra.mxu0 0
  %974 = vmatprep.subr.bf16.mxu0 0
  %975 = vmatpush1.bf16.msra.mxu0 0
  %976 = vmatprep.subr.bf16.mxu0 0
  %977 = vmatpush1.bf16.msra.mxu0 0
  %978 = vmatprep.subr.bf16.mxu0 0
  %979 = vmatpush1.bf16.msra.mxu0 0
  %980 = vmatprep.subr.bf16.mxu0 0
  %981 = vmatpush1.bf16.msra.mxu0 0
  %982 = vmatprep.subr.bf16.mxu0 0
  %983 = vmatpush1.bf16.msra.mxu0 0
  %984 = vmatprep.subr.bf16.mxu0 0
  %985 = vmatpush1.bf16.msra.mxu0 0
  %986 = vmatprep.subr.bf16.mxu0 0
  %987 = vmatpush1.bf16.msra.mxu0 0
  %988 = vmatprep.mubr.bf16.mxu0 0
  %989 = vmatmul.mubr.bf16.gmra.mrb[0].mxu0 %v661
  %v990 = vpop.f32.mrb[0].mxu0
  %v991 = vadd.f32 0.0, %v990
  %v992 = vpop.f32.mrb[0].mxu0
  %v993 = vpop.f32.mrb[0].mxu0
  %v994 = vpop.f32.mrb[0].mxu0
  %995 = vdwg.mxu0
  %v996 = vadd.f32 %v182, %v991
  %v997 = vadd.f32 %v996, %v208
  %v998 = vmax.f32 %v997, 0.0
  %v999 = vpack.c.bf16 %v998, %v998
  %1000 = vmatprep.subr.bf16.mxu0 0
  %1001 = vmatpush1.bf16.msra.mxu0 %v471
  %1002 = vmatprep.subr.bf16.mxu0 0
  %1003 = vmatpush1.bf16.msra.mxu0 %v472
  %1004 = vmatprep.subr.bf16.mxu0 0
  %1005 = vmatpush1.bf16.msra.mxu0 %v473
  %1006 = vmatprep.subr.bf16.mxu0 0
  %1007 = vmatpush1.bf16.msra.mxu0 %v474
  %1008 = vmatprep.subr.bf16.mxu0 0
  %1009 = vmatpush1.bf16.msra.mxu0 %v475
  %1010 = vmatprep.subr.bf16.mxu0 0
  %1011 = vmatpush1.bf16.msra.mxu0 %v476
  %1012 = vmatprep.subr.bf16.mxu0 0
  %1013 = vmatpush1.bf16.msra.mxu0 %v477
  %1014 = vmatprep.subr.bf16.mxu0 0
  %1015 = vmatpush1.bf16.msra.mxu0 %v478
  %1016 = vmatprep.subr.bf16.mxu0 0
  %1017 = vmatpush1.bf16.msra.mxu0 0
  %1018 = vmatprep.subr.bf16.mxu0 0
  %1019 = vmatpush1.bf16.msra.mxu0 0
  %1020 = vmatprep.subr.bf16.mxu0 0
  %1021 = vmatpush1.bf16.msra.mxu0 0
  %1022 = vmatprep.subr.bf16.mxu0 0
  %1023 = vmatpush1.bf16.msra.mxu0 0
  %1024 = vmatprep.subr.bf16.mxu0 0
  %1025 = vmatpush1.bf16.msra.mxu0 0
  %1026 = vmatprep.subr.bf16.mxu0 0
  %1027 = vmatpush1.bf16.msra.mxu0 0
  %1028 = vmatprep.subr.bf16.mxu0 0
  %1029 = vmatpush1.bf16.msra.mxu0 0
  %1030 = vmatprep.subr.bf16.mxu0 0
  %1031 = vmatpush1.bf16.msra.mxu0 0
  %1032 = vmatprep.mubr.bf16.mxu0 0
  %1033 = vmatmul.mubr.bf16.gmra.mrb[0].mxu0 %v744
  %v1034 = vpop.f32.mrb[0].mxu0
  %v1035 = vadd.f32 0.0, %v1034
  %v1036 = vpop.f32.mrb[0].mxu0
  %v1037 = vpop.f32.mrb[0].mxu0
  %v1038 = vpop.f32.mrb[0].mxu0
  %1039 = vdwg.mxu0
  %1040 = vmatprep.subr.bf16.mxu0 0
  %1041 = vmatpush1.bf16.msra.mxu0 %v559
  %1042 = vmatprep.subr.bf16.mxu0 0
  %1043 = vmatpush1.bf16.msra.mxu0 %v560
  %1044 = vmatprep.subr.bf16.mxu0 0
  %1045 = vmatpush1.bf16.msra.mxu0 %v561
  %1046 = vmatprep.subr.bf16.mxu0 0
  %1047 = vmatpush1.bf16.msra.mxu0 %v562
  %1048 = vmatprep.subr.bf16.mxu0 0
  %1049 = vmatpush1.bf16.msra.mxu0 %v563
  %1050 = vmatprep.subr.bf16.mxu0 0
  %1051 = vmatpush1.bf16.msra.mxu0 %v564
  %1052 = vmatprep.subr.bf16.mxu0 0
  %1053 = vmatpush1.bf16.msra.mxu0 %v565
  %1054 = vmatprep.subr.bf16.mxu0 0
  %1055 = vmatpush1.bf16.msra.mxu0 %v566
  %1056 = vmatprep.subr.bf16.mxu0 0
  %1057 = vmatpush1.bf16.msra.mxu0 0
  %1058 = vmatprep.subr.bf16.mxu0 0
  %1059 = vmatpush1.bf16.msra.mxu0 0
  %1060 = vmatprep.subr.bf16.mxu0 0
  %1061 = vmatpush1.bf16.msra.mxu0 0
  %1062 = vmatprep.subr.bf16.mxu0 0
  %1063 = vmatpush1.bf16.msra.mxu0 0
  %1064 = vmatprep.subr.bf16.mxu0 0
  %1065 = vmatpush1.bf16.msra.mxu0 0
  %1066 = vmatprep.subr.bf16.mxu0 0
  %1067 = vmatpush1.bf16.msra.mxu0 0
  %1068 = vmatprep.subr.bf16.mxu0 0
  %1069 = vmatpush1.bf16.msra.mxu0 0
  %1070 = vmatprep.subr.bf16.mxu0 0
  %1071 = vmatpush1.bf16.msra.mxu0 0
  %1072 = vmatprep.mubr.bf16.mxu0 0
  %1073 = vmatmul.mubr.bf16.gmra.mrb[0].mxu0 %v661
  %v1074 = vpop.f32.mrb[0].mxu0
  %v1075 = vadd.f32 %v1035, %v1074
  %v1076 = vpop.f32.mrb[0].mxu0
  %v1077 = vpop.f32.mrb[0].mxu0
  %v1078 = vpop.f32.mrb[0].mxu0
  %1079 = vdwg.mxu0
  %v1080 = vadd.f32 %v1075, %v217
  %v1081 = vmax.f32 %v1080, 0.0
  %v1082 = vpack.c.bf16 %v1081, %v1081
  %1083 = vmatprep.subr.bf16.mxu0 0
  %1084 = vmatpush1.bf16.msra.mxu0 %v809
  %1085 = vmatprep.subr.bf16.mxu0 0
  %1086 = vmatpush1.bf16.msra.mxu0 %v810
  %1087 = vmatprep.subr.bf16.mxu0 0
  %1088 = vmatpush1.bf16.msra.mxu0 %v811
  %1089 = vmatprep.subr.bf16.mxu0 0
  %1090 = vmatpush1.bf16.msra.mxu0 %v812
  %1091 = vmatprep.subr.bf16.mxu0 0
  %1092 = vmatpush1.bf16.msra.mxu0 %v813
  %1093 = vmatprep.subr.bf16.mxu0 0
  %1094 = vmatpush1.bf16.msra.mxu0 %v814
  %1095 = vmatprep.subr.bf16.mxu0 0
  %1096 = vmatpush1.bf16.msra.mxu0 %v815
  %1097 = vmatprep.subr.bf16.mxu0 0
  %1098 = vmatpush1.bf16.msra.mxu0 %v816
  %1099 = vmatprep.subr.bf16.mxu0 0
  %1100 = vmatpush1.bf16.msra.mxu0 0
  %1101 = vmatprep.subr.bf16.mxu0 0
  %1102 = vmatpush1.bf16.msra.mxu0 0
  %1103 = vmatprep.subr.bf16.mxu0 0
  %1104 = vmatpush1.bf16.msra.mxu0 0
  %1105 = vmatprep.subr.bf16.mxu0 0
  %1106 = vmatpush1.bf16.msra.mxu0 0
  %1107 = vmatprep.subr.bf16.mxu0 0
  %1108 = vmatpush1.bf16.msra.mxu0 0
  %1109 = vmatprep.subr.bf16.mxu0 0
  %1110 = vmatpush1.bf16.msra.mxu0 0
  %1111 = vmatprep.subr.bf16.mxu0 0
  %1112 = vmatpush1.bf16.msra.mxu0 0
  %1113 = vmatprep.subr.bf16.mxu0 0
  %1114 = vmatpush1.bf16.msra.mxu0 0
  %1115 = vmatprep.mubr.bf16.mxu0 0
  %1116 = vmatmul.mubr.bf16.gmra.mrb[0].mxu0 %v955
  %v1117 = vpop.f32.mrb[0].mxu0
  %v1118 = vadd.f32 0.0, %v1117
  %v1119 = vpop.f32.mrb[0].mxu0
  %v1120 = vpop.f32.mrb[0].mxu0
  %v1121 = vpop.f32.mrb[0].mxu0
  %1122 = vdwg.mxu0
  %1123 = vmatprep.subr.bf16.mxu0 0
  %1124 = vmatpush1.bf16.msra.mxu0 %v897
  %1125 = vmatprep.subr.bf16.mxu0 0
  %1126 = vmatpush1.bf16.msra.mxu0 %v898
  %1127 = vmatprep.subr.bf16.mxu0 0
  %1128 = vmatpush1.bf16.msra.mxu0 %v899
  %1129 = vmatprep.subr.bf16.mxu0 0
  %1130 = vmatpush1.bf16.msra.mxu0 %v900
  %1131 = vmatprep.subr.bf16.mxu0 0
  %1132 = vmatpush1.bf16.msra.mxu0 %v901
  %1133 = vmatprep.subr.bf16.mxu0 0
  %1134 = vmatpush1.bf16.msra.mxu0 %v902
  %1135 = vmatprep.subr.bf16.mxu0 0
  %1136 = vmatpush1.bf16.msra.mxu0 %v903
  %1137 = vmatprep.subr.bf16.mxu0 0
  %1138 = vmatpush1.bf16.msra.mxu0 %v904
  %1139 = vmatprep.subr.bf16.mxu0 0
  %1140 = vmatpush1.bf16.msra.mxu0 0
  %1141 = vmatprep.subr.bf16.mxu0 0
  %1142 = vmatpush1.bf16.msra.mxu0 0
  %1143 = vmatprep.subr.bf16.mxu0 0
  %1144 = vmatpush1.bf16.msra.mxu0 0
  %1145 = vmatprep.subr.bf16.mxu0 0
  %1146 = vmatpush1.bf16.msra.mxu0 0
  %1147 = vmatprep.subr.bf16.mxu0 0
  %1148 = vmatpush1.bf16.msra.mxu0 0
  %1149 = vmatprep.subr.bf16.mxu0 0
  %1150 = vmatpush1.bf16.msra.mxu0 0
  %1151 = vmatprep.subr.bf16.mxu0 0
  %1152 = vmatpush1.bf16.msra.mxu0 0
  %1153 = vmatprep.subr.bf16.mxu0 0
  %1154 = vmatpush1.bf16.msra.mxu0 0
  %1155 = vmatprep.mubr.bf16.mxu0 0
  %1156 = vmatmul.mubr.bf16.gmra.mrb[0].mxu0 %v744
  %v1157 = vpop.f32.mrb[0].mxu0
  %v1158 = vadd.f32 %v1118, %v1157
  %v1159 = vpop.f32.mrb[0].mxu0
  %v1160 = vpop.f32.mrb[0].mxu0
  %v1161 = vpop.f32.mrb[0].mxu0
  %1162 = vdwg.mxu0
  %v1163 = vadd.f32 %v1158, %v226
  %v1164 = vmax.f32 %v1163, 0.0
  %v1165 = vpack.c.bf16 %v1164, %v1164
  %v1166 = vld [vmem:[%s13] sm:$0xf]
  %v1167 = vld [vmem:[%s13 + $0x4] sm:$0xf]
  %v1168 = vld [vmem:[%s13 + $0x8] sm:$0xf]
  %v1169 = vld [vmem:[%s13 + $0xc] sm:$0xf]
  %v1170 = vld [vmem:[%s13 + $0x10] sm:$0xf]
  %v1171 = vld [vmem:[%s13 + $0x14] sm:$0xf]
  %v1172 = vld [vmem:[%s13 + $0x18] sm:$0xf]
  %v1173 = vld [vmem:[%s13 + $0x1c] sm:$0xf]
  %v1174 = vld [vmem:[%s13 + $0x20] sm:$0xf]
  %v1175 = vld [vmem:[%s13 + $0x24] sm:$0xf]
  %v1176 = vld [vmem:[%s13 + $0x28] sm:$0xf]
  %v1177 = vld [vmem:[%s13 + $0x2c] sm:$0xf]
  %v1178 = vld [vmem:[%s13 + $0x30] sm:$0xf]
  %v1179 = vld [vmem:[%s13 + $0x34] sm:$0xf]
  %v1180 = vld [vmem:[%s13 + $0x38] sm:$0xf]
  %v1181 = vld [vmem:[%s13 + $0x3c] sm:$0xf]
  %v1182 = vld [vmem:[%s14] sm:$0xf]
  %v1183 = vld [vmem:[%s14 + $0x4] sm:$0xf]
  %v1184 = vld [vmem:[%s14 + $0x8] sm:$0xf]
  %v1185 = vld [vmem:[%s14 + $0xc] sm:$0xf]
  %v1186 = vld [vmem:[%s14 + $0x10] sm:$0xf]
  %v1187 = vld [vmem:[%s14 + $0x14] sm:$0xf]
  %v1188 = vld [vmem:[%s14 + $0x18] sm:$0xf]
  %v1189 = vld [vmem:[%s14 + $0x1c] sm:$0xf]
  %v1190 = vld [vmem:[%s14 + $0x20] sm:$0xf]
  %v1191 = vld [vmem:[%s14 + $0x24] sm:$0xf]
  %v1192 = vld [vmem:[%s14 + $0x28] sm:$0xf]
  %v1193 = vld [vmem:[%s14 + $0x2c] sm:$0xf]
  %v1194 = vld [vmem:[%s14 + $0x30] sm:$0xf]
  %v1195 = vld [vmem:[%s14 + $0x34] sm:$0xf]
  %v1196 = vld [vmem:[%s14 + $0x38] sm:$0xf]
  %v1197 = vld [vmem:[%s14 + $0x3c] sm:$0xf]
  %v1214 = vunpack.c.l.b16 %v1182
  %v1215 = vunpack.c.l.b16 %v1183
  %v1216 = vunpack.c.l.b16 %v1184
  %v1217 = vunpack.c.l.b16 %v1185
  %v1218 = vunpack.c.l.b16 %v1186
  %v1219 = vunpack.c.l.b16 %v1187
  %v1220 = vunpack.c.l.b16 %v1188
  %v1221 = vunpack.c.l.b16 %v1189
  %v1222 = vunpack.c.l.b16 %v1190
  %v1223 = vunpack.c.l.b16 %v1191
  %v1224 = vunpack.c.l.b16 %v1192
  %v1225 = vunpack.c.l.b16 %v1193
  %v1226 = vunpack.c.l.b16 %v1194
  %v1227 = vunpack.c.l.b16 %v1195
  %v1228 = vunpack.c.l.b16 %v1196
  %v1229 = vunpack.c.l.b16 %v1197
  %v1230 = vpack.c.b16 %v1215, %v1214
  %v1231 = vpack.c.b16 %v1217, %v1216
  %v1232 = vpack.c.b16 %v1219, %v1218
  %v1233 = vpack.c.b16 %v1221, %v1220
  %v1234 = vpack.c.b16 %v1223, %v1222
  %v1235 = vpack.c.b16 %v1225, %v1224
  %v1236 = vpack.c.b16 %v1227, %v1226
  %v1237 = vpack.c.b16 %v1229, %v1228
  %1246 = vmatprep.subr.bf16.mxu0 0
  %1247 = vmatpush1.bf16.msra.mxu0 %v1230
  %1248 = vmatprep.subr.bf16.mxu0 0
  %1249 = vmatpush1.bf16.msra.mxu0 %v1231
  %1250 = vmatprep.subr.bf16.mxu0 0
  %1251 = vmatpush1.bf16.msra.mxu0 %v1232
  %1252 = vmatprep.subr.bf16.mxu0 0
  %1253 = vmatpush1.bf16.msra.mxu0 %v1233
  %1254 = vmatprep.subr.bf16.mxu0 0
  %1255 = vmatpush1.bf16.msra.mxu0 %v1234
  %1256 = vmatprep.subr.bf16.mxu0 0
  %1257 = vmatpush1.bf16.msra.mxu0 %v1235
  %1258 = vmatprep.subr.bf16.mxu0 0
  %1259 = vmatpush1.bf16.msra.mxu0 %v1236
  %1260 = vmatprep.subr.bf16.mxu0 0
  %1261 = vmatpush1.bf16.msra.mxu0 %v1237
  %1262 = vmatprep.subr.bf16.mxu0 0
  %1263 = vmatpush1.bf16.msra.mxu0 0
  %1264 = vmatprep.subr.bf16.mxu0 0
  %1265 = vmatpush1.bf16.msra.mxu0 0
  %1266 = vmatprep.subr.bf16.mxu0 0
  %1267 = vmatpush1.bf16.msra.mxu0 0
  %1268 = vmatprep.subr.bf16.mxu0 0
  %1269 = vmatpush1.bf16.msra.mxu0 0
  %1270 = vmatprep.subr.bf16.mxu0 0
  %1271 = vmatpush1.bf16.msra.mxu0 0
  %1272 = vmatprep.subr.bf16.mxu0 0
  %1273 = vmatpush1.bf16.msra.mxu0 0
  %1274 = vmatprep.subr.bf16.mxu0 0
  %1275 = vmatpush1.bf16.msra.mxu0 0
  %1276 = vmatprep.subr.bf16.mxu0 0
  %1277 = vmatpush1.bf16.msra.mxu0 0
  %1278 = vmatprep.mubr.bf16.mxu0 0
  %1279 = vmatmul.mubr.bf16.gmra.mrb[0].mxu0 0
  %v1280 = vpop.f32.mrb[0].mxu0
  %v1281 = vadd.f32 0.0, %v1280
  %v1282 = vpop.f32.mrb[0].mxu0
  %v1283 = vpop.f32.mrb[0].mxu0
  %v1284 = vpop.f32.mrb[0].mxu0
  %1285 = vdwg.mxu0
  %v1302 = vunpack.c.l.b16 %v1166
  %v1303 = vunpack.c.l.b16 %v1167
  %v1304 = vunpack.c.l.b16 %v1168
  %v1305 = vunpack.c.l.b16 %v1169
  %v1306 = vunpack.c.l.b16 %v1170
  %v1307 = vunpack.c.l.b16 %v1171
  %v1308 = vunpack.c.l.b16 %v1172
  %v1309 = vunpack.c.l.b16 %v1173
  %v1310 = vunpack.c.l.b16 %v1174
  %v1311 = vunpack.c.l.b16 %v1175
  %v1312 = vunpack.c.l.b16 %v1176
  %v1313 = vunpack.c.l.b16 %v1177
  %v1314 = vunpack.c.l.b16 %v1178
  %v1315 = vunpack.c.l.b16 %v1179
  %v1316 = vunpack.c.l.b16 %v1180
  %v1317 = vunpack.c.l.b16 %v1181
  %v1318 = vpack.c.b16 %v1303, %v1302
  %v1319 = vpack.c.b16 %v1305, %v1304
  %v1320 = vpack.c.b16 %v1307, %v1306
  %v1321 = vpack.c.b16 %v1309, %v1308
  %v1322 = vpack.c.b16 %v1311, %v1310
  %v1323 = vpack.c.b16 %v1313, %v1312
  %v1324 = vpack.c.b16 %v1315, %v1314
  %v1325 = vpack.c.b16 %v1317, %v1316
  %1334 = vmatprep.subr.bf16.mxu0 0
  %1335 = vmatpush1.bf16.msra.mxu0 %v1318
  %1336 = vmatprep.subr.bf16.mxu0 0
  %1337 = vmatpush1.bf16.msra.mxu0 %v1319
  %1338 = vmatprep.subr.bf16.mxu0 0
  %1339 = vmatpush1.bf16.msra.mxu0 %v1320
  %1340 = vmatprep.subr.bf16.mxu0 0
  %1341 = vmatpush1.bf16.msra.mxu0 %v1321
  %1342 = vmatprep.subr.bf16.mxu0 0
  %1343 = vmatpush1.bf16.msra.mxu0 %v1322
  %1344 = vmatprep.subr.bf16.mxu0 0
  %1345 = vmatpush1.bf16.msra.mxu0 %v1323
  %1346 = vmatprep.subr.bf16.mxu0 0
  %1347 = vmatpush1.bf16.msra.mxu0 %v1324
  %1348 = vmatprep.subr.bf16.mxu0 0
  %1349 = vmatpush1.bf16.msra.mxu0 %v1325
  %1350 = vmatprep.subr.bf16.mxu0 0
  %1351 = vmatpush1.bf16.msra.mxu0 0
  %1352 = vmatprep.subr.bf16.mxu0 0
  %1353 = vmatpush1.bf16.msra.mxu0 0
  %1354 = vmatprep.subr.bf16.mxu0 0
  %1355 = vmatpush1.bf16.msra.mxu0 0
  %1356 = vmatprep.subr.bf16.mxu0 0
  %1357 = vmatpush1.bf16.msra.mxu0 0
  %1358 = vmatprep.subr.bf16.mxu0 0
  %1359 = vmatpush1.bf16.msra.mxu0 0
  %1360 = vmatprep.subr.bf16.mxu0 0
  %1361 = vmatpush1.bf16.msra.mxu0 0
  %1362 = vmatprep.subr.bf16.mxu0 0
  %1363 = vmatpush1.bf16.msra.mxu0 0
  %1364 = vmatprep.subr.bf16.mxu0 0
  %1365 = vmatpush1.bf16.msra.mxu0 0
  %1366 = vmatprep.mubr.bf16.mxu0 0
  %1367 = vmatmul.mubr.bf16.gmra.mrb[0].mxu0 %v955
  %v1368 = vpop.f32.mrb[0].mxu0
  %v1369 = vadd.f32 %v1281, %v1368
  %v1370 = vpop.f32.mrb[0].mxu0
  %v1371 = vpop.f32.mrb[0].mxu0
  %v1372 = vpop.f32.mrb[0].mxu0
  %1373 = vdwg.mxu0
  %v1374 = vadd.f32 %v1369, %v235
  %v1375 = vmax.f32 %v1374, 0.0
  %v1376 = vpack.c.bf16 %v1375, %v1375
  %1377 = vmatprep.subr.bf16.mxu0 0
  %1378 = vmatpush1.bf16.msra.mxu0 %v303
  %1379 = vmatprep.subr.bf16.mxu0 0
  %1380 = vmatpush1.bf16.msra.mxu0 %v304
  %1381 = vmatprep.subr.bf16.mxu0 0
  %1382 = vmatpush1.bf16.msra.mxu0 %v305
  %1383 = vmatprep.subr.bf16.mxu0 0
  %1384 = vmatpush1.bf16.msra.mxu0 %v306
  %1385 = vmatprep.subr.bf16.mxu0 0
  %1386 = vmatpush1.bf16.msra.mxu0 %v307
  %1387 = vmatprep.subr.bf16.mxu0 0
  %1388 = vmatpush1.bf16.msra.mxu0 %v308
  %1389 = vmatprep.subr.bf16.mxu0 0
  %1390 = vmatpush1.bf16.msra.mxu0 %v309
  %1391 = vmatprep.subr.bf16.mxu0 0
  %1392 = vmatpush1.bf16.msra.mxu0 %v310
  %1393 = vmatprep.subr.bf16.mxu0 0
  %1394 = vmatpush1.bf16.msra.mxu0 0
  %1395 = vmatprep.subr.bf16.mxu0 0
  %1396 = vmatpush1.bf16.msra.mxu0 0
  %1397 = vmatprep.subr.bf16.mxu0 0
  %1398 = vmatpush1.bf16.msra.mxu0 0
  %1399 = vmatprep.subr.bf16.mxu0 0
  %1400 = vmatpush1.bf16.msra.mxu0 0
  %1401 = vmatprep.subr.bf16.mxu0 0
  %1402 = vmatpush1.bf16.msra.mxu0 0
  %1403 = vmatprep.subr.bf16.mxu0 0
  %1404 = vmatpush1.bf16.msra.mxu0 0
  %1405 = vmatprep.subr.bf16.mxu0 0
  %1406 = vmatpush1.bf16.msra.mxu0 0
  %1407 = vmatprep.subr.bf16.mxu0 0
  %1408 = vmatpush1.bf16.msra.mxu0 0
  %1409 = vmatprep.mubr.bf16.mxu0 0
  %1410 = vmatmul.mubr.bf16.gmra.mrb[0].mxu0 %v999
  %v1411 = vpop.f32.mrb[0].mxu0
  %v1412 = vadd.f32 0.0, %v1411
  %v1413 = vpop.f32.mrb[0].mxu0
  %v1414 = vpop.f32.mrb[0].mxu0
  %v1415 = vpop.f32.mrb[0].mxu0
  %1416 = vdwg.mxu0
  %v1417 = vadd.f32 %v187, %v1412
  %v1418 = vadd.f32 %v1417, %v208
  %v1419 = vmax.f32 %v1418, 0.0
  %v1420 = vpack.c.bf16 %v1419, %v1419
  %1421 = vmatprep.subr.bf16.mxu0 0
  %1422 = vmatpush1.bf16.msra.mxu0 %v471
  %1423 = vmatprep.subr.bf16.mxu0 0
  %1424 = vmatpush1.bf16.msra.mxu0 %v472
  %1425 = vmatprep.subr.bf16.mxu0 0
  %1426 = vmatpush1.bf16.msra.mxu0 %v473
  %1427 = vmatprep.subr.bf16.mxu0 0
  %1428 = vmatpush1.bf16.msra.mxu0 %v474
  %1429 = vmatprep.subr.bf16.mxu0 0
  %1430 = vmatpush1.bf16.msra.mxu0 %v475
  %1431 = vmatprep.subr.bf16.mxu0 0
  %1432 = vmatpush1.bf16.msra.mxu0 %v476
  %1433 = vmatprep.subr.bf16.mxu0 0
  %1434 = vmatpush1.bf16.msra.mxu0 %v477
  %1435 = vmatprep.subr.bf16.mxu0 0
  %1436 = vmatpush1.bf16.msra.mxu0 %v478
  %1437 = vmatprep.subr.bf16.mxu0 0
  %1438 = vmatpush1.bf16.msra.mxu0 0
  %1439 = vmatprep.subr.bf16.mxu0 0
  %1440 = vmatpush1.bf16.msra.mxu0 0
  %1441 = vmatprep.subr.bf16.mxu0 0
  %1442 = vmatpush1.bf16.msra.mxu0 0
  %1443 = vmatprep.subr.bf16.mxu0 0
  %1444 = vmatpush1.bf16.msra.mxu0 0
  %1445 = vmatprep.subr.bf16.mxu0 0
  %1446 = vmatpush1.bf16.msra.mxu0 0
  %1447 = vmatprep.subr.bf16.mxu0 0
  %1448 = vmatpush1.bf16.msra.mxu0 0
  %1449 = vmatprep.subr.bf16.mxu0 0
  %1450 = vmatpush1.bf16.msra.mxu0 0
  %1451 = vmatprep.subr.bf16.mxu0 0
  %1452 = vmatpush1.bf16.msra.mxu0 0
  %1453 = vmatprep.mubr.bf16.mxu0 0
  %1454 = vmatmul.mubr.bf16.gmra.mrb[0].mxu0 %v1082
  %v1455 = vpop.f32.mrb[0].mxu0
  %v1456 = vadd.f32 0.0, %v1455
  %v1457 = vpop.f32.mrb[0].mxu0
  %v1458 = vpop.f32.mrb[0].mxu0
  %v1459 = vpop.f32.mrb[0].mxu0
  %1460 = vdwg.mxu0
  %1461 = vmatprep.subr.bf16.mxu0 0
  %1462 = vmatpush1.bf16.msra.mxu0 %v559
  %1463 = vmatprep.subr.bf16.mxu0 0
  %1464 = vmatpush1.bf16.msra.mxu0 %v560
  %1465 = vmatprep.subr.bf16.mxu0 0
  %1466 = vmatpush1.bf16.msra.mxu0 %v561
  %1467 = vmatprep.subr.bf16.mxu0 0
  %1468 = vmatpush1.bf16.msra.mxu0 %v562
  %1469 = vmatprep.subr.bf16.mxu0 0
  %1470 = vmatpush1.bf16.msra.mxu0 %v563
  %1471 = vmatprep.subr.bf16.mxu0 0
  %1472 = vmatpush1.bf16.msra.mxu0 %v564
  %1473 = vmatprep.subr.bf16.mxu0 0
  %1474 = vmatpush1.bf16.msra.mxu0 %v565
  %1475 = vmatprep.subr.bf16.mxu0 0
  %1476 = vmatpush1.bf16.msra.mxu0 %v566
  %1477 = vmatprep.subr.bf16.mxu0 0
  %1478 = vmatpush1.bf16.msra.mxu0 0
  %1479 = vmatprep.subr.bf16.mxu0 0
  %1480 = vmatpush1.bf16.msra.mxu0 0
  %1481 = vmatprep.subr.bf16.mxu0 0
  %1482 = vmatpush1.bf16.msra.mxu0 0
  %1483 = vmatprep.subr.bf16.mxu0 0
  %1484 = vmatpush1.bf16.msra.mxu0 0
  %1485 = vmatprep.subr.bf16.mxu0 0
  %1486 = vmatpush1.bf16.msra.mxu0 0
  %1487 = vmatprep.subr.bf16.mxu0 0
  %1488 = vmatpush1.bf16.msra.mxu0 0
  %1489 = vmatprep.subr.bf16.mxu0 0
  %1490 = vmatpush1.bf16.msra.mxu0 0
  %1491 = vmatprep.subr.bf16.mxu0 0
  %1492 = vmatpush1.bf16.msra.mxu0 0
  %1493 = vmatprep.mubr.bf16.mxu0 0
  %1494 = vmatmul.mubr.bf16.gmra.mrb[0].mxu0 %v999
  %v1495 = vpop.f32.mrb[0].mxu0
  %v1496 = vadd.f32 %v1456, %v1495
  %v1497 = vpop.f32.mrb[0].mxu0
  %v1498 = vpop.f32.mrb[0].mxu0
  %v1499 = vpop.f32.mrb[0].mxu0
  %1500 = vdwg.mxu0
  %v1501 = vadd.f32 %v1496, %v217
  %v1502 = vmax.f32 %v1501, 0.0
  %v1503 = vpack.c.bf16 %v1502, %v1502
  %1504 = vmatprep.subr.bf16.mxu0 0
  %1505 = vmatpush1.bf16.msra.mxu0 %v809
  %1506 = vmatprep.subr.bf16.mxu0 0
  %1507 = vmatpush1.bf16.msra.mxu0 %v810
  %1508 = vmatprep.subr.bf16.mxu0 0
  %1509 = vmatpush1.bf16.msra.mxu0 %v811
  %1510 = vmatprep.subr.bf16.mxu0 0
  %1511 = vmatpush1.bf16.msra.mxu0 %v812
  %1512 = vmatprep.subr.bf16.mxu0 0
  %1513 = vmatpush1.bf16.msra.mxu0 %v813
  %1514 = vmatprep.subr.bf16.mxu0 0
  %1515 = vmatpush1.bf16.msra.mxu0 %v814
  %1516 = vmatprep.subr.bf16.mxu0 0
  %1517 = vmatpush1.bf16.msra.mxu0 %v815
  %1518 = vmatprep.subr.bf16.mxu0 0
  %1519 = vmatpush1.bf16.msra.mxu0 %v816
  %1520 = vmatprep.subr.bf16.mxu0 0
  %1521 = vmatpush1.bf16.msra.mxu0 0
  %1522 = vmatprep.subr.bf16.mxu0 0
  %1523 = vmatpush1.bf16.msra.mxu0 0
  %1524 = vmatprep.subr.bf16.mxu0 0
  %1525 = vmatpush1.bf16.msra.mxu0 0
  %1526 = vmatprep.subr.bf16.mxu0 0
  %1527 = vmatpush1.bf16.msra.mxu0 0
  %1528 = vmatprep.subr.bf16.mxu0 0
  %1529 = vmatpush1.bf16.msra.mxu0 0
  %1530 = vmatprep.subr.bf16.mxu0 0
  %1531 = vmatpush1.bf16.msra.mxu0 0
  %1532 = vmatprep.subr.bf16.mxu0 0
  %1533 = vmatpush1.bf16.msra.mxu0 0
  %1534 = vmatprep.subr.bf16.mxu0 0
  %1535 = vmatpush1.bf16.msra.mxu0 0
  %1536 = vmatprep.mubr.bf16.mxu0 0
  %1537 = vmatmul.mubr.bf16.gmra.mrb[0].mxu0 %v1165
  %v1538 = vpop.f32.mrb[0].mxu0
  %v1539 = vadd.f32 0.0, %v1538
  %v1540 = vpop.f32.mrb[0].mxu0
  %v1541 = vpop.f32.mrb[0].mxu0
  %v1542 = vpop.f32.mrb[0].mxu0
  %1543 = vdwg.mxu0
  %1544 = vmatprep.subr.bf16.mxu0 0
  %1545 = vmatpush1.bf16.msra.mxu0 %v897
  %1546 = vmatprep.subr.bf16.mxu0 0
  %1547 = vmatpush1.bf16.msra.mxu0 %v898
  %1548 = vmatprep.subr.bf16.mxu0 0
  %1549 = vmatpush1.bf16.msra.mxu0 %v899
  %1550 = vmatprep.subr.bf16.mxu0 0
  %1551 = vmatpush1.bf16.msra.mxu0 %v900
  %1552 = vmatprep.subr.bf16.mxu0 0
  %1553 = vmatpush1.bf16.msra.mxu0 %v901
  %1554 = vmatprep.subr.bf16.mxu0 0
  %1555 = vmatpush1.bf16.msra.mxu0 %v902
  %1556 = vmatprep.subr.bf16.mxu0 0
  %1557 = vmatpush1.bf16.msra.mxu0 %v903
  %1558 = vmatprep.subr.bf16.mxu0 0
  %1559 = vmatpush1.bf16.msra.mxu0 %v904
  %1560 = vmatprep.subr.bf16.mxu0 0
  %1561 = vmatpush1.bf16.msra.mxu0 0
  %1562 = vmatprep.subr.bf16.mxu0 0
  %1563 = vmatpush1.bf16.msra.mxu0 0
  %1564 = vmatprep.subr.bf16.mxu0 0
  %1565 = vmatpush1.bf16.msra.mxu0 0
  %1566 = vmatprep.subr.bf16.mxu0 0
  %1567 = vmatpush1.bf16.msra.mxu0 0
  %1568 = vmatprep.subr.bf16.mxu0 0
  %1569 = vmatpush1.bf16.msra.mxu0 0
  %1570 = vmatprep.subr.bf16.mxu0 0
  %1571 = vmatpush1.bf16.msra.mxu0 0
  %1572 = vmatprep.subr.bf16.mxu0 0
  %1573 = vmatpush1.bf16.msra.mxu0 0
  %1574 = vmatprep.subr.bf16.mxu0 0
  %1575 = vmatpush1.bf16.msra.mxu0 0
  %1576 = vmatprep.mubr.bf16.mxu0 0
  %1577 = vmatmul.mubr.bf16.gmra.mrb[0].mxu0 %v1082
  %v1578 = vpop.f32.mrb[0].mxu0
  %v1579 = vadd.f32 %v1539, %v1578
  %v1580 = vpop.f32.mrb[0].mxu0
  %v1581 = vpop.f32.mrb[0].mxu0
  %v1582 = vpop.f32.mrb[0].mxu0
  %1583 = vdwg.mxu0
  %v1584 = vadd.f32 %v1579, %v226
  %v1585 = vmax.f32 %v1584, 0.0
  %v1586 = vpack.c.bf16 %v1585, %v1585
  %1587 = vmatprep.subr.bf16.mxu0 0
  %1588 = vmatpush1.bf16.msra.mxu0 %v1230
  %1589 = vmatprep.subr.bf16.mxu0 0
  %1590 = vmatpush1.bf16.msra.mxu0 %v1231
  %1591 = vmatprep.subr.bf16.mxu0 0
  %1592 = vmatpush1.bf16.msra.mxu0 %v1232
  %1593 = vmatprep.subr.bf16.mxu0 0
  %1594 = vmatpush1.bf16.msra.mxu0 %v1233
  %1595 = vmatprep.subr.bf16.mxu0 0
  %1596 = vmatpush1.bf16.msra.mxu0 %v1234
  %1597 = vmatprep.subr.bf16.mxu0 0
  %1598 = vmatpush1.bf16.msra.mxu0 %v1235
  %1599 = vmatprep.subr.bf16.mxu0 0
  %1600 = vmatpush1.bf16.msra.mxu0 %v1236
  %1601 = vmatprep.subr.bf16.mxu0 0
  %1602 = vmatpush1.bf16.msra.mxu0 %v1237
  %1603 = vmatprep.subr.bf16.mxu0 0
  %1604 = vmatpush1.bf16.msra.mxu0 0
  %1605 = vmatprep.subr.bf16.mxu0 0
  %1606 = vmatpush1.bf16.msra.mxu0 0
  %1607 = vmatprep.subr.bf16.mxu0 0
  %1608 = vmatpush1.bf16.msra.mxu0 0
  %1609 = vmatprep.subr.bf16.mxu0 0
  %1610 = vmatpush1.bf16.msra.mxu0 0
  %1611 = vmatprep.subr.bf16.mxu0 0
  %1612 = vmatpush1.bf16.msra.mxu0 0
  %1613 = vmatprep.subr.bf16.mxu0 0
  %1614 = vmatpush1.bf16.msra.mxu0 0
  %1615 = vmatprep.subr.bf16.mxu0 0
  %1616 = vmatpush1.bf16.msra.mxu0 0
  %1617 = vmatprep.subr.bf16.mxu0 0
  %1618 = vmatpush1.bf16.msra.mxu0 0
  %1619 = vmatprep.mubr.bf16.mxu0 0
  %1620 = vmatmul.mubr.bf16.gmra.mrb[0].mxu0 %v1376
  %v1621 = vpop.f32.mrb[0].mxu0
  %v1622 = vadd.f32 0.0, %v1621
  %v1623 = vpop.f32.mrb[0].mxu0
  %v1624 = vpop.f32.mrb[0].mxu0
  %v1625 = vpop.f32.mrb[0].mxu0
  %1626 = vdwg.mxu0
  %1627 = vmatprep.subr.bf16.mxu0 0
  %1628 = vmatpush1.bf16.msra.mxu0 %v1318
  %1629 = vmatprep.subr.bf16.mxu0 0
  %1630 = vmatpush1.bf16.msra.mxu0 %v1319
  %1631 = vmatprep.subr.bf16.mxu0 0
  %1632 = vmatpush1.bf16.msra.mxu0 %v1320
  %1633 = vmatprep.subr.bf16.mxu0 0
  %1634 = vmatpush1.bf16.msra.mxu0 %v1321
  %1635 = vmatprep.subr.bf16.mxu0 0
  %1636 = vmatpush1.bf16.msra.mxu0 %v1322
  %1637 = vmatprep.subr.bf16.mxu0 0
  %1638 = vmatpush1.bf16.msra.mxu0 %v1323
  %1639 = vmatprep.subr.bf16.mxu0 0
  %1640 = vmatpush1.bf16.msra.mxu0 %v1324
  %1641 = vmatprep.subr.bf16.mxu0 0
  %1642 = vmatpush1.bf16.msra.mxu0 %v1325
  %1643 = vmatprep.subr.bf16.mxu0 0
  %1644 = vmatpush1.bf16.msra.mxu0 0
  %1645 = vmatprep.subr.bf16.mxu0 0
  %1646 = vmatpush1.bf16.msra.mxu0 0
  %1647 = vmatprep.subr.bf16.mxu0 0
  %1648 = vmatpush1.bf16.msra.mxu0 0
  %1649 = vmatprep.subr.bf16.mxu0 0
  %1650 = vmatpush1.bf16.msra.mxu0 0
  %1651 = vmatprep.subr.bf16.mxu0 0
  %1652 = vmatpush1.bf16.msra.mxu0 0
  %1653 = vmatprep.subr.bf16.mxu0 0
  %1654 = vmatpush1.bf16.msra.mxu0 0
  %1655 = vmatprep.subr.bf16.mxu0 0
  %1656 = vmatpush1.bf16.msra.mxu0 0
  %1657 = vmatprep.subr.bf16.mxu0 0
  %1658 = vmatpush1.bf16.msra.mxu0 0
  %1659 = vmatprep.mubr.bf16.mxu0 0
  %1660 = vmatmul.mubr.bf16.gmra.mrb[0].mxu0 %v1165
  %v1661 = vpop.f32.mrb[0].mxu0
  %v1662 = vadd.f32 %v1622, %v1661
  %v1663 = vpop.f32.mrb[0].mxu0
  %v1664 = vpop.f32.mrb[0].mxu0
  %v1665 = vpop.f32.mrb[0].mxu0
  %1666 = vdwg.mxu0
  %v1667 = vadd.f32 %v1662, %v235
  %v1668 = vmax.f32 %v1667, 0.0
  %v1669 = vpack.c.bf16 %v1668, %v1668
  %v1670 = vld [vmem:[%s17] sm:$0xf]
  %v1671 = vld [vmem:[%s17 + $0x4] sm:$0xf]
  %v1672 = vld [vmem:[%s17 + $0x8] sm:$0xf]
  %v1673 = vld [vmem:[%s17 + $0xc] sm:$0xf]
  %v1674 = vld [vmem:[%s17 + $0x10] sm:$0xf]
  %v1675 = vld [vmem:[%s17 + $0x14] sm:$0xf]
  %v1676 = vld [vmem:[%s17 + $0x18] sm:$0xf]
  %v1677 = vld [vmem:[%s17 + $0x1c] sm:$0xf]
  %v1678 = vld [vmem:[%s17 + $0x20] sm:$0xf]
  %v1679 = vld [vmem:[%s17 + $0x24] sm:$0xf]
  %v1680 = vld [vmem:[%s17 + $0x28] sm:$0xf]
  %v1681 = vld [vmem:[%s17 + $0x2c] sm:$0xf]
  %v1682 = vld [vmem:[%s17 + $0x30] sm:$0xf]
  %v1683 = vld [vmem:[%s17 + $0x34] sm:$0xf]
  %v1684 = vld [vmem:[%s17 + $0x38] sm:$0xf]
  %v1685 = vld [vmem:[%s17 + $0x3c] sm:$0xf]
  %v1686 = vld [vmem:[%s18] sm:$0xf]
  %v1687 = vld [vmem:[%s18 + $0x4] sm:$0xf]
  %v1688 = vld [vmem:[%s18 + $0x8] sm:$0xf]
  %v1689 = vld [vmem:[%s18 + $0xc] sm:$0xf]
  %v1690 = vld [vmem:[%s18 + $0x10] sm:$0xf]
  %v1691 = vld [vmem:[%s18 + $0x14] sm:$0xf]
  %v1692 = vld [vmem:[%s18 + $0x18] sm:$0xf]
  %v1693 = vld [vmem:[%s18 + $0x1c] sm:$0xf]
  %v1694 = vld [vmem:[%s18 + $0x20] sm:$0xf]
  %v1695 = vld [vmem:[%s18 + $0x24] sm:$0xf]
  %v1696 = vld [vmem:[%s18 + $0x28] sm:$0xf]
  %v1697 = vld [vmem:[%s18 + $0x2c] sm:$0xf]
  %v1698 = vld [vmem:[%s18 + $0x30] sm:$0xf]
  %v1699 = vld [vmem:[%s18 + $0x34] sm:$0xf]
  %v1700 = vld [vmem:[%s18 + $0x38] sm:$0xf]
  %v1701 = vld [vmem:[%s18 + $0x3c] sm:$0xf]
  %v1718 = vunpack.c.l.b16 %v1686
  %v1719 = vunpack.c.l.b16 %v1687
  %v1720 = vunpack.c.l.b16 %v1688
  %v1721 = vunpack.c.l.b16 %v1689
  %v1722 = vunpack.c.l.b16 %v1690
  %v1723 = vunpack.c.l.b16 %v1691
  %v1724 = vunpack.c.l.b16 %v1692
  %v1725 = vunpack.c.l.b16 %v1693
  %v1726 = vunpack.c.l.b16 %v1694
  %v1727 = vunpack.c.l.b16 %v1695
  %v1728 = vunpack.c.l.b16 %v1696
  %v1729 = vunpack.c.l.b16 %v1697
  %v1730 = vunpack.c.l.b16 %v1698
  %v1731 = vunpack.c.l.b16 %v1699
  %v1732 = vunpack.c.l.b16 %v1700
  %v1733 = vunpack.c.l.b16 %v1701
  %v1734 = vpack.c.b16 %v1719, %v1718
  %v1735 = vpack.c.b16 %v1721, %v1720
  %v1736 = vpack.c.b16 %v1723, %v1722
  %v1737 = vpack.c.b16 %v1725, %v1724
  %v1738 = vpack.c.b16 %v1727, %v1726
  %v1739 = vpack.c.b16 %v1729, %v1728
  %v1740 = vpack.c.b16 %v1731, %v1730
  %v1741 = vpack.c.b16 %v1733, %v1732
  %1750 = vmatprep.subr.bf16.mxu0 0
  %1751 = vmatpush1.bf16.msra.mxu0 %v1734
  %1752 = vmatprep.subr.bf16.mxu0 0
  %1753 = vmatpush1.bf16.msra.mxu0 %v1735
  %1754 = vmatprep.subr.bf16.mxu0 0
  %1755 = vmatpush1.bf16.msra.mxu0 %v1736
  %1756 = vmatprep.subr.bf16.mxu0 0
  %1757 = vmatpush1.bf16.msra.mxu0 %v1737
  %1758 = vmatprep.subr.bf16.mxu0 0
  %1759 = vmatpush1.bf16.msra.mxu0 %v1738
  %1760 = vmatprep.subr.bf16.mxu0 0
  %1761 = vmatpush1.bf16.msra.mxu0 %v1739
  %1762 = vmatprep.subr.bf16.mxu0 0
  %1763 = vmatpush1.bf16.msra.mxu0 %v1740
  %1764 = vmatprep.subr.bf16.mxu0 0
  %1765 = vmatpush1.bf16.msra.mxu0 %v1741
  %1766 = vmatprep.subr.bf16.mxu0 0
  %1767 = vmatpush1.bf16.msra.mxu0 0
  %1768 = vmatprep.subr.bf16.mxu0 0
  %1769 = vmatpush1.bf16.msra.mxu0 0
  %1770 = vmatprep.subr.bf16.mxu0 0
  %1771 = vmatpush1.bf16.msra.mxu0 0
  %1772 = vmatprep.subr.bf16.mxu0 0
  %1773 = vmatpush1.bf16.msra.mxu0 0
  %1774 = vmatprep.subr.bf16.mxu0 0
  %1775 = vmatpush1.bf16.msra.mxu0 0
  %1776 = vmatprep.subr.bf16.mxu0 0
  %1777 = vmatpush1.bf16.msra.mxu0 0
  %1778 = vmatprep.subr.bf16.mxu0 0
  %1779 = vmatpush1.bf16.msra.mxu0 0
  %1780 = vmatprep.subr.bf16.mxu0 0
  %1781 = vmatpush1.bf16.msra.mxu0 0
  %1782 = vmatprep.mubr.bf16.mxu0 0
  %1783 = vmatmul.mubr.bf16.gmra.mrb[0].mxu0 0
  %v1784 = vpop.f32.mrb[0].mxu0
  %v1785 = vadd.f32 0.0, %v1784
  %v1786 = vpop.f32.mrb[0].mxu0
  %v1787 = vpop.f32.mrb[0].mxu0
  %v1788 = vpop.f32.mrb[0].mxu0
  %1789 = vdwg.mxu0
  %v1806 = vunpack.c.l.b16 %v1670
  %v1807 = vunpack.c.l.b16 %v1671
  %v1808 = vunpack.c.l.b16 %v1672
  %v1809 = vunpack.c.l.b16 %v1673
  %v1810 = vunpack.c.l.b16 %v1674
  %v1811 = vunpack.c.l.b16 %v1675
  %v1812 = vunpack.c.l.b16 %v1676
  %v1813 = vunpack.c.l.b16 %v1677
  %v1814 = vunpack.c.l.b16 %v1678
  %v1815 = vunpack.c.l.b16 %v1679
  %v1816 = vunpack.c.l.b16 %v1680
  %v1817 = vunpack.c.l.b16 %v1681
  %v1818 = vunpack.c.l.b16 %v1682
  %v1819 = vunpack.c.l.b16 %v1683
  %v1820 = vunpack.c.l.b16 %v1684
  %v1821 = vunpack.c.l.b16 %v1685
  %v1822 = vpack.c.b16 %v1807, %v1806
  %v1823 = vpack.c.b16 %v1809, %v1808
  %v1824 = vpack.c.b16 %v1811, %v1810
  %v1825 = vpack.c.b16 %v1813, %v1812
  %v1826 = vpack.c.b16 %v1815, %v1814
  %v1827 = vpack.c.b16 %v1817, %v1816
  %v1828 = vpack.c.b16 %v1819, %v1818
  %v1829 = vpack.c.b16 %v1821, %v1820
  %1838 = vmatprep.subr.bf16.mxu0 0
  %1839 = vmatpush1.bf16.msra.mxu0 %v1822
  %1840 = vmatprep.subr.bf16.mxu0 0
  %1841 = vmatpush1.bf16.msra.mxu0 %v1823
  %1842 = vmatprep.subr.bf16.mxu0 0
  %1843 = vmatpush1.bf16.msra.mxu0 %v1824
  %1844 = vmatprep.subr.bf16.mxu0 0
  %1845 = vmatpush1.bf16.msra.mxu0 %v1825
  %1846 = vmatprep.subr.bf16.mxu0 0
  %1847 = vmatpush1.bf16.msra.mxu0 %v1826
  %1848 = vmatprep.subr.bf16.mxu0 0
  %1849 = vmatpush1.bf16.msra.mxu0 %v1827
  %1850 = vmatprep.subr.bf16.mxu0 0
  %1851 = vmatpush1.bf16.msra.mxu0 %v1828
  %1852 = vmatprep.subr.bf16.mxu0 0
  %1853 = vmatpush1.bf16.msra.mxu0 %v1829
  %1854 = vmatprep.subr.bf16.mxu0 0
  %1855 = vmatpush1.bf16.msra.mxu0 0
  %1856 = vmatprep.subr.bf16.mxu0 0
  %1857 = vmatpush1.bf16.msra.mxu0 0
  %1858 = vmatprep.subr.bf16.mxu0 0
  %1859 = vmatpush1.bf16.msra.mxu0 0
  %1860 = vmatprep.subr.bf16.mxu0 0
  %1861 = vmatpush1.bf16.msra.mxu0 0
  %1862 = vmatprep.subr.bf16.mxu0 0
  %1863 = vmatpush1.bf16.msra.mxu0 0
  %1864 = vmatprep.subr.bf16.mxu0 0
  %1865 = vmatpush1.bf16.msra.mxu0 0
  %1866 = vmatprep.subr.bf16.mxu0 0
  %1867 = vmatpush1.bf16.msra.mxu0 0
  %1868 = vmatprep.subr.bf16.mxu0 0
  %1869 = vmatpush1.bf16.msra.mxu0 0
  %1870 = vmatprep.mubr.bf16.mxu0 0
  %1871 = vmatmul.mubr.bf16.gmra.mrb[0].mxu0 %v1376
  %v1872 = vpop.f32.mrb[0].mxu0
  %v1873 = vadd.f32 %v1785, %v1872
  %v1874 = vpop.f32.mrb[0].mxu0
  %v1875 = vpop.f32.mrb[0].mxu0
  %v1876 = vpop.f32.mrb[0].mxu0
  %1877 = vdwg.mxu0
  %v1878 = vadd.f32 %v1873, %v244
  %v1879 = vmax.f32 %v1878, 0.0
  %v1880 = vpack.c.bf16 %v1879, %v1879
  %1881 = vmatprep.subr.bf16.mxu0 0
  %1882 = vmatpush1.bf16.msra.mxu0 %v303
  %1883 = vmatprep.subr.bf16.mxu0 0
  %1884 = vmatpush1.bf16.msra.mxu0 %v304
  %1885 = vmatprep.subr.bf16.mxu0 0
  %1886 = vmatpush1.bf16.msra.mxu0 %v305
  %1887 = vmatprep.subr.bf16.mxu0 0
  %1888 = vmatpush1.bf16.msra.mxu0 %v306
  %1889 = vmatprep.subr.bf16.mxu0 0
  %1890 = vmatpush1.bf16.msra.mxu0 %v307
  %1891 = vmatprep.subr.bf16.mxu0 0
  %1892 = vmatpush1.bf16.msra.mxu0 %v308
  %1893 = vmatprep.subr.bf16.mxu0 0
  %1894 = vmatpush1.bf16.msra.mxu0 %v309
  %1895 = vmatprep.subr.bf16.mxu0 0
  %1896 = vmatpush1.bf16.msra.mxu0 %v310
  %1897 = vmatprep.subr.bf16.mxu0 0
  %1898 = vmatpush1.bf16.msra.mxu0 0
  %1899 = vmatprep.subr.bf16.mxu0 0
  %1900 = vmatpush1.bf16.msra.mxu0 0
  %1901 = vmatprep.subr.bf16.mxu0 0
  %1902 = vmatpush1.bf16.msra.mxu0 0
  %1903 = vmatprep.subr.bf16.mxu0 0
  %1904 = vmatpush1.bf16.msra.mxu0 0
  %1905 = vmatprep.subr.bf16.mxu0 0
  %1906 = vmatpush1.bf16.msra.mxu0 0
  %1907 = vmatprep.subr.bf16.mxu0 0
  %1908 = vmatpush1.bf16.msra.mxu0 0
  %1909 = vmatprep.subr.bf16.mxu0 0
  %1910 = vmatpush1.bf16.msra.mxu0 0
  %1911 = vmatprep.subr.bf16.mxu0 0
  %1912 = vmatpush1.bf16.msra.mxu0 0
  %1913 = vmatprep.mubr.bf16.mxu0 0
  %1914 = vmatmul.mubr.bf16.gmra.mrb[0].mxu0 %v1420
  %v1915 = vpop.f32.mrb[0].mxu0
  %v1916 = vadd.f32 0.0, %v1915
  %v1917 = vpop.f32.mrb[0].mxu0
  %v1918 = vpop.f32.mrb[0].mxu0
  %v1919 = vpop.f32.mrb[0].mxu0
  %1920 = vdwg.mxu0
  %v1921 = vadd.f32 %v190, %v1916
  %v1922 = vadd.f32 %v1921, %v208
  %v1923 = vmax.f32 %v1922, 0.0
  %v1924 = vpack.c.bf16 %v1923, %v1923
  %1925 = vmatprep.subr.bf16.mxu0 0
  %1926 = vmatpush1.bf16.msra.mxu0 %v471
  %1927 = vmatprep.subr.bf16.mxu0 0
  %1928 = vmatpush1.bf16.msra.mxu0 %v472
  %1929 = vmatprep.subr.bf16.mxu0 0
  %1930 = vmatpush1.bf16.msra.mxu0 %v473
  %1931 = vmatprep.subr.bf16.mxu0 0
  %1932 = vmatpush1.bf16.msra.mxu0 %v474
  %1933 = vmatprep.subr.bf16.mxu0 0
  %1934 = vmatpush1.bf16.msra.mxu0 %v475
  %1935 = vmatprep.subr.bf16.mxu0 0
  %1936 = vmatpush1.bf16.msra.mxu0 %v476
  %1937 = vmatprep.subr.bf16.mxu0 0
  %1938 = vmatpush1.bf16.msra.mxu0 %v477
  %1939 = vmatprep.subr.bf16.mxu0 0
  %1940 = vmatpush1.bf16.msra.mxu0 %v478
  %1941 = vmatprep.subr.bf16.mxu0 0
  %1942 = vmatpush1.bf16.msra.mxu0 0
  %1943 = vmatprep.subr.bf16.mxu0 0
  %1944 = vmatpush1.bf16.msra.mxu0 0
  %1945 = vmatprep.subr.bf16.mxu0 0
  %1946 = vmatpush1.bf16.msra.mxu0 0
  %1947 = vmatprep.subr.bf16.mxu0 0
  %1948 = vmatpush1.bf16.msra.mxu0 0
  %1949 = vmatprep.subr.bf16.mxu0 0
  %1950 = vmatpush1.bf16.msra.mxu0 0
  %1951 = vmatprep.subr.bf16.mxu0 0
  %1952 = vmatpush1.bf16.msra.mxu0 0
  %1953 = vmatprep.subr.bf16.mxu0 0
  %1954 = vmatpush1.bf16.msra.mxu0 0
  %1955 = vmatprep.subr.bf16.mxu0 0
  %1956 = vmatpush1.bf16.msra.mxu0 0
  %1957 = vmatprep.mubr.bf16.mxu0 0
  %1958 = vmatmul.mubr.bf16.gmra.mrb[0].mxu0 %v1503
  %v1959 = vpop.f32.mrb[0].mxu0
  %v1960 = vadd.f32 0.0, %v1959
  %v1961 = vpop.f32.mrb[0].mxu0
  %v1962 = vpop.f32.mrb[0].mxu0
  %v1963 = vpop.f32.mrb[0].mxu0
  %1964 = vdwg.mxu0
  %1965 = vmatprep.subr.bf16.mxu0 0
  %1966 = vmatpush1.bf16.msra.mxu0 %v559
  %1967 = vmatprep.subr.bf16.mxu0 0
  %1968 = vmatpush1.bf16.msra.mxu0 %v560
  %1969 = vmatprep.subr.bf16.mxu0 0
  %1970 = vmatpush1.bf16.msra.mxu0 %v561
  %1971 = vmatprep.subr.bf16.mxu0 0
  %1972 = vmatpush1.bf16.msra.mxu0 %v562
  %1973 = vmatprep.subr.bf16.mxu0 0
  %1974 = vmatpush1.bf16.msra.mxu0 %v563
  %1975 = vmatprep.subr.bf16.mxu0 0
  %1976 = vmatpush1.bf16.msra.mxu0 %v564
  %1977 = vmatprep.subr.bf16.mxu0 0
  %1978 = vmatpush1.bf16.msra.mxu0 %v565
  %1979 = vmatprep.subr.bf16.mxu0 0
  %1980 = vmatpush1.bf16.msra.mxu0 %v566
  %1981 = vmatprep.subr.bf16.mxu0 0
  %1982 = vmatpush1.bf16.msra.mxu0 0
  %1983 = vmatprep.subr.bf16.mxu0 0
  %1984 = vmatpush1.bf16.msra.mxu0 0
  %1985 = vmatprep.subr.bf16.mxu0 0
  %1986 = vmatpush1.bf16.msra.mxu0 0
  %1987 = vmatprep.subr.bf16.mxu0 0
  %1988 = vmatpush1.bf16.msra.mxu0 0
  %1989 = vmatprep.subr.bf16.mxu0 0
  %1990 = vmatpush1.bf16.msra.mxu0 0
  %1991 = vmatprep.subr.bf16.mxu0 0
  %1992 = vmatpush1.bf16.msra.mxu0 0
  %1993 = vmatprep.subr.bf16.mxu0 0
  %1994 = vmatpush1.bf16.msra.mxu0 0
  %1995 = vmatprep.subr.bf16.mxu0 0
  %1996 = vmatpush1.bf16.msra.mxu0 0
  %1997 = vmatprep.mubr.bf16.mxu0 0
  %1998 = vmatmul.mubr.bf16.gmra.mrb[0].mxu0 %v1420
  %v1999 = vpop.f32.mrb[0].mxu0
  %v2000 = vadd.f32 %v1960, %v1999
  %v2001 = vpop.f32.mrb[0].mxu0
  %v2002 = vpop.f32.mrb[0].mxu0
  %v2003 = vpop.f32.mrb[0].mxu0
  %2004 = vdwg.mxu0
  %v2005 = vadd.f32 %v2000, %v217
  %v2006 = vmax.f32 %v2005, 0.0
  %v2007 = vpack.c.bf16 %v2006, %v2006
  %2008 = vmatprep.subr.bf16.mxu0 0
  %2009 = vmatpush1.bf16.msra.mxu0 %v809
  %2010 = vmatprep.subr.bf16.mxu0 0
  %2011 = vmatpush1.bf16.msra.mxu0 %v810
  %2012 = vmatprep.subr.bf16.mxu0 0
  %2013 = vmatpush1.bf16.msra.mxu0 %v811
  %2014 = vmatprep.subr.bf16.mxu0 0
  %2015 = vmatpush1.bf16.msra.mxu0 %v812
  %2016 = vmatprep.subr.bf16.mxu0 0
  %2017 = vmatpush1.bf16.msra.mxu0 %v813
  %2018 = vmatprep.subr.bf16.mxu0 0
  %2019 = vmatpush1.bf16.msra.mxu0 %v814
  %2020 = vmatprep.subr.bf16.mxu0 0
  %2021 = vmatpush1.bf16.msra.mxu0 %v815
  %2022 = vmatprep.subr.bf16.mxu0 0
  %2023 = vmatpush1.bf16.msra.mxu0 %v816
  %2024 = vmatprep.subr.bf16.mxu0 0
  %2025 = vmatpush1.bf16.msra.mxu0 0
  %2026 = vmatprep.subr.bf16.mxu0 0
  %2027 = vmatpush1.bf16.msra.mxu0 0
  %2028 = vmatprep.subr.bf16.mxu0 0
  %2029 = vmatpush1.bf16.msra.mxu0 0
  %2030 = vmatprep.subr.bf16.mxu0 0
  %2031 = vmatpush1.bf16.msra.mxu0 0
  %2032 = vmatprep.subr.bf16.mxu0 0
  %2033 = vmatpush1.bf16.msra.mxu0 0
  %2034 = vmatprep.subr.bf16.mxu0 0
  %2035 = vmatpush1.bf16.msra.mxu0 0
  %2036 = vmatprep.subr.bf16.mxu0 0
  %2037 = vmatpush1.bf16.msra.mxu0 0
  %2038 = vmatprep.subr.bf16.mxu0 0
  %2039 = vmatpush1.bf16.msra.mxu0 0
  %2040 = vmatprep.mubr.bf16.mxu0 0
  %2041 = vmatmul.mubr.bf16.gmra.mrb[0].mxu0 %v1586
  %v2042 = vpop.f32.mrb[0].mxu0
  %v2043 = vadd.f32 0.0, %v2042
  %v2044 = vpop.f32.mrb[0].mxu0
  %v2045 = vpop.f32.mrb[0].mxu0
  %v2046 = vpop.f32.mrb[0].mxu0
  %2047 = vdwg.mxu0
  %2048 = vmatprep.subr.bf16.mxu0 0
  %2049 = vmatpush1.bf16.msra.mxu0 %v897
  %2050 = vmatprep.subr.bf16.mxu0 0
  %2051 = vmatpush1.bf16.msra.mxu0 %v898
  %2052 = vmatprep.subr.bf16.mxu0 0
  %2053 = vmatpush1.bf16.msra.mxu0 %v899
  %2054 = vmatprep.subr.bf16.mxu0 0
  %2055 = vmatpush1.bf16.msra.mxu0 %v900
  %2056 = vmatprep.subr.bf16.mxu0 0
  %2057 = vmatpush1.bf16.msra.mxu0 %v901
  %2058 = vmatprep.subr.bf16.mxu0 0
  %2059 = vmatpush1.bf16.msra.mxu0 %v902
  %2060 = vmatprep.subr.bf16.mxu0 0
  %2061 = vmatpush1.bf16.msra.mxu0 %v903
  %2062 = vmatprep.subr.bf16.mxu0 0
  %2063 = vmatpush1.bf16.msra.mxu0 %v904
  %2064 = vmatprep.subr.bf16.mxu0 0
  %2065 = vmatpush1.bf16.msra.mxu0 0
  %2066 = vmatprep.subr.bf16.mxu0 0
  %2067 = vmatpush1.bf16.msra.mxu0 0
  %2068 = vmatprep.subr.bf16.mxu0 0
  %2069 = vmatpush1.bf16.msra.mxu0 0
  %2070 = vmatprep.subr.bf16.mxu0 0
  %2071 = vmatpush1.bf16.msra.mxu0 0
  %2072 = vmatprep.subr.bf16.mxu0 0
  %2073 = vmatpush1.bf16.msra.mxu0 0
  %2074 = vmatprep.subr.bf16.mxu0 0
  %2075 = vmatpush1.bf16.msra.mxu0 0
  %2076 = vmatprep.subr.bf16.mxu0 0
  %2077 = vmatpush1.bf16.msra.mxu0 0
  %2078 = vmatprep.subr.bf16.mxu0 0
  %2079 = vmatpush1.bf16.msra.mxu0 0
  %2080 = vmatprep.mubr.bf16.mxu0 0
  %2081 = vmatmul.mubr.bf16.gmra.mrb[0].mxu0 %v1503
  %v2082 = vpop.f32.mrb[0].mxu0
  %v2083 = vadd.f32 %v2043, %v2082
  %v2084 = vpop.f32.mrb[0].mxu0
  %v2085 = vpop.f32.mrb[0].mxu0
  %v2086 = vpop.f32.mrb[0].mxu0
  %2087 = vdwg.mxu0
  %v2088 = vadd.f32 %v2083, %v226
  %v2089 = vmax.f32 %v2088, 0.0
  %v2090 = vpack.c.bf16 %v2089, %v2089
  %2091 = vmatprep.subr.bf16.mxu0 0
  %2092 = vmatpush1.bf16.msra.mxu0 %v1230
  %2093 = vmatprep.subr.bf16.mxu0 0
  %2094 = vmatpush1.bf16.msra.mxu0 %v1231
  %2095 = vmatprep.subr.bf16.mxu0 0
  %2096 = vmatpush1.bf16.msra.mxu0 %v1232
  %2097 = vmatprep.subr.bf16.mxu0 0
  %2098 = vmatpush1.bf16.msra.mxu0 %v1233
  %2099 = vmatprep.subr.bf16.mxu0 0
  %2100 = vmatpush1.bf16.msra.mxu0 %v1234
  %2101 = vmatprep.subr.bf16.mxu0 0
  %2102 = vmatpush1.bf16.msra.mxu0 %v1235
  %2103 = vmatprep.subr.bf16.mxu0 0
  %2104 = vmatpush1.bf16.msra.mxu0 %v1236
  %2105 = vmatprep.subr.bf16.mxu0 0
  %2106 = vmatpush1.bf16.msra.mxu0 %v1237
  %2107 = vmatprep.subr.bf16.mxu0 0
  %2108 = vmatpush1.bf16.msra.mxu0 0
  %2109 = vmatprep.subr.bf16.mxu0 0
  %2110 = vmatpush1.bf16.msra.mxu0 0
  %2111 = vmatprep.subr.bf16.mxu0 0
  %2112 = vmatpush1.bf16.msra.mxu0 0
  %2113 = vmatprep.subr.bf16.mxu0 0
  %2114 = vmatpush1.bf16.msra.mxu0 0
  %2115 = vmatprep.subr.bf16.mxu0 0
  %2116 = vmatpush1.bf16.msra.mxu0 0
  %2117 = vmatprep.subr.bf16.mxu0 0
  %2118 = vmatpush1.bf16.msra.mxu0 0
  %2119 = vmatprep.subr.bf16.mxu0 0
  %2120 = vmatpush1.bf16.msra.mxu0 0
  %2121 = vmatprep.subr.bf16.mxu0 0
  %2122 = vmatpush1.bf16.msra.mxu0 0
  %2123 = vmatprep.mubr.bf16.mxu0 0
  %2124 = vmatmul.mubr.bf16.gmra.mrb[0].mxu0 %v1669
  %v2125 = vpop.f32.mrb[0].mxu0
  %v2126 = vadd.f32 0.0, %v2125
  %v2127 = vpop.f32.mrb[0].mxu0
  %v2128 = vpop.f32.mrb[0].mxu0
  %v2129 = vpop.f32.mrb[0].mxu0
  %2130 = vdwg.mxu0
  %2131 = vmatprep.subr.bf16.mxu0 0
  %2132 = vmatpush1.bf16.msra.mxu0 %v1318
  %2133 = vmatprep.subr.bf16.mxu0 0
  %2134 = vmatpush1.bf16.msra.mxu0 %v1319
  %2135 = vmatprep.subr.bf16.mxu0 0
  %2136 = vmatpush1.bf16.msra.mxu0 %v1320
  %2137 = vmatprep.subr.bf16.mxu0 0
  %2138 = vmatpush1.bf16.msra.mxu0 %v1321
  %2139 = vmatprep.subr.bf16.mxu0 0
  %2140 = vmatpush1.bf16.msra.mxu0 %v1322
  %2141 = vmatprep.subr.bf16.mxu0 0
  %2142 = vmatpush1.bf16.msra.mxu0 %v1323
  %2143 = vmatprep.subr.bf16.mxu0 0
  %2144 = vmatpush1.bf16.msra.mxu0 %v1324
  %2145 = vmatprep.subr.bf16.mxu0 0
  %2146 = vmatpush1.bf16.msra.mxu0 %v1325
  %2147 = vmatprep.subr.bf16.mxu0 0
  %2148 = vmatpush1.bf16.msra.mxu0 0
  %2149 = vmatprep.subr.bf16.mxu0 0
  %2150 = vmatpush1.bf16.msra.mxu0 0
  %2151 = vmatprep.subr.bf16.mxu0 0
  %2152 = vmatpush1.bf16.msra.mxu0 0
  %2153 = vmatprep.subr.bf16.mxu0 0
  %2154 = vmatpush1.bf16.msra.mxu0 0
  %2155 = vmatprep.subr.bf16.mxu0 0
  %2156 = vmatpush1.bf16.msra.mxu0 0
  %2157 = vmatprep.subr.bf16.mxu0 0
  %2158 = vmatpush1.bf16.msra.mxu0 0
  %2159 = vmatprep.subr.bf16.mxu0 0
  %2160 = vmatpush1.bf16.msra.mxu0 0
  %2161 = vmatprep.subr.bf16.mxu0 0
  %2162 = vmatpush1.bf16.msra.mxu0 0
  %2163 = vmatprep.mubr.bf16.mxu0 0
  %2164 = vmatmul.mubr.bf16.gmra.mrb[0].mxu0 %v1586
  %v2165 = vpop.f32.mrb[0].mxu0
  %v2166 = vadd.f32 %v2126, %v2165
  %v2167 = vpop.f32.mrb[0].mxu0
  %v2168 = vpop.f32.mrb[0].mxu0
  %v2169 = vpop.f32.mrb[0].mxu0
  %2170 = vdwg.mxu0
  %v2171 = vadd.f32 %v2166, %v235
  %v2172 = vmax.f32 %v2171, 0.0
  %v2173 = vpack.c.bf16 %v2172, %v2172
  %2174 = vmatprep.subr.bf16.mxu0 0
  %2175 = vmatpush1.bf16.msra.mxu0 %v1734
  %2176 = vmatprep.subr.bf16.mxu0 0
  %2177 = vmatpush1.bf16.msra.mxu0 %v1735
  %2178 = vmatprep.subr.bf16.mxu0 0
  %2179 = vmatpush1.bf16.msra.mxu0 %v1736
  %2180 = vmatprep.subr.bf16.mxu0 0
  %2181 = vmatpush1.bf16.msra.mxu0 %v1737
  %2182 = vmatprep.subr.bf16.mxu0 0
  %2183 = vmatpush1.bf16.msra.mxu0 %v1738
  %2184 = vmatprep.subr.bf16.mxu0 0
  %2185 = vmatpush1.bf16.msra.mxu0 %v1739
  %2186 = vmatprep.subr.bf16.mxu0 0
  %2187 = vmatpush1.bf16.msra.mxu0 %v1740
  %2188 = vmatprep.subr.bf16.mxu0 0
  %2189 = vmatpush1.bf16.msra.mxu0 %v1741
  %2190 = vmatprep.subr.bf16.mxu0 0
  %2191 = vmatpush1.bf16.msra.mxu0 0
  %2192 = vmatprep.subr.bf16.mxu0 0
  %2193 = vmatpush1.bf16.msra.mxu0 0
  %2194 = vmatprep.subr.bf16.mxu0 0
  %2195 = vmatpush1.bf16.msra.mxu0 0
  %2196 = vmatprep.subr.bf16.mxu0 0
  %2197 = vmatpush1.bf16.msra.mxu0 0
  %2198 = vmatprep.subr.bf16.mxu0 0
  %2199 = vmatpush1.bf16.msra.mxu0 0
  %2200 = vmatprep.subr.bf16.mxu0 0
  %2201 = vmatpush1.bf16.msra.mxu0 0
  %2202 = vmatprep.subr.bf16.mxu0 0
  %2203 = vmatpush1.bf16.msra.mxu0 0
  %2204 = vmatprep.subr.bf16.mxu0 0
  %2205 = vmatpush1.bf16.msra.mxu0 0
  %2206 = vmatprep.mubr.bf16.mxu0 0
  %2207 = vmatmul.mubr.bf16.gmra.mrb[0].mxu0 %v1880
  %v2208 = vpop.f32.mrb[0].mxu0
  %v2209 = vadd.f32 0.0, %v2208
  %v2210 = vpop.f32.mrb[0].mxu0
  %v2211 = vpop.f32.mrb[0].mxu0
  %v2212 = vpop.f32.mrb[0].mxu0
  %2213 = vdwg.mxu0
  %2214 = vmatprep.subr.bf16.mxu0 0
  %2215 = vmatpush1.bf16.msra.mxu0 %v1822
  %2216 = vmatprep.subr.bf16.mxu0 0
  %2217 = vmatpush1.bf16.msra.mxu0 %v1823
  %2218 = vmatprep.subr.bf16.mxu0 0
  %2219 = vmatpush1.bf16.msra.mxu0 %v1824
  %2220 = vmatprep.subr.bf16.mxu0 0
  %2221 = vmatpush1.bf16.msra.mxu0 %v1825
  %2222 = vmatprep.subr.bf16.mxu0 0
  %2223 = vmatpush1.bf16.msra.mxu0 %v1826
  %2224 = vmatprep.subr.bf16.mxu0 0
  %2225 = vmatpush1.bf16.msra.mxu0 %v1827
  %2226 = vmatprep.subr.bf16.mxu0 0
  %2227 = vmatpush1.bf16.msra.mxu0 %v1828
  %2228 = vmatprep.subr.bf16.mxu0 0
  %2229 = vmatpush1.bf16.msra.mxu0 %v1829
  %2230 = vmatprep.subr.bf16.mxu0 0
  %2231 = vmatpush1.bf16.msra.mxu0 0
  %2232 = vmatprep.subr.bf16.mxu0 0
  %2233 = vmatpush1.bf16.msra.mxu0 0
  %2234 = vmatprep.subr.bf16.mxu0 0
  %2235 = vmatpush1.bf16.msra.mxu0 0
  %2236 = vmatprep.subr.bf16.mxu0 0
  %2237 = vmatpush1.bf16.msra.mxu0 0
  %2238 = vmatprep.subr.bf16.mxu0 0
  %2239 = vmatpush1.bf16.msra.mxu0 0
  %2240 = vmatprep.subr.bf16.mxu0 0
  %2241 = vmatpush1.bf16.msra.mxu0 0
  %2242 = vmatprep.subr.bf16.mxu0 0
  %2243 = vmatpush1.bf16.msra.mxu0 0
  %2244 = vmatprep.subr.bf16.mxu0 0
  %2245 = vmatpush1.bf16.msra.mxu0 0
  %2246 = vmatprep.mubr.bf16.mxu0 0
  %2247 = vmatmul.mubr.bf16.gmra.mrb[0].mxu0 %v1669
  %v2248 = vpop.f32.mrb[0].mxu0
  %v2249 = vadd.f32 %v2209, %v2248
  %v2250 = vpop.f32.mrb[0].mxu0
  %v2251 = vpop.f32.mrb[0].mxu0
  %v2252 = vpop.f32.mrb[0].mxu0
  %2253 = vdwg.mxu0
  %v2254 = vadd.f32 %v2249, %v244
  %v2255 = vmax.f32 %v2254, 0.0
  %v2256 = vpack.c.bf16 %v2255, %v2255
  %v2257 = vld [vmem:[%s21] sm:$0xf]
  %v2258 = vld [vmem:[%s21 + $0x4] sm:$0xf]
  %v2259 = vld [vmem:[%s21 + $0x8] sm:$0xf]
  %v2260 = vld [vmem:[%s21 + $0xc] sm:$0xf]
  %v2261 = vld [vmem:[%s21 + $0x10] sm:$0xf]
  %v2262 = vld [vmem:[%s21 + $0x14] sm:$0xf]
  %v2263 = vld [vmem:[%s21 + $0x18] sm:$0xf]
  %v2264 = vld [vmem:[%s21 + $0x1c] sm:$0xf]
  %v2265 = vld [vmem:[%s21 + $0x20] sm:$0xf]
  %v2266 = vld [vmem:[%s21 + $0x24] sm:$0xf]
  %v2267 = vld [vmem:[%s21 + $0x28] sm:$0xf]
  %v2268 = vld [vmem:[%s21 + $0x2c] sm:$0xf]
  %v2269 = vld [vmem:[%s21 + $0x30] sm:$0xf]
  %v2270 = vld [vmem:[%s21 + $0x34] sm:$0xf]
  %v2271 = vld [vmem:[%s21 + $0x38] sm:$0xf]
  %v2272 = vld [vmem:[%s21 + $0x3c] sm:$0xf]
  %v2273 = vld [vmem:[%s22] sm:$0xf]
  %v2274 = vld [vmem:[%s22 + $0x4] sm:$0xf]
  %v2275 = vld [vmem:[%s22 + $0x8] sm:$0xf]
  %v2276 = vld [vmem:[%s22 + $0xc] sm:$0xf]
  %v2277 = vld [vmem:[%s22 + $0x10] sm:$0xf]
  %v2278 = vld [vmem:[%s22 + $0x14] sm:$0xf]
  %v2279 = vld [vmem:[%s22 + $0x18] sm:$0xf]
  %v2280 = vld [vmem:[%s22 + $0x1c] sm:$0xf]
  %v2281 = vld [vmem:[%s22 + $0x20] sm:$0xf]
  %v2282 = vld [vmem:[%s22 + $0x24] sm:$0xf]
  %v2283 = vld [vmem:[%s22 + $0x28] sm:$0xf]
  %v2284 = vld [vmem:[%s22 + $0x2c] sm:$0xf]
  %v2285 = vld [vmem:[%s22 + $0x30] sm:$0xf]
  %v2286 = vld [vmem:[%s22 + $0x34] sm:$0xf]
  %v2287 = vld [vmem:[%s22 + $0x38] sm:$0xf]
  %v2288 = vld [vmem:[%s22 + $0x3c] sm:$0xf]
  %v2305 = vunpack.c.l.b16 %v2273
  %v2306 = vunpack.c.l.b16 %v2274
  %v2307 = vunpack.c.l.b16 %v2275
  %v2308 = vunpack.c.l.b16 %v2276
  %v2309 = vunpack.c.l.b16 %v2277
  %v2310 = vunpack.c.l.b16 %v2278
  %v2311 = vunpack.c.l.b16 %v2279
  %v2312 = vunpack.c.l.b16 %v2280
  %v2313 = vunpack.c.l.b16 %v2281
  %v2314 = vunpack.c.l.b16 %v2282
  %v2315 = vunpack.c.l.b16 %v2283
  %v2316 = vunpack.c.l.b16 %v2284
  %v2317 = vunpack.c.l.b16 %v2285
  %v2318 = vunpack.c.l.b16 %v2286
  %v2319 = vunpack.c.l.b16 %v2287
  %v2320 = vunpack.c.l.b16 %v2288
  %v2321 = vpack.c.b16 %v2306, %v2305
  %v2322 = vpack.c.b16 %v2308, %v2307
  %v2323 = vpack.c.b16 %v2310, %v2309
  %v2324 = vpack.c.b16 %v2312, %v2311
  %v2325 = vpack.c.b16 %v2314, %v2313
  %v2326 = vpack.c.b16 %v2316, %v2315
  %v2327 = vpack.c.b16 %v2318, %v2317
  %v2328 = vpack.c.b16 %v2320, %v2319
  %2337 = vmatprep.subr.bf16.mxu0 0
  %2338 = vmatpush1.bf16.msra.mxu0 %v2321
  %2339 = vmatprep.subr.bf16.mxu0 0
  %2340 = vmatpush1.bf16.msra.mxu0 %v2322
  %2341 = vmatprep.subr.bf16.mxu0 0
  %2342 = vmatpush1.bf16.msra.mxu0 %v2323
  %2343 = vmatprep.subr.bf16.mxu0 0
  %2344 = vmatpush1.bf16.msra.mxu0 %v2324
  %2345 = vmatprep.subr.bf16.mxu0 0
  %2346 = vmatpush1.bf16.msra.mxu0 %v2325
  %2347 = vmatprep.subr.bf16.mxu0 0
  %2348 = vmatpush1.bf16.msra.mxu0 %v2326
  %2349 = vmatprep.subr.bf16.mxu0 0
  %2350 = vmatpush1.bf16.msra.mxu0 %v2327
  %2351 = vmatprep.subr.bf16.mxu0 0
  %2352 = vmatpush1.bf16.msra.mxu0 %v2328
  %2353 = vmatprep.subr.bf16.mxu0 0
  %2354 = vmatpush1.bf16.msra.mxu0 0
  %2355 = vmatprep.subr.bf16.mxu0 0
  %2356 = vmatpush1.bf16.msra.mxu0 0
  %2357 = vmatprep.subr.bf16.mxu0 0
  %2358 = vmatpush1.bf16.msra.mxu0 0
  %2359 = vmatprep.subr.bf16.mxu0 0
  %2360 = vmatpush1.bf16.msra.mxu0 0
  %2361 = vmatprep.subr.bf16.mxu0 0
  %2362 = vmatpush1.bf16.msra.mxu0 0
  %2363 = vmatprep.subr.bf16.mxu0 0
  %2364 = vmatpush1.bf16.msra.mxu0 0
  %2365 = vmatprep.subr.bf16.mxu0 0
  %2366 = vmatpush1.bf16.msra.mxu0 0
  %2367 = vmatprep.subr.bf16.mxu0 0
  %2368 = vmatpush1.bf16.msra.mxu0 0
  %2369 = vmatprep.mubr.bf16.mxu0 0
  %2370 = vmatmul.mubr.bf16.gmra.mrb[0].mxu0 0
  %v2371 = vpop.f32.mrb[0].mxu0
  %v2372 = vadd.f32 0.0, %v2371
  %v2373 = vpop.f32.mrb[0].mxu0
  %v2374 = vpop.f32.mrb[0].mxu0
  %v2375 = vpop.f32.mrb[0].mxu0
  %2376 = vdwg.mxu0
  %v2393 = vunpack.c.l.b16 %v2257
  %v2394 = vunpack.c.l.b16 %v2258
  %v2395 = vunpack.c.l.b16 %v2259
  %v2396 = vunpack.c.l.b16 %v2260
  %v2397 = vunpack.c.l.b16 %v2261
  %v2398 = vunpack.c.l.b16 %v2262
  %v2399 = vunpack.c.l.b16 %v2263
  %v2400 = vunpack.c.l.b16 %v2264
  %v2401 = vunpack.c.l.b16 %v2265
  %v2402 = vunpack.c.l.b16 %v2266
  %v2403 = vunpack.c.l.b16 %v2267
  %v2404 = vunpack.c.l.b16 %v2268
  %v2405 = vunpack.c.l.b16 %v2269
  %v2406 = vunpack.c.l.b16 %v2270
  %v2407 = vunpack.c.l.b16 %v2271
  %v2408 = vunpack.c.l.b16 %v2272
  %v2409 = vpack.c.b16 %v2394, %v2393
  %v2410 = vpack.c.b16 %v2396, %v2395
  %v2411 = vpack.c.b16 %v2398, %v2397
  %v2412 = vpack.c.b16 %v2400, %v2399
  %v2413 = vpack.c.b16 %v2402, %v2401
  %v2414 = vpack.c.b16 %v2404, %v2403
  %v2415 = vpack.c.b16 %v2406, %v2405
  %v2416 = vpack.c.b16 %v2408, %v2407
  %2425 = vmatprep.subr.bf16.mxu0 0
  %2426 = vmatpush1.bf16.msra.mxu0 %v2409
  %2427 = vmatprep.subr.bf16.mxu0 0
  %2428 = vmatpush1.bf16.msra.mxu0 %v2410
  %2429 = vmatprep.subr.bf16.mxu0 0
  %2430 = vmatpush1.bf16.msra.mxu0 %v2411
  %2431 = vmatprep.subr.bf16.mxu0 0
  %2432 = vmatpush1.bf16.msra.mxu0 %v2412
  %2433 = vmatprep.subr.bf16.mxu0 0
  %2434 = vmatpush1.bf16.msra.mxu0 %v2413
  %2435 = vmatprep.subr.bf16.mxu0 0
  %2436 = vmatpush1.bf16.msra.mxu0 %v2414
  %2437 = vmatprep.subr.bf16.mxu0 0
  %2438 = vmatpush1.bf16.msra.mxu0 %v2415
  %2439 = vmatprep.subr.bf16.mxu0 0
  %2440 = vmatpush1.bf16.msra.mxu0 %v2416
  %2441 = vmatprep.subr.bf16.mxu0 0
  %2442 = vmatpush1.bf16.msra.mxu0 0
  %2443 = vmatprep.subr.bf16.mxu0 0
  %2444 = vmatpush1.bf16.msra.mxu0 0
  %2445 = vmatprep.subr.bf16.mxu0 0
  %2446 = vmatpush1.bf16.msra.mxu0 0
  %2447 = vmatprep.subr.bf16.mxu0 0
  %2448 = vmatpush1.bf16.msra.mxu0 0
  %2449 = vmatprep.subr.bf16.mxu0 0
  %2450 = vmatpush1.bf16.msra.mxu0 0
  %2451 = vmatprep.subr.bf16.mxu0 0
  %2452 = vmatpush1.bf16.msra.mxu0 0
  %2453 = vmatprep.subr.bf16.mxu0 0
  %2454 = vmatpush1.bf16.msra.mxu0 0
  %2455 = vmatprep.subr.bf16.mxu0 0
  %2456 = vmatpush1.bf16.msra.mxu0 0
  %2457 = vmatprep.mubr.bf16.mxu0 0
  %2458 = vmatmul.mubr.bf16.gmra.mrb[0].mxu0 %v1880
  %v2459 = vpop.f32.mrb[0].mxu0
  %v2460 = vadd.f32 %v2372, %v2459
  %v2461 = vpop.f32.mrb[0].mxu0
  %v2462 = vpop.f32.mrb[0].mxu0
  %v2463 = vpop.f32.mrb[0].mxu0
  %2464 = vdwg.mxu0
  %v2465 = vadd.f32 %v2460, %v253
  %v2466 = vmax.f32 %v2465, 0.0
  %v2467 = vpack.c.bf16 %v2466, %v2466
  %2468 = vmatprep.subr.bf16.mxu0 0
  %2469 = vmatpush1.bf16.msra.mxu0 %v303
  %2470 = vmatprep.subr.bf16.mxu0 0
  %2471 = vmatpush1.bf16.msra.mxu0 %v304
  %2472 = vmatprep.subr.bf16.mxu0 0
  %2473 = vmatpush1.bf16.msra.mxu0 %v305
  %2474 = vmatprep.subr.bf16.mxu0 0
  %2475 = vmatpush1.bf16.msra.mxu0 %v306
  %2476 = vmatprep.subr.bf16.mxu0 0
  %2477 = vmatpush1.bf16.msra.mxu0 %v307
  %2478 = vmatprep.subr.bf16.mxu0 0
  %2479 = vmatpush1.bf16.msra.mxu0 %v308
  %2480 = vmatprep.subr.bf16.mxu0 0
  %2481 = vmatpush1.bf16.msra.mxu0 %v309
  %2482 = vmatprep.subr.bf16.mxu0 0
  %2483 = vmatpush1.bf16.msra.mxu0 %v310
  %2484 = vmatprep.subr.bf16.mxu0 0
  %2485 = vmatpush1.bf16.msra.mxu0 0
  %2486 = vmatprep.subr.bf16.mxu0 0
  %2487 = vmatpush1.bf16.msra.mxu0 0
  %2488 = vmatprep.subr.bf16.mxu0 0
  %2489 = vmatpush1.bf16.msra.mxu0 0
  %2490 = vmatprep.subr.bf16.mxu0 0
  %2491 = vmatpush1.bf16.msra.mxu0 0
  %2492 = vmatprep.subr.bf16.mxu0 0
  %2493 = vmatpush1.bf16.msra.mxu0 0
  %2494 = vmatprep.subr.bf16.mxu0 0
  %2495 = vmatpush1.bf16.msra.mxu0 0
  %2496 = vmatprep.subr.bf16.mxu0 0
  %2497 = vmatpush1.bf16.msra.mxu0 0
  %2498 = vmatprep.subr.bf16.mxu0 0
  %2499 = vmatpush1.bf16.msra.mxu0 0
  %2500 = vmatprep.mubr.bf16.mxu0 0
  %2501 = vmatmul.mubr.bf16.gmra.mrb[0].mxu0 %v1924
  %v2502 = vpop.f32.mrb[0].mxu0
  %v2503 = vadd.f32 0.0, %v2502
  %v2504 = vpop.f32.mrb[0].mxu0
  %v2505 = vpop.f32.mrb[0].mxu0
  %v2506 = vpop.f32.mrb[0].mxu0
  %2507 = vdwg.mxu0
  %v2508 = vadd.f32 %v195, %v2503
  %v2509 = vadd.f32 %v2508, %v208
  %v2510 = vmax.f32 %v2509, 0.0
  %v2511 = vpack.c.bf16 %v2510, %v2510
  %2512 = vmatprep.subr.bf16.mxu0 0
  %2513 = vmatpush1.bf16.msra.mxu0 %v471
  %2514 = vmatprep.subr.bf16.mxu0 0
  %2515 = vmatpush1.bf16.msra.mxu0 %v472
  %2516 = vmatprep.subr.bf16.mxu0 0
  %2517 = vmatpush1.bf16.msra.mxu0 %v473
  %2518 = vmatprep.subr.bf16.mxu0 0
  %2519 = vmatpush1.bf16.msra.mxu0 %v474
  %2520 = vmatprep.subr.bf16.mxu0 0
  %2521 = vmatpush1.bf16.msra.mxu0 %v475
  %2522 = vmatprep.subr.bf16.mxu0 0
  %2523 = vmatpush1.bf16.msra.mxu0 %v476
  %2524 = vmatprep.subr.bf16.mxu0 0
  %2525 = vmatpush1.bf16.msra.mxu0 %v477
  %2526 = vmatprep.subr.bf16.mxu0 0
  %2527 = vmatpush1.bf16.msra.mxu0 %v478
  %2528 = vmatprep.subr.bf16.mxu0 0
  %2529 = vmatpush1.bf16.msra.mxu0 0
  %2530 = vmatprep.subr.bf16.mxu0 0
  %2531 = vmatpush1.bf16.msra.mxu0 0
  %2532 = vmatprep.subr.bf16.mxu0 0
  %2533 = vmatpush1.bf16.msra.mxu0 0
  %2534 = vmatprep.subr.bf16.mxu0 0
  %2535 = vmatpush1.bf16.msra.mxu0 0
  %2536 = vmatprep.subr.bf16.mxu0 0
  %2537 = vmatpush1.bf16.msra.mxu0 0
  %2538 = vmatprep.subr.bf16.mxu0 0
  %2539 = vmatpush1.bf16.msra.mxu0 0
  %2540 = vmatprep.subr.bf16.mxu0 0
  %2541 = vmatpush1.bf16.msra.mxu0 0
  %2542 = vmatprep.subr.bf16.mxu0 0
  %2543 = vmatpush1.bf16.msra.mxu0 0
  %2544 = vmatprep.mubr.bf16.mxu0 0
  %2545 = vmatmul.mubr.bf16.gmra.mrb[0].mxu0 %v2007
  %v2546 = vpop.f32.mrb[0].mxu0
  %v2547 = vadd.f32 0.0, %v2546
  %v2548 = vpop.f32.mrb[0].mxu0
  %v2549 = vpop.f32.mrb[0].mxu0
  %v2550 = vpop.f32.mrb[0].mxu0
  %2551 = vdwg.mxu0
  %2552 = vmatprep.subr.bf16.mxu0 0
  %2553 = vmatpush1.bf16.msra.mxu0 %v559
  %2554 = vmatprep.subr.bf16.mxu0 0
  %2555 = vmatpush1.bf16.msra.mxu0 %v560
  %2556 = vmatprep.subr.bf16.mxu0 0
  %2557 = vmatpush1.bf16.msra.mxu0 %v561
  %2558 = vmatprep.subr.bf16.mxu0 0
  %2559 = vmatpush1.bf16.msra.mxu0 %v562
  %2560 = vmatprep.subr.bf16.mxu0 0
  %2561 = vmatpush1.bf16.msra.mxu0 %v563
  %2562 = vmatprep.subr.bf16.mxu0 0
  %2563 = vmatpush1.bf16.msra.mxu0 %v564
  %2564 = vmatprep.subr.bf16.mxu0 0
  %2565 = vmatpush1.bf16.msra.mxu0 %v565
  %2566 = vmatprep.subr.bf16.mxu0 0
  %2567 = vmatpush1.bf16.msra.mxu0 %v566
  %2568 = vmatprep.subr.bf16.mxu0 0
  %2569 = vmatpush1.bf16.msra.mxu0 0
  %2570 = vmatprep.subr.bf16.mxu0 0
  %2571 = vmatpush1.bf16.msra.mxu0 0
  %2572 = vmatprep.subr.bf16.mxu0 0
  %2573 = vmatpush1.bf16.msra.mxu0 0
  %2574 = vmatprep.subr.bf16.mxu0 0
  %2575 = vmatpush1.bf16.msra.mxu0 0
  %2576 = vmatprep.subr.bf16.mxu0 0
  %2577 = vmatpush1.bf16.msra.mxu0 0
  %2578 = vmatprep.subr.bf16.mxu0 0
  %2579 = vmatpush1.bf16.msra.mxu0 0
  %2580 = vmatprep.subr.bf16.mxu0 0
  %2581 = vmatpush1.bf16.msra.mxu0 0
  %2582 = vmatprep.subr.bf16.mxu0 0
  %2583 = vmatpush1.bf16.msra.mxu0 0
  %2584 = vmatprep.mubr.bf16.mxu0 0
  %2585 = vmatmul.mubr.bf16.gmra.mrb[0].mxu0 %v1924
  %v2586 = vpop.f32.mrb[0].mxu0
  %v2587 = vadd.f32 %v2547, %v2586
  %v2588 = vpop.f32.mrb[0].mxu0
  %v2589 = vpop.f32.mrb[0].mxu0
  %v2590 = vpop.f32.mrb[0].mxu0
  %2591 = vdwg.mxu0
  %v2592 = vadd.f32 %v2587, %v217
  %v2593 = vmax.f32 %v2592, 0.0
  %v2594 = vpack.c.bf16 %v2593, %v2593
  %2595 = vmatprep.subr.bf16.mxu0 0
  %2596 = vmatpush1.bf16.msra.mxu0 %v809
  %2597 = vmatprep.subr.bf16.mxu0 0
  %2598 = vmatpush1.bf16.msra.mxu0 %v810
  %2599 = vmatprep.subr.bf16.mxu0 0
  %2600 = vmatpush1.bf16.msra.mxu0 %v811
  %2601 = vmatprep.subr.bf16.mxu0 0
  %2602 = vmatpush1.bf16.msra.mxu0 %v812
  %2603 = vmatprep.subr.bf16.mxu0 0
  %2604 = vmatpush1.bf16.msra.mxu0 %v813
  %2605 = vmatprep.subr.bf16.mxu0 0
  %2606 = vmatpush1.bf16.msra.mxu0 %v814
  %2607 = vmatprep.subr.bf16.mxu0 0
  %2608 = vmatpush1.bf16.msra.mxu0 %v815
  %2609 = vmatprep.subr.bf16.mxu0 0
  %2610 = vmatpush1.bf16.msra.mxu0 %v816
  %2611 = vmatprep.subr.bf16.mxu0 0
  %2612 = vmatpush1.bf16.msra.mxu0 0
  %2613 = vmatprep.subr.bf16.mxu0 0
  %2614 = vmatpush1.bf16.msra.mxu0 0
  %2615 = vmatprep.subr.bf16.mxu0 0
  %2616 = vmatpush1.bf16.msra.mxu0 0
  %2617 = vmatprep.subr.bf16.mxu0 0
  %2618 = vmatpush1.bf16.msra.mxu0 0
  %2619 = vmatprep.subr.bf16.mxu0 0
  %2620 = vmatpush1.bf16.msra.mxu0 0
  %2621 = vmatprep.subr.bf16.mxu0 0
  %2622 = vmatpush1.bf16.msra.mxu0 0
  %2623 = vmatprep.subr.bf16.mxu0 0
  %2624 = vmatpush1.bf16.msra.mxu0 0
  %2625 = vmatprep.subr.bf16.mxu0 0
  %2626 = vmatpush1.bf16.msra.mxu0 0
  %2627 = vmatprep.mubr.bf16.mxu0 0
  %2628 = vmatmul.mubr.bf16.gmra.mrb[0].mxu0 %v2090
  %v2629 = vpop.f32.mrb[0].mxu0
  %v2630 = vadd.f32 0.0, %v2629
  %v2631 = vpop.f32.mrb[0].mxu0
  %v2632 = vpop.f32.mrb[0].mxu0
  %v2633 = vpop.f32.mrb[0].mxu0
  %2634 = vdwg.mxu0
  %2635 = vmatprep.subr.bf16.mxu0 0
  %2636 = vmatpush1.bf16.msra.mxu0 %v897
  %2637 = vmatprep.subr.bf16.mxu0 0
  %2638 = vmatpush1.bf16.msra.mxu0 %v898
  %2639 = vmatprep.subr.bf16.mxu0 0
  %2640 = vmatpush1.bf16.msra.mxu0 %v899
  %2641 = vmatprep.subr.bf16.mxu0 0
  %2642 = vmatpush1.bf16.msra.mxu0 %v900
  %2643 = vmatprep.subr.bf16.mxu0 0
  %2644 = vmatpush1.bf16.msra.mxu0 %v901
  %2645 = vmatprep.subr.bf16.mxu0 0
  %2646 = vmatpush1.bf16.msra.mxu0 %v902
  %2647 = vmatprep.subr.bf16.mxu0 0
  %2648 = vmatpush1.bf16.msra.mxu0 %v903
  %2649 = vmatprep.subr.bf16.mxu0 0
  %2650 = vmatpush1.bf16.msra.mxu0 %v904
  %2651 = vmatprep.subr.bf16.mxu0 0
  %2652 = vmatpush1.bf16.msra.mxu0 0
  %2653 = vmatprep.subr.bf16.mxu0 0
  %2654 = vmatpush1.bf16.msra.mxu0 0
  %2655 = vmatprep.subr.bf16.mxu0 0
  %2656 = vmatpush1.bf16.msra.mxu0 0
  %2657 = vmatprep.subr.bf16.mxu0 0
  %2658 = vmatpush1.bf16.msra.mxu0 0
  %2659 = vmatprep.subr.bf16.mxu0 0
  %2660 = vmatpush1.bf16.msra.mxu0 0
  %2661 = vmatprep.subr.bf16.mxu0 0
  %2662 = vmatpush1.bf16.msra.mxu0 0
  %2663 = vmatprep.subr.bf16.mxu0 0
  %2664 = vmatpush1.bf16.msra.mxu0 0
  %2665 = vmatprep.subr.bf16.mxu0 0
  %2666 = vmatpush1.bf16.msra.mxu0 0
  %2667 = vmatprep.mubr.bf16.mxu0 0
  %2668 = vmatmul.mubr.bf16.gmra.mrb[0].mxu0 %v2007
  %v2669 = vpop.f32.mrb[0].mxu0
  %v2670 = vadd.f32 %v2630, %v2669
  %v2671 = vpop.f32.mrb[0].mxu0
  %v2672 = vpop.f32.mrb[0].mxu0
  %v2673 = vpop.f32.mrb[0].mxu0
  %2674 = vdwg.mxu0
  %v2675 = vadd.f32 %v2670, %v226
  %v2676 = vmax.f32 %v2675, 0.0
  %v2677 = vpack.c.bf16 %v2676, %v2676
  %2678 = vmatprep.subr.bf16.mxu0 0
  %2679 = vmatpush1.bf16.msra.mxu0 %v1230
  %2680 = vmatprep.subr.bf16.mxu0 0
  %2681 = vmatpush1.bf16.msra.mxu0 %v1231
  %2682 = vmatprep.subr.bf16.mxu0 0
  %2683 = vmatpush1.bf16.msra.mxu0 %v1232
  %2684 = vmatprep.subr.bf16.mxu0 0
  %2685 = vmatpush1.bf16.msra.mxu0 %v1233
  %2686 = vmatprep.subr.bf16.mxu0 0
  %2687 = vmatpush1.bf16.msra.mxu0 %v1234
  %2688 = vmatprep.subr.bf16.mxu0 0
  %2689 = vmatpush1.bf16.msra.mxu0 %v1235
  %2690 = vmatprep.subr.bf16.mxu0 0
  %2691 = vmatpush1.bf16.msra.mxu0 %v1236
  %2692 = vmatprep.subr.bf16.mxu0 0
  %2693 = vmatpush1.bf16.msra.mxu0 %v1237
  %2694 = vmatprep.subr.bf16.mxu0 0
  %2695 = vmatpush1.bf16.msra.mxu0 0
  %2696 = vmatprep.subr.bf16.mxu0 0
  %2697 = vmatpush1.bf16.msra.mxu0 0
  %2698 = vmatprep.subr.bf16.mxu0 0
  %2699 = vmatpush1.bf16.msra.mxu0 0
  %2700 = vmatprep.subr.bf16.mxu0 0
  %2701 = vmatpush1.bf16.msra.mxu0 0
  %2702 = vmatprep.subr.bf16.mxu0 0
  %2703 = vmatpush1.bf16.msra.mxu0 0
  %2704 = vmatprep.subr.bf16.mxu0 0
  %2705 = vmatpush1.bf16.msra.mxu0 0
  %2706 = vmatprep.subr.bf16.mxu0 0
  %2707 = vmatpush1.bf16.msra.mxu0 0
  %2708 = vmatprep.subr.bf16.mxu0 0
  %2709 = vmatpush1.bf16.msra.mxu0 0
  %2710 = vmatprep.mubr.bf16.mxu0 0
  %2711 = vmatmul.mubr.bf16.gmra.mrb[0].mxu0 %v2173
  %v2712 = vpop.f32.mrb[0].mxu0
  %v2713 = vadd.f32 0.0, %v2712
  %v2714 = vpop.f32.mrb[0].mxu0
  %v2715 = vpop.f32.mrb[0].mxu0
  %v2716 = vpop.f32.mrb[0].mxu0
  %2717 = vdwg.mxu0
  %2718 = vmatprep.subr.bf16.mxu0 0
  %2719 = vmatpush1.bf16.msra.mxu0 %v1318
  %2720 = vmatprep.subr.bf16.mxu0 0
  %2721 = vmatpush1.bf16.msra.mxu0 %v1319
  %2722 = vmatprep.subr.bf16.mxu0 0
  %2723 = vmatpush1.bf16.msra.mxu0 %v1320
  %2724 = vmatprep.subr.bf16.mxu0 0
  %2725 = vmatpush1.bf16.msra.mxu0 %v1321
  %2726 = vmatprep.subr.bf16.mxu0 0
  %2727 = vmatpush1.bf16.msra.mxu0 %v1322
  %2728 = vmatprep.subr.bf16.mxu0 0
  %2729 = vmatpush1.bf16.msra.mxu0 %v1323
  %2730 = vmatprep.subr.bf16.mxu0 0
  %2731 = vmatpush1.bf16.msra.mxu0 %v1324
  %2732 = vmatprep.subr.bf16.mxu0 0
  %2733 = vmatpush1.bf16.msra.mxu0 %v1325
  %2734 = vmatprep.subr.bf16.mxu0 0
  %2735 = vmatpush1.bf16.msra.mxu0 0
  %2736 = vmatprep.subr.bf16.mxu0 0
  %2737 = vmatpush1.bf16.msra.mxu0 0
  %2738 = vmatprep.subr.bf16.mxu0 0
  %2739 = vmatpush1.bf16.msra.mxu0 0
  %2740 = vmatprep.subr.bf16.mxu0 0
  %2741 = vmatpush1.bf16.msra.mxu0 0
  %2742 = vmatprep.subr.bf16.mxu0 0
  %2743 = vmatpush1.bf16.msra.mxu0 0
  %2744 = vmatprep.subr.bf16.mxu0 0
  %2745 = vmatpush1.bf16.msra.mxu0 0
  %2746 = vmatprep.subr.bf16.mxu0 0
  %2747 = vmatpush1.bf16.msra.mxu0 0
  %2748 = vmatprep.subr.bf16.mxu0 0
  %2749 = vmatpush1.bf16.msra.mxu0 0
  %2750 = vmatprep.mubr.bf16.mxu0 0
  %2751 = vmatmul.mubr.bf16.gmra.mrb[0].mxu0 %v2090
  %v2752 = vpop.f32.mrb[0].mxu0
  %v2753 = vadd.f32 %v2713, %v2752
  %v2754 = vpop.f32.mrb[0].mxu0
  %v2755 = vpop.f32.mrb[0].mxu0
  %v2756 = vpop.f32.mrb[0].mxu0
  %2757 = vdwg.mxu0
  %v2758 = vadd.f32 %v2753, %v235
  %v2759 = vmax.f32 %v2758, 0.0
  %v2760 = vpack.c.bf16 %v2759, %v2759
  %2761 = vmatprep.subr.bf16.mxu0 0
  %2762 = vmatpush1.bf16.msra.mxu0 %v1734
  %2763 = vmatprep.subr.bf16.mxu0 0
  %2764 = vmatpush1.bf16.msra.mxu0 %v1735
  %2765 = vmatprep.subr.bf16.mxu0 0
  %2766 = vmatpush1.bf16.msra.mxu0 %v1736
  %2767 = vmatprep.subr.bf16.mxu0 0
  %2768 = vmatpush1.bf16.msra.mxu0 %v1737
  %2769 = vmatprep.subr.bf16.mxu0 0
  %2770 = vmatpush1.bf16.msra.mxu0 %v1738
  %2771 = vmatprep.subr.bf16.mxu0 0
  %2772 = vmatpush1.bf16.msra.mxu0 %v1739
  %2773 = vmatprep.subr.bf16.mxu0 0
  %2774 = vmatpush1.bf16.msra.mxu0 %v1740
  %2775 = vmatprep.subr.bf16.mxu0 0
  %2776 = vmatpush1.bf16.msra.mxu0 %v1741
  %2777 = vmatprep.subr.bf16.mxu0 0
  %2778 = vmatpush1.bf16.msra.mxu0 0
  %2779 = vmatprep.subr.bf16.mxu0 0
  %2780 = vmatpush1.bf16.msra.mxu0 0
  %2781 = vmatprep.subr.bf16.mxu0 0
  %2782 = vmatpush1.bf16.msra.mxu0 0
  %2783 = vmatprep.subr.bf16.mxu0 0
  %2784 = vmatpush1.bf16.msra.mxu0 0
  %2785 = vmatprep.subr.bf16.mxu0 0
  %2786 = vmatpush1.bf16.msra.mxu0 0
  %2787 = vmatprep.subr.bf16.mxu0 0
  %2788 = vmatpush1.bf16.msra.mxu0 0
  %2789 = vmatprep.subr.bf16.mxu0 0
  %2790 = vmatpush1.bf16.msra.mxu0 0
  %2791 = vmatprep.subr.bf16.mxu0 0
  %2792 = vmatpush1.bf16.msra.mxu0 0
  %2793 = vmatprep.mubr.bf16.mxu0 0
  %2794 = vmatmul.mubr.bf16.gmra.mrb[0].mxu0 %v2256
  %v2795 = vpop.f32.mrb[0].mxu0
  %v2796 = vadd.f32 0.0, %v2795
  %v2797 = vpop.f32.mrb[0].mxu0
  %v2798 = vpop.f32.mrb[0].mxu0
  %v2799 = vpop.f32.mrb[0].mxu0
  %2800 = vdwg.mxu0
  %2801 = vmatprep.subr.bf16.mxu0 0
  %2802 = vmatpush1.bf16.msra.mxu0 %v1822
  %2803 = vmatprep.subr.bf16.mxu0 0
  %2804 = vmatpush1.bf16.msra.mxu0 %v1823
  %2805 = vmatprep.subr.bf16.mxu0 0
  %2806 = vmatpush1.bf16.msra.mxu0 %v1824
  %2807 = vmatprep.subr.bf16.mxu0 0
  %2808 = vmatpush1.bf16.msra.mxu0 %v1825
  %2809 = vmatprep.subr.bf16.mxu0 0
  %2810 = vmatpush1.bf16.msra.mxu0 %v1826
  %2811 = vmatprep.subr.bf16.mxu0 0
  %2812 = vmatpush1.bf16.msra.mxu0 %v1827
  %2813 = vmatprep.subr.bf16.mxu0 0
  %2814 = vmatpush1.bf16.msra.mxu0 %v1828
  %2815 = vmatprep.subr.bf16.mxu0 0
  %2816 = vmatpush1.bf16.msra.mxu0 %v1829
  %2817 = vmatprep.subr.bf16.mxu0 0
  %2818 = vmatpush1.bf16.msra.mxu0 0
  %2819 = vmatprep.subr.bf16.mxu0 0
  %2820 = vmatpush1.bf16.msra.mxu0 0
  %2821 = vmatprep.subr.bf16.mxu0 0
  %2822 = vmatpush1.bf16.msra.mxu0 0
  %2823 = vmatprep.subr.bf16.mxu0 0
  %2824 = vmatpush1.bf16.msra.mxu0 0
  %2825 = vmatprep.subr.bf16.mxu0 0
  %2826 = vmatpush1.bf16.msra.mxu0 0
  %2827 = vmatprep.subr.bf16.mxu0 0
  %2828 = vmatpush1.bf16.msra.mxu0 0
  %2829 = vmatprep.subr.bf16.mxu0 0
  %2830 = vmatpush1.bf16.msra.mxu0 0
  %2831 = vmatprep.subr.bf16.mxu0 0
  %2832 = vmatpush1.bf16.msra.mxu0 0
  %2833 = vmatprep.mubr.bf16.mxu0 0
  %2834 = vmatmul.mubr.bf16.gmra.mrb[0].mxu0 %v2173
  %v2835 = vpop.f32.mrb[0].mxu0
  %v2836 = vadd.f32 %v2796, %v2835
  %v2837 = vpop.f32.mrb[0].mxu0
  %v2838 = vpop.f32.mrb[0].mxu0
  %v2839 = vpop.f32.mrb[0].mxu0
  %2840 = vdwg.mxu0
  %v2841 = vadd.f32 %v2836, %v244
  %v2842 = vmax.f32 %v2841, 0.0
  %v2843 = vpack.c.bf16 %v2842, %v2842
  %2844 = vmatprep.subr.bf16.mxu0 0
  %2845 = vmatpush1.bf16.msra.mxu0 %v2321
  %2846 = vmatprep.subr.bf16.mxu0 0
  %2847 = vmatpush1.bf16.msra.mxu0 %v2322
  %2848 = vmatprep.subr.bf16.mxu0 0
  %2849 = vmatpush1.bf16.msra.mxu0 %v2323
  %2850 = vmatprep.subr.bf16.mxu0 0
  %2851 = vmatpush1.bf16.msra.mxu0 %v2324
  %2852 = vmatprep.subr.bf16.mxu0 0
  %2853 = vmatpush1.bf16.msra.mxu0 %v2325
  %2854 = vmatprep.subr.bf16.mxu0 0
  %2855 = vmatpush1.bf16.msra.mxu0 %v2326
  %2856 = vmatprep.subr.bf16.mxu0 0
  %2857 = vmatpush1.bf16.msra.mxu0 %v2327
  %2858 = vmatprep.subr.bf16.mxu0 0
  %2859 = vmatpush1.bf16.msra.mxu0 %v2328
  %2860 = vmatprep.subr.bf16.mxu0 0
  %2861 = vmatpush1.bf16.msra.mxu0 0
  %2862 = vmatprep.subr.bf16.mxu0 0
  %2863 = vmatpush1.bf16.msra.mxu0 0
  %2864 = vmatprep.subr.bf16.mxu0 0
  %2865 = vmatpush1.bf16.msra.mxu0 0
  %2866 = vmatprep.subr.bf16.mxu0 0
  %2867 = vmatpush1.bf16.msra.mxu0 0
  %2868 = vmatprep.subr.bf16.mxu0 0
  %2869 = vmatpush1.bf16.msra.mxu0 0
  %2870 = vmatprep.subr.bf16.mxu0 0
  %2871 = vmatpush1.bf16.msra.mxu0 0
  %2872 = vmatprep.subr.bf16.mxu0 0
  %2873 = vmatpush1.bf16.msra.mxu0 0
  %2874 = vmatprep.subr.bf16.mxu0 0
  %2875 = vmatpush1.bf16.msra.mxu0 0
  %2876 = vmatprep.mubr.bf16.mxu0 0
  %2877 = vmatmul.mubr.bf16.gmra.mrb[0].mxu0 %v2467
  %v2878 = vpop.f32.mrb[0].mxu0
  %v2879 = vadd.f32 0.0, %v2878
  %v2880 = vpop.f32.mrb[0].mxu0
  %v2881 = vpop.f32.mrb[0].mxu0
  %v2882 = vpop.f32.mrb[0].mxu0
  %2883 = vdwg.mxu0
  %2884 = vmatprep.subr.bf16.mxu0 0
  %2885 = vmatpush1.bf16.msra.mxu0 %v2409
  %2886 = vmatprep.subr.bf16.mxu0 0
  %2887 = vmatpush1.bf16.msra.mxu0 %v2410
  %2888 = vmatprep.subr.bf16.mxu0 0
  %2889 = vmatpush1.bf16.msra.mxu0 %v2411
  %2890 = vmatprep.subr.bf16.mxu0 0
  %2891 = vmatpush1.bf16.msra.mxu0 %v2412
  %2892 = vmatprep.subr.bf16.mxu0 0
  %2893 = vmatpush1.bf16.msra.mxu0 %v2413
  %2894 = vmatprep.subr.bf16.mxu0 0
  %2895 = vmatpush1.bf16.msra.mxu0 %v2414
  %2896 = vmatprep.subr.bf16.mxu0 0
  %2897 = vmatpush1.bf16.msra.mxu0 %v2415
  %2898 = vmatprep.subr.bf16.mxu0 0
  %2899 = vmatpush1.bf16.msra.mxu0 %v2416
  %2900 = vmatprep.subr.bf16.mxu0 0
  %2901 = vmatpush1.bf16.msra.mxu0 0
  %2902 = vmatprep.subr.bf16.mxu0 0
  %2903 = vmatpush1.bf16.msra.mxu0 0
  %2904 = vmatprep.subr.bf16.mxu0 0
  %2905 = vmatpush1.bf16.msra.mxu0 0
  %2906 = vmatprep.subr.bf16.mxu0 0
  %2907 = vmatpush1.bf16.msra.mxu0 0
  %2908 = vmatprep.subr.bf16.mxu0 0
  %2909 = vmatpush1.bf16.msra.mxu0 0
  %2910 = vmatprep.subr.bf16.mxu0 0
  %2911 = vmatpush1.bf16.msra.mxu0 0
  %2912 = vmatprep.subr.bf16.mxu0 0
  %2913 = vmatpush1.bf16.msra.mxu0 0
  %2914 = vmatprep.subr.bf16.mxu0 0
  %2915 = vmatpush1.bf16.msra.mxu0 0
  %2916 = vmatprep.mubr.bf16.mxu0 0
  %2917 = vmatmul.mubr.bf16.gmra.mrb[0].mxu0 %v2256
  %v2918 = vpop.f32.mrb[0].mxu0
  %v2919 = vadd.f32 %v2879, %v2918
  %v2920 = vpop.f32.mrb[0].mxu0
  %v2921 = vpop.f32.mrb[0].mxu0
  %v2922 = vpop.f32.mrb[0].mxu0
  %2923 = vdwg.mxu0
  %v2924 = vadd.f32 %v2919, %v253
  %v2925 = vmax.f32 %v2924, 0.0
  %v2926 = vpack.c.bf16 %v2925, %v2925
  %2927 = vmatprep.subr.bf16.mxu0 0
  %2928 = vmatpush1.bf16.msra.mxu0 %v303
  %2929 = vmatprep.subr.bf16.mxu0 0
  %2930 = vmatpush1.bf16.msra.mxu0 %v304
  %2931 = vmatprep.subr.bf16.mxu0 0
  %2932 = vmatpush1.bf16.msra.mxu0 %v305
  %2933 = vmatprep.subr.bf16.mxu0 0
  %2934 = vmatpush1.bf16.msra.mxu0 %v306
  %2935 = vmatprep.subr.bf16.mxu0 0
  %2936 = vmatpush1.bf16.msra.mxu0 %v307
  %2937 = vmatprep.subr.bf16.mxu0 0
  %2938 = vmatpush1.bf16.msra.mxu0 %v308
  %2939 = vmatprep.subr.bf16.mxu0 0
  %2940 = vmatpush1.bf16.msra.mxu0 %v309
  %2941 = vmatprep.subr.bf16.mxu0 0
  %2942 = vmatpush1.bf16.msra.mxu0 %v310
  %2943 = vmatprep.subr.bf16.mxu0 0
  %2944 = vmatpush1.bf16.msra.mxu0 0
  %2945 = vmatprep.subr.bf16.mxu0 0
  %2946 = vmatpush1.bf16.msra.mxu0 0
  %2947 = vmatprep.subr.bf16.mxu0 0
  %2948 = vmatpush1.bf16.msra.mxu0 0
  %2949 = vmatprep.subr.bf16.mxu0 0
  %2950 = vmatpush1.bf16.msra.mxu0 0
  %2951 = vmatprep.subr.bf16.mxu0 0
  %2952 = vmatpush1.bf16.msra.mxu0 0
  %2953 = vmatprep.subr.bf16.mxu0 0
  %2954 = vmatpush1.bf16.msra.mxu0 0
  %2955 = vmatprep.subr.bf16.mxu0 0
  %2956 = vmatpush1.bf16.msra.mxu0 0
  %2957 = vmatprep.subr.bf16.mxu0 0
  %2958 = vmatpush1.bf16.msra.mxu0 0
  %2959 = vmatprep.mubr.bf16.mxu0 0
  %2960 = vmatmul.mubr.bf16.gmra.mrb[0].mxu0 %v2511
  %v2961 = vpop.f32.mrb[0].mxu0
  %v2962 = vadd.f32 0.0, %v2961
  %v2963 = vpop.f32.mrb[0].mxu0
  %v2964 = vpop.f32.mrb[0].mxu0
  %v2965 = vpop.f32.mrb[0].mxu0
  %2966 = vdwg.mxu0
  %v2967 = vadd.f32 %v198, %v2962
  %v2968 = vadd.f32 %v2967, %v208
  %v2969 = vmax.f32 %v2968, 0.0
  %v2970 = vpack.c.bf16 %v2969, %v2969
  %2971 = vmatprep.subr.bf16.mxu0 0
  %2972 = vmatpush1.bf16.msra.mxu0 %v471
  %2973 = vmatprep.subr.bf16.mxu0 0
  %2974 = vmatpush1.bf16.msra.mxu0 %v472
  %2975 = vmatprep.subr.bf16.mxu0 0
  %2976 = vmatpush1.bf16.msra.mxu0 %v473
  %2977 = vmatprep.subr.bf16.mxu0 0
  %2978 = vmatpush1.bf16.msra.mxu0 %v474
  %2979 = vmatprep.subr.bf16.mxu0 0
  %2980 = vmatpush1.bf16.msra.mxu0 %v475
  %2981 = vmatprep.subr.bf16.mxu0 0
  %2982 = vmatpush1.bf16.msra.mxu0 %v476
  %2983 = vmatprep.subr.bf16.mxu0 0
  %2984 = vmatpush1.bf16.msra.mxu0 %v477
  %2985 = vmatprep.subr.bf16.mxu0 0
  %2986 = vmatpush1.bf16.msra.mxu0 %v478
  %2987 = vmatprep.subr.bf16.mxu0 0
  %2988 = vmatpush1.bf16.msra.mxu0 0
  %2989 = vmatprep.subr.bf16.mxu0 0
  %2990 = vmatpush1.bf16.msra.mxu0 0
  %2991 = vmatprep.subr.bf16.mxu0 0
  %2992 = vmatpush1.bf16.msra.mxu0 0
  %2993 = vmatprep.subr.bf16.mxu0 0
  %2994 = vmatpush1.bf16.msra.mxu0 0
  %2995 = vmatprep.subr.bf16.mxu0 0
  %2996 = vmatpush1.bf16.msra.mxu0 0
  %2997 = vmatprep.subr.bf16.mxu0 0
  %2998 = vmatpush1.bf16.msra.mxu0 0
  %2999 = vmatprep.subr.bf16.mxu0 0
  %3000 = vmatpush1.bf16.msra.mxu0 0
  %3001 = vmatprep.subr.bf16.mxu0 0
  %3002 = vmatpush1.bf16.msra.mxu0 0
  %3003 = vmatprep.mubr.bf16.mxu0 0
  %3004 = vmatmul.mubr.bf16.gmra.mrb[0].mxu0 %v2594
  %v3005 = vpop.f32.mrb[0].mxu0
  %v3006 = vadd.f32 0.0, %v3005
  %v3007 = vpop.f32.mrb[0].mxu0
  %v3008 = vpop.f32.mrb[0].mxu0
  %v3009 = vpop.f32.mrb[0].mxu0
  %3010 = vdwg.mxu0
  %3011 = vmatprep.subr.bf16.mxu0 0
  %3012 = vmatpush1.bf16.msra.mxu0 %v559
  %3013 = vmatprep.subr.bf16.mxu0 0
  %3014 = vmatpush1.bf16.msra.mxu0 %v560
  %3015 = vmatprep.subr.bf16.mxu0 0
  %3016 = vmatpush1.bf16.msra.mxu0 %v561
  %3017 = vmatprep.subr.bf16.mxu0 0
  %3018 = vmatpush1.bf16.msra.mxu0 %v562
  %3019 = vmatprep.subr.bf16.mxu0 0
  %3020 = vmatpush1.bf16.msra.mxu0 %v563
  %3021 = vmatprep.subr.bf16.mxu0 0
  %3022 = vmatpush1.bf16.msra.mxu0 %v564
  %3023 = vmatprep.subr.bf16.mxu0 0
  %3024 = vmatpush1.bf16.msra.mxu0 %v565
  %3025 = vmatprep.subr.bf16.mxu0 0
  %3026 = vmatpush1.bf16.msra.mxu0 %v566
  %3027 = vmatprep.subr.bf16.mxu0 0
  %3028 = vmatpush1.bf16.msra.mxu0 0
  %3029 = vmatprep.subr.bf16.mxu0 0
  %3030 = vmatpush1.bf16.msra.mxu0 0
  %3031 = vmatprep.subr.bf16.mxu0 0
  %3032 = vmatpush1.bf16.msra.mxu0 0
  %3033 = vmatprep.subr.bf16.mxu0 0
  %3034 = vmatpush1.bf16.msra.mxu0 0
  %3035 = vmatprep.subr.bf16.mxu0 0
  %3036 = vmatpush1.bf16.msra.mxu0 0
  %3037 = vmatprep.subr.bf16.mxu0 0
  %3038 = vmatpush1.bf16.msra.mxu0 0
  %3039 = vmatprep.subr.bf16.mxu0 0
  %3040 = vmatpush1.bf16.msra.mxu0 0
  %3041 = vmatprep.subr.bf16.mxu0 0
  %3042 = vmatpush1.bf16.msra.mxu0 0
  %3043 = vmatprep.mubr.bf16.mxu0 0
  %3044 = vmatmul.mubr.bf16.gmra.mrb[0].mxu0 %v2511
  %v3045 = vpop.f32.mrb[0].mxu0
  %v3046 = vadd.f32 %v3006, %v3045
  %v3047 = vpop.f32.mrb[0].mxu0
  %v3048 = vpop.f32.mrb[0].mxu0
  %v3049 = vpop.f32.mrb[0].mxu0
  %3050 = vdwg.mxu0
  %v3051 = vadd.f32 %v3046, %v217
  %v3052 = vmax.f32 %v3051, 0.0
  %v3053 = vpack.c.bf16 %v3052, %v3052
  %3054 = vmatprep.subr.bf16.mxu0 0
  %3055 = vmatpush1.bf16.msra.mxu0 %v809
  %3056 = vmatprep.subr.bf16.mxu0 0
  %3057 = vmatpush1.bf16.msra.mxu0 %v810
  %3058 = vmatprep.subr.bf16.mxu0 0
  %3059 = vmatpush1.bf16.msra.mxu0 %v811
  %3060 = vmatprep.subr.bf16.mxu0 0
  %3061 = vmatpush1.bf16.msra.mxu0 %v812
  %3062 = vmatprep.subr.bf16.mxu0 0
  %3063 = vmatpush1.bf16.msra.mxu0 %v813
  %3064 = vmatprep.subr.bf16.mxu0 0
  %3065 = vmatpush1.bf16.msra.mxu0 %v814
  %3066 = vmatprep.subr.bf16.mxu0 0
  %3067 = vmatpush1.bf16.msra.mxu0 %v815
  %3068 = vmatprep.subr.bf16.mxu0 0
  %3069 = vmatpush1.bf16.msra.mxu0 %v816
  %3070 = vmatprep.subr.bf16.mxu0 0
  %3071 = vmatpush1.bf16.msra.mxu0 0
  %3072 = vmatprep.subr.bf16.mxu0 0
  %3073 = vmatpush1.bf16.msra.mxu0 0
  %3074 = vmatprep.subr.bf16.mxu0 0
  %3075 = vmatpush1.bf16.msra.mxu0 0
  %3076 = vmatprep.subr.bf16.mxu0 0
  %3077 = vmatpush1.bf16.msra.mxu0 0
  %3078 = vmatprep.subr.bf16.mxu0 0
  %3079 = vmatpush1.bf16.msra.mxu0 0
  %3080 = vmatprep.subr.bf16.mxu0 0
  %3081 = vmatpush1.bf16.msra.mxu0 0
  %3082 = vmatprep.subr.bf16.mxu0 0
  %3083 = vmatpush1.bf16.msra.mxu0 0
  %3084 = vmatprep.subr.bf16.mxu0 0
  %3085 = vmatpush1.bf16.msra.mxu0 0
  %3086 = vmatprep.mubr.bf16.mxu0 0
  %3087 = vmatmul.mubr.bf16.gmra.mrb[0].mxu0 %v2677
  %v3088 = vpop.f32.mrb[0].mxu0
  %v3089 = vadd.f32 0.0, %v3088
  %v3090 = vpop.f32.mrb[0].mxu0
  %v3091 = vpop.f32.mrb[0].mxu0
  %v3092 = vpop.f32.mrb[0].mxu0
  %3093 = vdwg.mxu0
  %3094 = vmatprep.subr.bf16.mxu0 0
  %3095 = vmatpush1.bf16.msra.mxu0 %v897
  %3096 = vmatprep.subr.bf16.mxu0 0
  %3097 = vmatpush1.bf16.msra.mxu0 %v898
  %3098 = vmatprep.subr.bf16.mxu0 0
  %3099 = vmatpush1.bf16.msra.mxu0 %v899
  %3100 = vmatprep.subr.bf16.mxu0 0
  %3101 = vmatpush1.bf16.msra.mxu0 %v900
  %3102 = vmatprep.subr.bf16.mxu0 0
  %3103 = vmatpush1.bf16.msra.mxu0 %v901
  %3104 = vmatprep.subr.bf16.mxu0 0
  %3105 = vmatpush1.bf16.msra.mxu0 %v902
  %3106 = vmatprep.subr.bf16.mxu0 0
  %3107 = vmatpush1.bf16.msra.mxu0 %v903
  %3108 = vmatprep.subr.bf16.mxu0 0
  %3109 = vmatpush1.bf16.msra.mxu0 %v904
  %3110 = vmatprep.subr.bf16.mxu0 0
  %3111 = vmatpush1.bf16.msra.mxu0 0
  %3112 = vmatprep.subr.bf16.mxu0 0
  %3113 = vmatpush1.bf16.msra.mxu0 0
  %3114 = vmatprep.subr.bf16.mxu0 0
  %3115 = vmatpush1.bf16.msra.mxu0 0
  %3116 = vmatprep.subr.bf16.mxu0 0
  %3117 = vmatpush1.bf16.msra.mxu0 0
  %3118 = vmatprep.subr.bf16.mxu0 0
  %3119 = vmatpush1.bf16.msra.mxu0 0
  %3120 = vmatprep.subr.bf16.mxu0 0
  %3121 = vmatpush1.bf16.msra.mxu0 0
  %3122 = vmatprep.subr.bf16.mxu0 0
  %3123 = vmatpush1.bf16.msra.mxu0 0
  %3124 = vmatprep.subr.bf16.mxu0 0
  %3125 = vmatpush1.bf16.msra.mxu0 0
  %3126 = vmatprep.mubr.bf16.mxu0 0
  %3127 = vmatmul.mubr.bf16.gmra.mrb[0].mxu0 %v2594
  %v3128 = vpop.f32.mrb[0].mxu0
  %v3129 = vadd.f32 %v3089, %v3128
  %v3130 = vpop.f32.mrb[0].mxu0
  %v3131 = vpop.f32.mrb[0].mxu0
  %v3132 = vpop.f32.mrb[0].mxu0
  %3133 = vdwg.mxu0
  %v3134 = vadd.f32 %v3129, %v226
  %v3135 = vmax.f32 %v3134, 0.0
  %v3136 = vpack.c.bf16 %v3135, %v3135
  %3137 = vmatprep.subr.bf16.mxu0 0
  %3138 = vmatpush1.bf16.msra.mxu0 %v1230
  %3139 = vmatprep.subr.bf16.mxu0 0
  %3140 = vmatpush1.bf16.msra.mxu0 %v1231
  %3141 = vmatprep.subr.bf16.mxu0 0
  %3142 = vmatpush1.bf16.msra.mxu0 %v1232
  %3143 = vmatprep.subr.bf16.mxu0 0
  %3144 = vmatpush1.bf16.msra.mxu0 %v1233
  %3145 = vmatprep.subr.bf16.mxu0 0
  %3146 = vmatpush1.bf16.msra.mxu0 %v1234
  %3147 = vmatprep.subr.bf16.mxu0 0
  %3148 = vmatpush1.bf16.msra.mxu0 %v1235
  %3149 = vmatprep.subr.bf16.mxu0 0
  %3150 = vmatpush1.bf16.msra.mxu0 %v1236
  %3151 = vmatprep.subr.bf16.mxu0 0
  %3152 = vmatpush1.bf16.msra.mxu0 %v1237
  %3153 = vmatprep.subr.bf16.mxu0 0
  %3154 = vmatpush1.bf16.msra.mxu0 0
  %3155 = vmatprep.subr.bf16.mxu0 0
  %3156 = vmatpush1.bf16.msra.mxu0 0
  %3157 = vmatprep.subr.bf16.mxu0 0
  %3158 = vmatpush1.bf16.msra.mxu0 0
  %3159 = vmatprep.subr.bf16.mxu0 0
  %3160 = vmatpush1.bf16.msra.mxu0 0
  %3161 = vmatprep.subr.bf16.mxu0 0
  %3162 = vmatpush1.bf16.msra.mxu0 0
  %3163 = vmatprep.subr.bf16.mxu0 0
  %3164 = vmatpush1.bf16.msra.mxu0 0
  %3165 = vmatprep.subr.bf16.mxu0 0
  %3166 = vmatpush1.bf16.msra.mxu0 0
  %3167 = vmatprep.subr.bf16.mxu0 0
  %3168 = vmatpush1.bf16.msra.mxu0 0
  %3169 = vmatprep.mubr.bf16.mxu0 0
  %3170 = vmatmul.mubr.bf16.gmra.mrb[0].mxu0 %v2760
  %v3171 = vpop.f32.mrb[0].mxu0
  %v3172 = vadd.f32 0.0, %v3171
  %v3173 = vpop.f32.mrb[0].mxu0
  %v3174 = vpop.f32.mrb[0].mxu0
  %v3175 = vpop.f32.mrb[0].mxu0
  %3176 = vdwg.mxu0
  %3177 = vmatprep.subr.bf16.mxu0 0
  %3178 = vmatpush1.bf16.msra.mxu0 %v1318
  %3179 = vmatprep.subr.bf16.mxu0 0
  %3180 = vmatpush1.bf16.msra.mxu0 %v1319
  %3181 = vmatprep.subr.bf16.mxu0 0
  %3182 = vmatpush1.bf16.msra.mxu0 %v1320
  %3183 = vmatprep.subr.bf16.mxu0 0
  %3184 = vmatpush1.bf16.msra.mxu0 %v1321
  %3185 = vmatprep.subr.bf16.mxu0 0
  %3186 = vmatpush1.bf16.msra.mxu0 %v1322
  %3187 = vmatprep.subr.bf16.mxu0 0
  %3188 = vmatpush1.bf16.msra.mxu0 %v1323
  %3189 = vmatprep.subr.bf16.mxu0 0
  %3190 = vmatpush1.bf16.msra.mxu0 %v1324
  %3191 = vmatprep.subr.bf16.mxu0 0
  %3192 = vmatpush1.bf16.msra.mxu0 %v1325
  %3193 = vmatprep.subr.bf16.mxu0 0
  %3194 = vmatpush1.bf16.msra.mxu0 0
  %3195 = vmatprep.subr.bf16.mxu0 0
  %3196 = vmatpush1.bf16.msra.mxu0 0
  %3197 = vmatprep.subr.bf16.mxu0 0
  %3198 = vmatpush1.bf16.msra.mxu0 0
  %3199 = vmatprep.subr.bf16.mxu0 0
  %3200 = vmatpush1.bf16.msra.mxu0 0
  %3201 = vmatprep.subr.bf16.mxu0 0
  %3202 = vmatpush1.bf16.msra.mxu0 0
  %3203 = vmatprep.subr.bf16.mxu0 0
  %3204 = vmatpush1.bf16.msra.mxu0 0
  %3205 = vmatprep.subr.bf16.mxu0 0
  %3206 = vmatpush1.bf16.msra.mxu0 0
  %3207 = vmatprep.subr.bf16.mxu0 0
  %3208 = vmatpush1.bf16.msra.mxu0 0
  %3209 = vmatprep.mubr.bf16.mxu0 0
  %3210 = vmatmul.mubr.bf16.gmra.mrb[0].mxu0 %v2677
  %v3211 = vpop.f32.mrb[0].mxu0
  %v3212 = vadd.f32 %v3172, %v3211
  %v3213 = vpop.f32.mrb[0].mxu0
  %v3214 = vpop.f32.mrb[0].mxu0
  %v3215 = vpop.f32.mrb[0].mxu0
  %3216 = vdwg.mxu0
  %v3217 = vadd.f32 %v3212, %v235
  %v3218 = vmax.f32 %v3217, 0.0
  %v3219 = vpack.c.bf16 %v3218, %v3218
  %3220 = vmatprep.subr.bf16.mxu0 0
  %3221 = vmatpush1.bf16.msra.mxu0 %v1734
  %3222 = vmatprep.subr.bf16.mxu0 0
  %3223 = vmatpush1.bf16.msra.mxu0 %v1735
  %3224 = vmatprep.subr.bf16.mxu0 0
  %3225 = vmatpush1.bf16.msra.mxu0 %v1736
  %3226 = vmatprep.subr.bf16.mxu0 0
  %3227 = vmatpush1.bf16.msra.mxu0 %v1737
  %3228 = vmatprep.subr.bf16.mxu0 0
  %3229 = vmatpush1.bf16.msra.mxu0 %v1738
  %3230 = vmatprep.subr.bf16.mxu0 0
  %3231 = vmatpush1.bf16.msra.mxu0 %v1739
  %3232 = vmatprep.subr.bf16.mxu0 0
  %3233 = vmatpush1.bf16.msra.mxu0 %v1740
  %3234 = vmatprep.subr.bf16.mxu0 0
  %3235 = vmatpush1.bf16.msra.mxu0 %v1741
  %3236 = vmatprep.subr.bf16.mxu0 0
  %3237 = vmatpush1.bf16.msra.mxu0 0
  %3238 = vmatprep.subr.bf16.mxu0 0
  %3239 = vmatpush1.bf16.msra.mxu0 0
  %3240 = vmatprep.subr.bf16.mxu0 0
  %3241 = vmatpush1.bf16.msra.mxu0 0
  %3242 = vmatprep.subr.bf16.mxu0 0
  %3243 = vmatpush1.bf16.msra.mxu0 0
  %3244 = vmatprep.subr.bf16.mxu0 0
  %3245 = vmatpush1.bf16.msra.mxu0 0
  %3246 = vmatprep.subr.bf16.mxu0 0
  %3247 = vmatpush1.bf16.msra.mxu0 0
  %3248 = vmatprep.subr.bf16.mxu0 0
  %3249 = vmatpush1.bf16.msra.mxu0 0
  %3250 = vmatprep.subr.bf16.mxu0 0
  %3251 = vmatpush1.bf16.msra.mxu0 0
  %3252 = vmatprep.mubr.bf16.mxu0 0
  %3253 = vmatmul.mubr.bf16.gmra.mrb[0].mxu0 %v2843
  %v3254 = vpop.f32.mrb[0].mxu0
  %v3255 = vadd.f32 0.0, %v3254
  %v3256 = vpop.f32.mrb[0].mxu0
  %v3257 = vpop.f32.mrb[0].mxu0
  %v3258 = vpop.f32.mrb[0].mxu0
  %3259 = vdwg.mxu0
  %3260 = vmatprep.subr.bf16.mxu0 0
  %3261 = vmatpush1.bf16.msra.mxu0 %v1822
  %3262 = vmatprep.subr.bf16.mxu0 0
  %3263 = vmatpush1.bf16.msra.mxu0 %v1823
  %3264 = vmatprep.subr.bf16.mxu0 0
  %3265 = vmatpush1.bf16.msra.mxu0 %v1824
  %3266 = vmatprep.subr.bf16.mxu0 0
  %3267 = vmatpush1.bf16.msra.mxu0 %v1825
  %3268 = vmatprep.subr.bf16.mxu0 0
  %3269 = vmatpush1.bf16.msra.mxu0 %v1826
  %3270 = vmatprep.subr.bf16.mxu0 0
  %3271 = vmatpush1.bf16.msra.mxu0 %v1827
  %3272 = vmatprep.subr.bf16.mxu0 0
  %3273 = vmatpush1.bf16.msra.mxu0 %v1828
  %3274 = vmatprep.subr.bf16.mxu0 0
  %3275 = vmatpush1.bf16.msra.mxu0 %v1829
  %3276 = vmatprep.subr.bf16.mxu0 0
  %3277 = vmatpush1.bf16.msra.mxu0 0
  %3278 = vmatprep.subr.bf16.mxu0 0
  %3279 = vmatpush1.bf16.msra.mxu0 0
  %3280 = vmatprep.subr.bf16.mxu0 0
  %3281 = vmatpush1.bf16.msra.mxu0 0
  %3282 = vmatprep.subr.bf16.mxu0 0
  %3283 = vmatpush1.bf16.msra.mxu0 0
  %3284 = vmatprep.subr.bf16.mxu0 0
  %3285 = vmatpush1.bf16.msra.mxu0 0
  %3286 = vmatprep.subr.bf16.mxu0 0
  %3287 = vmatpush1.bf16.msra.mxu0 0
  %3288 = vmatprep.subr.bf16.mxu0 0
  %3289 = vmatpush1.bf16.msra.mxu0 0
  %3290 = vmatprep.subr.bf16.mxu0 0
  %3291 = vmatpush1.bf16.msra.mxu0 0
  %3292 = vmatprep.mubr.bf16.mxu0 0
  %3293 = vmatmul.mubr.bf16.gmra.mrb[0].mxu0 %v2760
  %v3294 = vpop.f32.mrb[0].mxu0
  %v3295 = vadd.f32 %v3255, %v3294
  %v3296 = vpop.f32.mrb[0].mxu0
  %v3297 = vpop.f32.mrb[0].mxu0
  %v3298 = vpop.f32.mrb[0].mxu0
  %3299 = vdwg.mxu0
  %v3300 = vadd.f32 %v3295, %v244
  %v3301 = vmax.f32 %v3300, 0.0
  %v3302 = vpack.c.bf16 %v3301, %v3301
  %3303 = vmatprep.subr.bf16.mxu0 0
  %3304 = vmatpush1.bf16.msra.mxu0 %v2321
  %3305 = vmatprep.subr.bf16.mxu0 0
  %3306 = vmatpush1.bf16.msra.mxu0 %v2322
  %3307 = vmatprep.subr.bf16.mxu0 0
  %3308 = vmatpush1.bf16.msra.mxu0 %v2323
  %3309 = vmatprep.subr.bf16.mxu0 0
  %3310 = vmatpush1.bf16.msra.mxu0 %v2324
  %3311 = vmatprep.subr.bf16.mxu0 0
  %3312 = vmatpush1.bf16.msra.mxu0 %v2325
  %3313 = vmatprep.subr.bf16.mxu0 0
  %3314 = vmatpush1.bf16.msra.mxu0 %v2326
  %3315 = vmatprep.subr.bf16.mxu0 0
  %3316 = vmatpush1.bf16.msra.mxu0 %v2327
  %3317 = vmatprep.subr.bf16.mxu0 0
  %3318 = vmatpush1.bf16.msra.mxu0 %v2328
  %3319 = vmatprep.subr.bf16.mxu0 0
  %3320 = vmatpush1.bf16.msra.mxu0 0
  %3321 = vmatprep.subr.bf16.mxu0 0
  %3322 = vmatpush1.bf16.msra.mxu0 0
  %3323 = vmatprep.subr.bf16.mxu0 0
  %3324 = vmatpush1.bf16.msra.mxu0 0
  %3325 = vmatprep.subr.bf16.mxu0 0
  %3326 = vmatpush1.bf16.msra.mxu0 0
  %3327 = vmatprep.subr.bf16.mxu0 0
  %3328 = vmatpush1.bf16.msra.mxu0 0
  %3329 = vmatprep.subr.bf16.mxu0 0
  %3330 = vmatpush1.bf16.msra.mxu0 0
  %3331 = vmatprep.subr.bf16.mxu0 0
  %3332 = vmatpush1.bf16.msra.mxu0 0
  %3333 = vmatprep.subr.bf16.mxu0 0
  %3334 = vmatpush1.bf16.msra.mxu0 0
  %3335 = vmatprep.mubr.bf16.mxu0 0
  %3336 = vmatmul.mubr.bf16.gmra.mrb[0].mxu0 %v2926
  %v3337 = vpop.f32.mrb[0].mxu0
  %v3338 = vadd.f32 0.0, %v3337
  %v3339 = vpop.f32.mrb[0].mxu0
  %v3340 = vpop.f32.mrb[0].mxu0
  %v3341 = vpop.f32.mrb[0].mxu0
  %3342 = vdwg.mxu0
  %3343 = vmatprep.subr.bf16.mxu0 0
  %3344 = vmatpush1.bf16.msra.mxu0 %v2409
  %3345 = vmatprep.subr.bf16.mxu0 0
  %3346 = vmatpush1.bf16.msra.mxu0 %v2410
  %3347 = vmatprep.subr.bf16.mxu0 0
  %3348 = vmatpush1.bf16.msra.mxu0 %v2411
  %3349 = vmatprep.subr.bf16.mxu0 0
  %3350 = vmatpush1.bf16.msra.mxu0 %v2412
  %3351 = vmatprep.subr.bf16.mxu0 0
  %3352 = vmatpush1.bf16.msra.mxu0 %v2413
  %3353 = vmatprep.subr.bf16.mxu0 0
  %3354 = vmatpush1.bf16.msra.mxu0 %v2414
  %3355 = vmatprep.subr.bf16.mxu0 0
  %3356 = vmatpush1.bf16.msra.mxu0 %v2415
  %3357 = vmatprep.subr.bf16.mxu0 0
  %3358 = vmatpush1.bf16.msra.mxu0 %v2416
  %3359 = vmatprep.subr.bf16.mxu0 0
  %3360 = vmatpush1.bf16.msra.mxu0 0
  %3361 = vmatprep.subr.bf16.mxu0 0
  %3362 = vmatpush1.bf16.msra.mxu0 0
  %3363 = vmatprep.subr.bf16.mxu0 0
  %3364 = vmatpush1.bf16.msra.mxu0 0
  %3365 = vmatprep.subr.bf16.mxu0 0
  %3366 = vmatpush1.bf16.msra.mxu0 0
  %3367 = vmatprep.subr.bf16.mxu0 0
  %3368 = vmatpush1.bf16.msra.mxu0 0
  %3369 = vmatprep.subr.bf16.mxu0 0
  %3370 = vmatpush1.bf16.msra.mxu0 0
  %3371 = vmatprep.subr.bf16.mxu0 0
  %3372 = vmatpush1.bf16.msra.mxu0 0
  %3373 = vmatprep.subr.bf16.mxu0 0
  %3374 = vmatpush1.bf16.msra.mxu0 0
  %3375 = vmatprep.mubr.bf16.mxu0 0
  %3376 = vmatmul.mubr.bf16.gmra.mrb[0].mxu0 %v2843
  %v3377 = vpop.f32.mrb[0].mxu0
  %v3378 = vadd.f32 %v3338, %v3377
  %v3379 = vpop.f32.mrb[0].mxu0
  %v3380 = vpop.f32.mrb[0].mxu0
  %v3381 = vpop.f32.mrb[0].mxu0
  %3382 = vdwg.mxu0
  %v3383 = vadd.f32 %v3378, %v253
  %v3384 = vmax.f32 %v3383, 0.0
  %v3385 = vpack.c.bf16 %v3384, %v3384
  %3386 = vmatprep.subr.bf16.mxu0 0
  %3387 = vmatpush1.bf16.msra.mxu0 %v471
  %3388 = vmatprep.subr.bf16.mxu0 0
  %3389 = vmatpush1.bf16.msra.mxu0 %v472
  %3390 = vmatprep.subr.bf16.mxu0 0
  %3391 = vmatpush1.bf16.msra.mxu0 %v473
  %3392 = vmatprep.subr.bf16.mxu0 0
  %3393 = vmatpush1.bf16.msra.mxu0 %v474
  %3394 = vmatprep.subr.bf16.mxu0 0
  %3395 = vmatpush1.bf16.msra.mxu0 %v475
  %3396 = vmatprep.subr.bf16.mxu0 0
  %3397 = vmatpush1.bf16.msra.mxu0 %v476
  %3398 = vmatprep.subr.bf16.mxu0 0
  %3399 = vmatpush1.bf16.msra.mxu0 %v477
  %3400 = vmatprep.subr.bf16.mxu0 0
  %3401 = vmatpush1.bf16.msra.mxu0 %v478
  %3402 = vmatprep.subr.bf16.mxu0 0
  %3403 = vmatpush1.bf16.msra.mxu0 0
  %3404 = vmatprep.subr.bf16.mxu0 0
  %3405 = vmatpush1.bf16.msra.mxu0 0
  %3406 = vmatprep.subr.bf16.mxu0 0
  %3407 = vmatpush1.bf16.msra.mxu0 0
  %3408 = vmatprep.subr.bf16.mxu0 0
  %3409 = vmatpush1.bf16.msra.mxu0 0
  %3410 = vmatprep.subr.bf16.mxu0 0
  %3411 = vmatpush1.bf16.msra.mxu0 0
  %3412 = vmatprep.subr.bf16.mxu0 0
  %3413 = vmatpush1.bf16.msra.mxu0 0
  %3414 = vmatprep.subr.bf16.mxu0 0
  %3415 = vmatpush1.bf16.msra.mxu0 0
  %3416 = vmatprep.subr.bf16.mxu0 0
  %3417 = vmatpush1.bf16.msra.mxu0 0
  %3418 = vmatprep.mubr.bf16.mxu0 0
  %3419 = vmatmul.mubr.bf16.gmra.mrb[0].mxu0 %v3053
  %v3420 = vpop.f32.mrb[0].mxu0
  %v3421 = vadd.f32 0.0, %v3420
  %v3422 = vpop.f32.mrb[0].mxu0
  %v3423 = vpop.f32.mrb[0].mxu0
  %v3424 = vpop.f32.mrb[0].mxu0
  %3425 = vdwg.mxu0
  %3426 = vmatprep.subr.bf16.mxu0 0
  %3427 = vmatpush1.bf16.msra.mxu0 %v559
  %3428 = vmatprep.subr.bf16.mxu0 0
  %3429 = vmatpush1.bf16.msra.mxu0 %v560
  %3430 = vmatprep.subr.bf16.mxu0 0
  %3431 = vmatpush1.bf16.msra.mxu0 %v561
  %3432 = vmatprep.subr.bf16.mxu0 0
  %3433 = vmatpush1.bf16.msra.mxu0 %v562
  %3434 = vmatprep.subr.bf16.mxu0 0
  %3435 = vmatpush1.bf16.msra.mxu0 %v563
  %3436 = vmatprep.subr.bf16.mxu0 0
  %3437 = vmatpush1.bf16.msra.mxu0 %v564
  %3438 = vmatprep.subr.bf16.mxu0 0
  %3439 = vmatpush1.bf16.msra.mxu0 %v565
  %3440 = vmatprep.subr.bf16.mxu0 0
  %3441 = vmatpush1.bf16.msra.mxu0 %v566
  %3442 = vmatprep.subr.bf16.mxu0 0
  %3443 = vmatpush1.bf16.msra.mxu0 0
  %3444 = vmatprep.subr.bf16.mxu0 0
  %3445 = vmatpush1.bf16.msra.mxu0 0
  %3446 = vmatprep.subr.bf16.mxu0 0
  %3447 = vmatpush1.bf16.msra.mxu0 0
  %3448 = vmatprep.subr.bf16.mxu0 0
  %3449 = vmatpush1.bf16.msra.mxu0 0
  %3450 = vmatprep.subr.bf16.mxu0 0
  %3451 = vmatpush1.bf16.msra.mxu0 0
  %3452 = vmatprep.subr.bf16.mxu0 0
  %3453 = vmatpush1.bf16.msra.mxu0 0
  %3454 = vmatprep.subr.bf16.mxu0 0
  %3455 = vmatpush1.bf16.msra.mxu0 0
  %3456 = vmatprep.subr.bf16.mxu0 0
  %3457 = vmatpush1.bf16.msra.mxu0 0
  %3458 = vmatprep.mubr.bf16.mxu0 0
  %3459 = vmatmul.mubr.bf16.gmra.mrb[0].mxu0 %v2970
  %v3460 = vpop.f32.mrb[0].mxu0
  %v3461 = vadd.f32 %v3421, %v3460
  %v3462 = vpop.f32.mrb[0].mxu0
  %v3463 = vpop.f32.mrb[0].mxu0
  %v3464 = vpop.f32.mrb[0].mxu0
  %3465 = vdwg.mxu0
  %v3466 = vadd.f32 %v3461, %v217
  %v3467 = vmax.f32 %v3466, 0.0
  %v3468 = vpack.c.bf16 %v3467, %v3467
  %3469 = vmatprep.subr.bf16.mxu0 0
  %3470 = vmatpush1.bf16.msra.mxu0 %v809
  %3471 = vmatprep.subr.bf16.mxu0 0
  %3472 = vmatpush1.bf16.msra.mxu0 %v810
  %3473 = vmatprep.subr.bf16.mxu0 0
  %3474 = vmatpush1.bf16.msra.mxu0 %v811
  %3475 = vmatprep.subr.bf16.mxu0 0
  %3476 = vmatpush1.bf16.msra.mxu0 %v812
  %3477 = vmatprep.subr.bf16.mxu0 0
  %3478 = vmatpush1.bf16.msra.mxu0 %v813
  %3479 = vmatprep.subr.bf16.mxu0 0
  %3480 = vmatpush1.bf16.msra.mxu0 %v814
  %3481 = vmatprep.subr.bf16.mxu0 0
  %3482 = vmatpush1.bf16.msra.mxu0 %v815
  %3483 = vmatprep.subr.bf16.mxu0 0
  %3484 = vmatpush1.bf16.msra.mxu0 %v816
  %3485 = vmatprep.subr.bf16.mxu0 0
  %3486 = vmatpush1.bf16.msra.mxu0 0
  %3487 = vmatprep.subr.bf16.mxu0 0
  %3488 = vmatpush1.bf16.msra.mxu0 0
  %3489 = vmatprep.subr.bf16.mxu0 0
  %3490 = vmatpush1.bf16.msra.mxu0 0
  %3491 = vmatprep.subr.bf16.mxu0 0
  %3492 = vmatpush1.bf16.msra.mxu0 0
  %3493 = vmatprep.subr.bf16.mxu0 0
  %3494 = vmatpush1.bf16.msra.mxu0 0
  %3495 = vmatprep.subr.bf16.mxu0 0
  %3496 = vmatpush1.bf16.msra.mxu0 0
  %3497 = vmatprep.subr.bf16.mxu0 0
  %3498 = vmatpush1.bf16.msra.mxu0 0
  %3499 = vmatprep.subr.bf16.mxu0 0
  %3500 = vmatpush1.bf16.msra.mxu0 0
  %3501 = vmatprep.mubr.bf16.mxu0 0
  %3502 = vmatmul.mubr.bf16.gmra.mrb[0].mxu0 %v3136
  %v3503 = vpop.f32.mrb[0].mxu0
  %v3504 = vadd.f32 0.0, %v3503
  %v3505 = vpop.f32.mrb[0].mxu0
  %v3506 = vpop.f32.mrb[0].mxu0
  %v3507 = vpop.f32.mrb[0].mxu0
  %3508 = vdwg.mxu0
  %3509 = vmatprep.subr.bf16.mxu0 0
  %3510 = vmatpush1.bf16.msra.mxu0 %v897
  %3511 = vmatprep.subr.bf16.mxu0 0
  %3512 = vmatpush1.bf16.msra.mxu0 %v898
  %3513 = vmatprep.subr.bf16.mxu0 0
  %3514 = vmatpush1.bf16.msra.mxu0 %v899
  %3515 = vmatprep.subr.bf16.mxu0 0
  %3516 = vmatpush1.bf16.msra.mxu0 %v900
  %3517 = vmatprep.subr.bf16.mxu0 0
  %3518 = vmatpush1.bf16.msra.mxu0 %v901
  %3519 = vmatprep.subr.bf16.mxu0 0
  %3520 = vmatpush1.bf16.msra.mxu0 %v902
  %3521 = vmatprep.subr.bf16.mxu0 0
  %3522 = vmatpush1.bf16.msra.mxu0 %v903
  %3523 = vmatprep.subr.bf16.mxu0 0
  %3524 = vmatpush1.bf16.msra.mxu0 %v904
  %3525 = vmatprep.subr.bf16.mxu0 0
  %3526 = vmatpush1.bf16.msra.mxu0 0
  %3527 = vmatprep.subr.bf16.mxu0 0
  %3528 = vmatpush1.bf16.msra.mxu0 0
  %3529 = vmatprep.subr.bf16.mxu0 0
  %3530 = vmatpush1.bf16.msra.mxu0 0
  %3531 = vmatprep.subr.bf16.mxu0 0
  %3532 = vmatpush1.bf16.msra.mxu0 0
  %3533 = vmatprep.subr.bf16.mxu0 0
  %3534 = vmatpush1.bf16.msra.mxu0 0
  %3535 = vmatprep.subr.bf16.mxu0 0
  %3536 = vmatpush1.bf16.msra.mxu0 0
  %3537 = vmatprep.subr.bf16.mxu0 0
  %3538 = vmatpush1.bf16.msra.mxu0 0
  %3539 = vmatprep.subr.bf16.mxu0 0
  %3540 = vmatpush1.bf16.msra.mxu0 0
  %3541 = vmatprep.mubr.bf16.mxu0 0
  %3542 = vmatmul.mubr.bf16.gmra.mrb[0].mxu0 %v3053
  %v3543 = vpop.f32.mrb[0].mxu0
  %v3544 = vadd.f32 %v3504, %v3543
  %v3545 = vpop.f32.mrb[0].mxu0
  %v3546 = vpop.f32.mrb[0].mxu0
  %v3547 = vpop.f32.mrb[0].mxu0
  %3548 = vdwg.mxu0
  %v3549 = vadd.f32 %v3544, %v226
  %v3550 = vmax.f32 %v3549, 0.0
  %v3551 = vpack.c.bf16 %v3550, %v3550
  %3552 = vmatprep.subr.bf16.mxu0 0
  %3553 = vmatpush1.bf16.msra.mxu0 %v1230
  %3554 = vmatprep.subr.bf16.mxu0 0
  %3555 = vmatpush1.bf16.msra.mxu0 %v1231
  %3556 = vmatprep.subr.bf16.mxu0 0
  %3557 = vmatpush1.bf16.msra.mxu0 %v1232
  %3558 = vmatprep.subr.bf16.mxu0 0
  %3559 = vmatpush1.bf16.msra.mxu0 %v1233
  %3560 = vmatprep.subr.bf16.mxu0 0
  %3561 = vmatpush1.bf16.msra.mxu0 %v1234
  %3562 = vmatprep.subr.bf16.mxu0 0
  %3563 = vmatpush1.bf16.msra.mxu0 %v1235
  %3564 = vmatprep.subr.bf16.mxu0 0
  %3565 = vmatpush1.bf16.msra.mxu0 %v1236
  %3566 = vmatprep.subr.bf16.mxu0 0
  %3567 = vmatpush1.bf16.msra.mxu0 %v1237
  %3568 = vmatprep.subr.bf16.mxu0 0
  %3569 = vmatpush1.bf16.msra.mxu0 0
  %3570 = vmatprep.subr.bf16.mxu0 0
  %3571 = vmatpush1.bf16.msra.mxu0 0
  %3572 = vmatprep.subr.bf16.mxu0 0
  %3573 = vmatpush1.bf16.msra.mxu0 0
  %3574 = vmatprep.subr.bf16.mxu0 0
  %3575 = vmatpush1.bf16.msra.mxu0 0
  %3576 = vmatprep.subr.bf16.mxu0 0
  %3577 = vmatpush1.bf16.msra.mxu0 0
  %3578 = vmatprep.subr.bf16.mxu0 0
  %3579 = vmatpush1.bf16.msra.mxu0 0
  %3580 = vmatprep.subr.bf16.mxu0 0
  %3581 = vmatpush1.bf16.msra.mxu0 0
  %3582 = vmatprep.subr.bf16.mxu0 0
  %3583 = vmatpush1.bf16.msra.mxu0 0
  %3584 = vmatprep.mubr.bf16.mxu0 0
  %3585 = vmatmul.mubr.bf16.gmra.mrb[0].mxu0 %v3219
  %v3586 = vpop.f32.mrb[0].mxu0
  %v3587 = vadd.f32 0.0, %v3586
  %v3588 = vpop.f32.mrb[0].mxu0
  %v3589 = vpop.f32.mrb[0].mxu0
  %v3590 = vpop.f32.mrb[0].mxu0
  %3591 = vdwg.mxu0
  %3592 = vmatprep.subr.bf16.mxu0 0
  %3593 = vmatpush1.bf16.msra.mxu0 %v1318
  %3594 = vmatprep.subr.bf16.mxu0 0
  %3595 = vmatpush1.bf16.msra.mxu0 %v1319
  %3596 = vmatprep.subr.bf16.mxu0 0
  %3597 = vmatpush1.bf16.msra.mxu0 %v1320
  %3598 = vmatprep.subr.bf16.mxu0 0
  %3599 = vmatpush1.bf16.msra.mxu0 %v1321
  %3600 = vmatprep.subr.bf16.mxu0 0
  %3601 = vmatpush1.bf16.msra.mxu0 %v1322
  %3602 = vmatprep.subr.bf16.mxu0 0
  %3603 = vmatpush1.bf16.msra.mxu0 %v1323
  %3604 = vmatprep.subr.bf16.mxu0 0
  %3605 = vmatpush1.bf16.msra.mxu0 %v1324
  %3606 = vmatprep.subr.bf16.mxu0 0
  %3607 = vmatpush1.bf16.msra.mxu0 %v1325
  %3608 = vmatprep.subr.bf16.mxu0 0
  %3609 = vmatpush1.bf16.msra.mxu0 0
  %3610 = vmatprep.subr.bf16.mxu0 0
  %3611 = vmatpush1.bf16.msra.mxu0 0
  %3612 = vmatprep.subr.bf16.mxu0 0
  %3613 = vmatpush1.bf16.msra.mxu0 0
  %3614 = vmatprep.subr.bf16.mxu0 0
  %3615 = vmatpush1.bf16.msra.mxu0 0
  %3616 = vmatprep.subr.bf16.mxu0 0
  %3617 = vmatpush1.bf16.msra.mxu0 0
  %3618 = vmatprep.subr.bf16.mxu0 0
  %3619 = vmatpush1.bf16.msra.mxu0 0
  %3620 = vmatprep.subr.bf16.mxu0 0
  %3621 = vmatpush1.bf16.msra.mxu0 0
  %3622 = vmatprep.subr.bf16.mxu0 0
  %3623 = vmatpush1.bf16.msra.mxu0 0
  %3624 = vmatprep.mubr.bf16.mxu0 0
  %3625 = vmatmul.mubr.bf16.gmra.mrb[0].mxu0 %v3136
  %v3626 = vpop.f32.mrb[0].mxu0
  %v3627 = vadd.f32 %v3587, %v3626
  %v3628 = vpop.f32.mrb[0].mxu0
  %v3629 = vpop.f32.mrb[0].mxu0
  %v3630 = vpop.f32.mrb[0].mxu0
  %3631 = vdwg.mxu0
  %v3632 = vadd.f32 %v3627, %v235
  %v3633 = vmax.f32 %v3632, 0.0
  %v3634 = vpack.c.bf16 %v3633, %v3633
  %3635 = vmatprep.subr.bf16.mxu0 0
  %3636 = vmatpush1.bf16.msra.mxu0 %v1734
  %3637 = vmatprep.subr.bf16.mxu0 0
  %3638 = vmatpush1.bf16.msra.mxu0 %v1735
  %3639 = vmatprep.subr.bf16.mxu0 0
  %3640 = vmatpush1.bf16.msra.mxu0 %v1736
  %3641 = vmatprep.subr.bf16.mxu0 0
  %3642 = vmatpush1.bf16.msra.mxu0 %v1737
  %3643 = vmatprep.subr.bf16.mxu0 0
  %3644 = vmatpush1.bf16.msra.mxu0 %v1738
  %3645 = vmatprep.subr.bf16.mxu0 0
  %3646 = vmatpush1.bf16.msra.mxu0 %v1739
  %3647 = vmatprep.subr.bf16.mxu0 0
  %3648 = vmatpush1.bf16.msra.mxu0 %v1740
  %3649 = vmatprep.subr.bf16.mxu0 0
  %3650 = vmatpush1.bf16.msra.mxu0 %v1741
  %3651 = vmatprep.subr.bf16.mxu0 0
  %3652 = vmatpush1.bf16.msra.mxu0 0
  %3653 = vmatprep.subr.bf16.mxu0 0
  %3654 = vmatpush1.bf16.msra.mxu0 0
  %3655 = vmatprep.subr.bf16.mxu0 0
  %3656 = vmatpush1.bf16.msra.mxu0 0
  %3657 = vmatprep.subr.bf16.mxu0 0
  %3658 = vmatpush1.bf16.msra.mxu0 0
  %3659 = vmatprep.subr.bf16.mxu0 0
  %3660 = vmatpush1.bf16.msra.mxu0 0
  %3661 = vmatprep.subr.bf16.mxu0 0
  %3662 = vmatpush1.bf16.msra.mxu0 0
  %3663 = vmatprep.subr.bf16.mxu0 0
  %3664 = vmatpush1.bf16.msra.mxu0 0
  %3665 = vmatprep.subr.bf16.mxu0 0
  %3666 = vmatpush1.bf16.msra.mxu0 0
  %3667 = vmatprep.mubr.bf16.mxu0 0
  %3668 = vmatmul.mubr.bf16.gmra.mrb[0].mxu0 %v3302
  %v3669 = vpop.f32.mrb[0].mxu0
  %v3670 = vadd.f32 0.0, %v3669
  %v3671 = vpop.f32.mrb[0].mxu0
  %v3672 = vpop.f32.mrb[0].mxu0
  %v3673 = vpop.f32.mrb[0].mxu0
  %3674 = vdwg.mxu0
  %3675 = vmatprep.subr.bf16.mxu0 0
  %3676 = vmatpush1.bf16.msra.mxu0 %v1822
  %3677 = vmatprep.subr.bf16.mxu0 0
  %3678 = vmatpush1.bf16.msra.mxu0 %v1823
  %3679 = vmatprep.subr.bf16.mxu0 0
  %3680 = vmatpush1.bf16.msra.mxu0 %v1824
  %3681 = vmatprep.subr.bf16.mxu0 0
  %3682 = vmatpush1.bf16.msra.mxu0 %v1825
  %3683 = vmatprep.subr.bf16.mxu0 0
  %3684 = vmatpush1.bf16.msra.mxu0 %v1826
  %3685 = vmatprep.subr.bf16.mxu0 0
  %3686 = vmatpush1.bf16.msra.mxu0 %v1827
  %3687 = vmatprep.subr.bf16.mxu0 0
  %3688 = vmatpush1.bf16.msra.mxu0 %v1828
  %3689 = vmatprep.subr.bf16.mxu0 0
  %3690 = vmatpush1.bf16.msra.mxu0 %v1829
  %3691 = vmatprep.subr.bf16.mxu0 0
  %3692 = vmatpush1.bf16.msra.mxu0 0
  %3693 = vmatprep.subr.bf16.mxu0 0
  %3694 = vmatpush1.bf16.msra.mxu0 0
  %3695 = vmatprep.subr.bf16.mxu0 0
  %3696 = vmatpush1.bf16.msra.mxu0 0
  %3697 = vmatprep.subr.bf16.mxu0 0
  %3698 = vmatpush1.bf16.msra.mxu0 0
  %3699 = vmatprep.subr.bf16.mxu0 0
  %3700 = vmatpush1.bf16.msra.mxu0 0
  %3701 = vmatprep.subr.bf16.mxu0 0
  %3702 = vmatpush1.bf16.msra.mxu0 0
  %3703 = vmatprep.subr.bf16.mxu0 0
  %3704 = vmatpush1.bf16.msra.mxu0 0
  %3705 = vmatprep.subr.bf16.mxu0 0
  %3706 = vmatpush1.bf16.msra.mxu0 0
  %3707 = vmatprep.mubr.bf16.mxu0 0
  %3708 = vmatmul.mubr.bf16.gmra.mrb[0].mxu0 %v3219
  %v3709 = vpop.f32.mrb[0].mxu0
  %v3710 = vadd.f32 %v3670, %v3709
  %v3711 = vpop.f32.mrb[0].mxu0
  %v3712 = vpop.f32.mrb[0].mxu0
  %v3713 = vpop.f32.mrb[0].mxu0
  %3714 = vdwg.mxu0
  %v3715 = vadd.f32 %v3710, %v244
  %v3716 = vmax.f32 %v3715, 0.0
  %v3717 = vpack.c.bf16 %v3716, %v3716
  %3718 = vmatprep.subr.bf16.mxu0 0
  %3719 = vmatpush1.bf16.msra.mxu0 %v2321
  %3720 = vmatprep.subr.bf16.mxu0 0
  %3721 = vmatpush1.bf16.msra.mxu0 %v2322
  %3722 = vmatprep.subr.bf16.mxu0 0
  %3723 = vmatpush1.bf16.msra.mxu0 %v2323
  %3724 = vmatprep.subr.bf16.mxu0 0
  %3725 = vmatpush1.bf16.msra.mxu0 %v2324
  %3726 = vmatprep.subr.bf16.mxu0 0
  %3727 = vmatpush1.bf16.msra.mxu0 %v2325
  %3728 = vmatprep.subr.bf16.mxu0 0
  %3729 = vmatpush1.bf16.msra.mxu0 %v2326
  %3730 = vmatprep.subr.bf16.mxu0 0
  %3731 = vmatpush1.bf16.msra.mxu0 %v2327
  %3732 = vmatprep.subr.bf16.mxu0 0
  %3733 = vmatpush1.bf16.msra.mxu0 %v2328
  %3734 = vmatprep.subr.bf16.mxu0 0
  %3735 = vmatpush1.bf16.msra.mxu0 0
  %3736 = vmatprep.subr.bf16.mxu0 0
  %3737 = vmatpush1.bf16.msra.mxu0 0
  %3738 = vmatprep.subr.bf16.mxu0 0
  %3739 = vmatpush1.bf16.msra.mxu0 0
  %3740 = vmatprep.subr.bf16.mxu0 0
  %3741 = vmatpush1.bf16.msra.mxu0 0
  %3742 = vmatprep.subr.bf16.mxu0 0
  %3743 = vmatpush1.bf16.msra.mxu0 0
  %3744 = vmatprep.subr.bf16.mxu0 0
  %3745 = vmatpush1.bf16.msra.mxu0 0
  %3746 = vmatprep.subr.bf16.mxu0 0
  %3747 = vmatpush1.bf16.msra.mxu0 0
  %3748 = vmatprep.subr.bf16.mxu0 0
  %3749 = vmatpush1.bf16.msra.mxu0 0
  %3750 = vmatprep.mubr.bf16.mxu0 0
  %3751 = vmatmul.mubr.bf16.gmra.mrb[0].mxu0 %v3385
  %v3752 = vpop.f32.mrb[0].mxu0
  %v3753 = vadd.f32 0.0, %v3752
  %v3754 = vpop.f32.mrb[0].mxu0
  %v3755 = vpop.f32.mrb[0].mxu0
  %v3756 = vpop.f32.mrb[0].mxu0
  %3757 = vdwg.mxu0
  %3758 = vmatprep.subr.bf16.mxu0 0
  %3759 = vmatpush1.bf16.msra.mxu0 %v2409
  %3760 = vmatprep.subr.bf16.mxu0 0
  %3761 = vmatpush1.bf16.msra.mxu0 %v2410
  %3762 = vmatprep.subr.bf16.mxu0 0
  %3763 = vmatpush1.bf16.msra.mxu0 %v2411
  %3764 = vmatprep.subr.bf16.mxu0 0
  %3765 = vmatpush1.bf16.msra.mxu0 %v2412
  %3766 = vmatprep.subr.bf16.mxu0 0
  %3767 = vmatpush1.bf16.msra.mxu0 %v2413
  %3768 = vmatprep.subr.bf16.mxu0 0
  %3769 = vmatpush1.bf16.msra.mxu0 %v2414
  %3770 = vmatprep.subr.bf16.mxu0 0
  %3771 = vmatpush1.bf16.msra.mxu0 %v2415
  %3772 = vmatprep.subr.bf16.mxu0 0
  %3773 = vmatpush1.bf16.msra.mxu0 %v2416
  %3774 = vmatprep.subr.bf16.mxu0 0
  %3775 = vmatpush1.bf16.msra.mxu0 0
  %3776 = vmatprep.subr.bf16.mxu0 0
  %3777 = vmatpush1.bf16.msra.mxu0 0
  %3778 = vmatprep.subr.bf16.mxu0 0
  %3779 = vmatpush1.bf16.msra.mxu0 0
  %3780 = vmatprep.subr.bf16.mxu0 0
  %3781 = vmatpush1.bf16.msra.mxu0 0
  %3782 = vmatprep.subr.bf16.mxu0 0
  %3783 = vmatpush1.bf16.msra.mxu0 0
  %3784 = vmatprep.subr.bf16.mxu0 0
  %3785 = vmatpush1.bf16.msra.mxu0 0
  %3786 = vmatprep.subr.bf16.mxu0 0
  %3787 = vmatpush1.bf16.msra.mxu0 0
  %3788 = vmatprep.subr.bf16.mxu0 0
  %3789 = vmatpush1.bf16.msra.mxu0 0
  %3790 = vmatprep.mubr.bf16.mxu0 0
  %3791 = vmatmul.mubr.bf16.gmra.mrb[0].mxu0 %v3302
  %v3792 = vpop.f32.mrb[0].mxu0
  %v3793 = vadd.f32 %v3753, %v3792
  %v3794 = vpop.f32.mrb[0].mxu0
  %v3795 = vpop.f32.mrb[0].mxu0
  %v3796 = vpop.f32.mrb[0].mxu0
  %3797 = vdwg.mxu0
  %v3798 = vadd.f32 %v3793, %v253
  %v3799 = vmax.f32 %v3798, 0.0
  %v3800 = vpack.c.bf16 %v3799, %v3799
  %3801 = vmatprep.subr.bf16.mxu0 0
  %3802 = vmatpush1.bf16.msra.mxu0 %v809
  %3803 = vmatprep.subr.bf16.mxu0 0
  %3804 = vmatpush1.bf16.msra.mxu0 %v810
  %3805 = vmatprep.subr.bf16.mxu0 0
  %3806 = vmatpush1.bf16.msra.mxu0 %v811
  %3807 = vmatprep.subr.bf16.mxu0 0
  %3808 = vmatpush1.bf16.msra.mxu0 %v812
  %3809 = vmatprep.subr.bf16.mxu0 0
  %3810 = vmatpush1.bf16.msra.mxu0 %v813
  %3811 = vmatprep.subr.bf16.mxu0 0
  %3812 = vmatpush1.bf16.msra.mxu0 %v814
  %3813 = vmatprep.subr.bf16.mxu0 0
  %3814 = vmatpush1.bf16.msra.mxu0 %v815
  %3815 = vmatprep.subr.bf16.mxu0 0
  %3816 = vmatpush1.bf16.msra.mxu0 %v816
  %3817 = vmatprep.subr.bf16.mxu0 0
  %3818 = vmatpush1.bf16.msra.mxu0 0
  %3819 = vmatprep.subr.bf16.mxu0 0
  %3820 = vmatpush1.bf16.msra.mxu0 0
  %3821 = vmatprep.subr.bf16.mxu0 0
  %3822 = vmatpush1.bf16.msra.mxu0 0
  %3823 = vmatprep.subr.bf16.mxu0 0
  %3824 = vmatpush1.bf16.msra.mxu0 0
  %3825 = vmatprep.subr.bf16.mxu0 0
  %3826 = vmatpush1.bf16.msra.mxu0 0
  %3827 = vmatprep.subr.bf16.mxu0 0
  %3828 = vmatpush1.bf16.msra.mxu0 0
  %3829 = vmatprep.subr.bf16.mxu0 0
  %3830 = vmatpush1.bf16.msra.mxu0 0
  %3831 = vmatprep.subr.bf16.mxu0 0
  %3832 = vmatpush1.bf16.msra.mxu0 0
  %3833 = vmatprep.mubr.bf16.mxu0 0
  %3834 = vmatmul.mubr.bf16.gmra.mrb[0].mxu0 %v3551
  %v3835 = vpop.f32.mrb[0].mxu0
  %v3836 = vadd.f32 0.0, %v3835
  %v3837 = vpop.f32.mrb[0].mxu0
  %v3838 = vpop.f32.mrb[0].mxu0
  %v3839 = vpop.f32.mrb[0].mxu0
  %3840 = vdwg.mxu0
  %3841 = vmatprep.subr.bf16.mxu0 0
  %3842 = vmatpush1.bf16.msra.mxu0 %v897
  %3843 = vmatprep.subr.bf16.mxu0 0
  %3844 = vmatpush1.bf16.msra.mxu0 %v898
  %3845 = vmatprep.subr.bf16.mxu0 0
  %3846 = vmatpush1.bf16.msra.mxu0 %v899
  %3847 = vmatprep.subr.bf16.mxu0 0
  %3848 = vmatpush1.bf16.msra.mxu0 %v900
  %3849 = vmatprep.subr.bf16.mxu0 0
  %3850 = vmatpush1.bf16.msra.mxu0 %v901
  %3851 = vmatprep.subr.bf16.mxu0 0
  %3852 = vmatpush1.bf16.msra.mxu0 %v902
  %3853 = vmatprep.subr.bf16.mxu0 0
  %3854 = vmatpush1.bf16.msra.mxu0 %v903
  %3855 = vmatprep.subr.bf16.mxu0 0
  %3856 = vmatpush1.bf16.msra.mxu0 %v904
  %3857 = vmatprep.subr.bf16.mxu0 0
  %3858 = vmatpush1.bf16.msra.mxu0 0
  %3859 = vmatprep.subr.bf16.mxu0 0
  %3860 = vmatpush1.bf16.msra.mxu0 0
  %3861 = vmatprep.subr.bf16.mxu0 0
  %3862 = vmatpush1.bf16.msra.mxu0 0
  %3863 = vmatprep.subr.bf16.mxu0 0
  %3864 = vmatpush1.bf16.msra.mxu0 0
  %3865 = vmatprep.subr.bf16.mxu0 0
  %3866 = vmatpush1.bf16.msra.mxu0 0
  %3867 = vmatprep.subr.bf16.mxu0 0
  %3868 = vmatpush1.bf16.msra.mxu0 0
  %3869 = vmatprep.subr.bf16.mxu0 0
  %3870 = vmatpush1.bf16.msra.mxu0 0
  %3871 = vmatprep.subr.bf16.mxu0 0
  %3872 = vmatpush1.bf16.msra.mxu0 0
  %3873 = vmatprep.mubr.bf16.mxu0 0
  %3874 = vmatmul.mubr.bf16.gmra.mrb[0].mxu0 %v3468
  %v3875 = vpop.f32.mrb[0].mxu0
  %v3876 = vadd.f32 %v3836, %v3875
  %v3877 = vpop.f32.mrb[0].mxu0
  %v3878 = vpop.f32.mrb[0].mxu0
  %v3879 = vpop.f32.mrb[0].mxu0
  %3880 = vdwg.mxu0
  %v3881 = vadd.f32 %v3876, %v226
  %v3882 = vmax.f32 %v3881, 0.0
  %v3883 = vpack.c.bf16 %v3882, %v3882
  %3884 = vmatprep.subr.bf16.mxu0 0
  %3885 = vmatpush1.bf16.msra.mxu0 %v1230
  %3886 = vmatprep.subr.bf16.mxu0 0
  %3887 = vmatpush1.bf16.msra.mxu0 %v1231
  %3888 = vmatprep.subr.bf16.mxu0 0
  %3889 = vmatpush1.bf16.msra.mxu0 %v1232
  %3890 = vmatprep.subr.bf16.mxu0 0
  %3891 = vmatpush1.bf16.msra.mxu0 %v1233
  %3892 = vmatprep.subr.bf16.mxu0 0
  %3893 = vmatpush1.bf16.msra.mxu0 %v1234
  %3894 = vmatprep.subr.bf16.mxu0 0
  %3895 = vmatpush1.bf16.msra.mxu0 %v1235
  %3896 = vmatprep.subr.bf16.mxu0 0
  %3897 = vmatpush1.bf16.msra.mxu0 %v1236
  %3898 = vmatprep.subr.bf16.mxu0 0
  %3899 = vmatpush1.bf16.msra.mxu0 %v1237
  %3900 = vmatprep.subr.bf16.mxu0 0
  %3901 = vmatpush1.bf16.msra.mxu0 0
  %3902 = vmatprep.subr.bf16.mxu0 0
  %3903 = vmatpush1.bf16.msra.mxu0 0
  %3904 = vmatprep.subr.bf16.mxu0 0
  %3905 = vmatpush1.bf16.msra.mxu0 0
  %3906 = vmatprep.subr.bf16.mxu0 0
  %3907 = vmatpush1.bf16.msra.mxu0 0
  %3908 = vmatprep.subr.bf16.mxu0 0
  %3909 = vmatpush1.bf16.msra.mxu0 0
  %3910 = vmatprep.subr.bf16.mxu0 0
  %3911 = vmatpush1.bf16.msra.mxu0 0
  %3912 = vmatprep.subr.bf16.mxu0 0
  %3913 = vmatpush1.bf16.msra.mxu0 0
  %3914 = vmatprep.subr.bf16.mxu0 0
  %3915 = vmatpush1.bf16.msra.mxu0 0
  %3916 = vmatprep.mubr.bf16.mxu0 0
  %3917 = vmatmul.mubr.bf16.gmra.mrb[0].mxu0 %v3634
  %v3918 = vpop.f32.mrb[0].mxu0
  %v3919 = vadd.f32 0.0, %v3918
  %v3920 = vpop.f32.mrb[0].mxu0
  %v3921 = vpop.f32.mrb[0].mxu0
  %v3922 = vpop.f32.mrb[0].mxu0
  %3923 = vdwg.mxu0
  %3924 = vmatprep.subr.bf16.mxu0 0
  %3925 = vmatpush1.bf16.msra.mxu0 %v1318
  %3926 = vmatprep.subr.bf16.mxu0 0
  %3927 = vmatpush1.bf16.msra.mxu0 %v1319
  %3928 = vmatprep.subr.bf16.mxu0 0
  %3929 = vmatpush1.bf16.msra.mxu0 %v1320
  %3930 = vmatprep.subr.bf16.mxu0 0
  %3931 = vmatpush1.bf16.msra.mxu0 %v1321
  %3932 = vmatprep.subr.bf16.mxu0 0
  %3933 = vmatpush1.bf16.msra.mxu0 %v1322
  %3934 = vmatprep.subr.bf16.mxu0 0
  %3935 = vmatpush1.bf16.msra.mxu0 %v1323
  %3936 = vmatprep.subr.bf16.mxu0 0
  %3937 = vmatpush1.bf16.msra.mxu0 %v1324
  %3938 = vmatprep.subr.bf16.mxu0 0
  %3939 = vmatpush1.bf16.msra.mxu0 %v1325
  %3940 = vmatprep.subr.bf16.mxu0 0
  %3941 = vmatpush1.bf16.msra.mxu0 0
  %3942 = vmatprep.subr.bf16.mxu0 0
  %3943 = vmatpush1.bf16.msra.mxu0 0
  %3944 = vmatprep.subr.bf16.mxu0 0
  %3945 = vmatpush1.bf16.msra.mxu0 0
  %3946 = vmatprep.subr.bf16.mxu0 0
  %3947 = vmatpush1.bf16.msra.mxu0 0
  %3948 = vmatprep.subr.bf16.mxu0 0
  %3949 = vmatpush1.bf16.msra.mxu0 0
  %3950 = vmatprep.subr.bf16.mxu0 0
  %3951 = vmatpush1.bf16.msra.mxu0 0
  %3952 = vmatprep.subr.bf16.mxu0 0
  %3953 = vmatpush1.bf16.msra.mxu0 0
  %3954 = vmatprep.subr.bf16.mxu0 0
  %3955 = vmatpush1.bf16.msra.mxu0 0
  %3956 = vmatprep.mubr.bf16.mxu0 0
  %3957 = vmatmul.mubr.bf16.gmra.mrb[0].mxu0 %v3551
  %v3958 = vpop.f32.mrb[0].mxu0
  %v3959 = vadd.f32 %v3919, %v3958
  %v3960 = vpop.f32.mrb[0].mxu0
  %v3961 = vpop.f32.mrb[0].mxu0
  %v3962 = vpop.f32.mrb[0].mxu0
  %3963 = vdwg.mxu0
  %v3964 = vadd.f32 %v3959, %v235
  %v3965 = vmax.f32 %v3964, 0.0
  %v3966 = vpack.c.bf16 %v3965, %v3965
  %3967 = vmatprep.subr.bf16.mxu0 0
  %3968 = vmatpush1.bf16.msra.mxu0 %v1734
  %3969 = vmatprep.subr.bf16.mxu0 0
  %3970 = vmatpush1.bf16.msra.mxu0 %v1735
  %3971 = vmatprep.subr.bf16.mxu0 0
  %3972 = vmatpush1.bf16.msra.mxu0 %v1736
  %3973 = vmatprep.subr.bf16.mxu0 0
  %3974 = vmatpush1.bf16.msra.mxu0 %v1737
  %3975 = vmatprep.subr.bf16.mxu0 0
  %3976 = vmatpush1.bf16.msra.mxu0 %v1738
  %3977 = vmatprep.subr.bf16.mxu0 0
  %3978 = vmatpush1.bf16.msra.mxu0 %v1739
  %3979 = vmatprep.subr.bf16.mxu0 0
  %3980 = vmatpush1.bf16.msra.mxu0 %v1740
  %3981 = vmatprep.subr.bf16.mxu0 0
  %3982 = vmatpush1.bf16.msra.mxu0 %v1741
  %3983 = vmatprep.subr.bf16.mxu0 0
  %3984 = vmatpush1.bf16.msra.mxu0 0
  %3985 = vmatprep.subr.bf16.mxu0 0
  %3986 = vmatpush1.bf16.msra.mxu0 0
  %3987 = vmatprep.subr.bf16.mxu0 0
  %3988 = vmatpush1.bf16.msra.mxu0 0
  %3989 = vmatprep.subr.bf16.mxu0 0
  %3990 = vmatpush1.bf16.msra.mxu0 0
  %3991 = vmatprep.subr.bf16.mxu0 0
  %3992 = vmatpush1.bf16.msra.mxu0 0
  %3993 = vmatprep.subr.bf16.mxu0 0
  %3994 = vmatpush1.bf16.msra.mxu0 0
  %3995 = vmatprep.subr.bf16.mxu0 0
  %3996 = vmatpush1.bf16.msra.mxu0 0
  %3997 = vmatprep.subr.bf16.mxu0 0
  %3998 = vmatpush1.bf16.msra.mxu0 0
  %3999 = vmatprep.mubr.bf16.mxu0 0
  %4000 = vmatmul.mubr.bf16.gmra.mrb[0].mxu0 %v3717
  %v4001 = vpop.f32.mrb[0].mxu0
  %v4002 = vadd.f32 0.0, %v4001
  %v4003 = vpop.f32.mrb[0].mxu0
  %v4004 = vpop.f32.mrb[0].mxu0
  %v4005 = vpop.f32.mrb[0].mxu0
  %4006 = vdwg.mxu0
  %4007 = vmatprep.subr.bf16.mxu0 0
  %4008 = vmatpush1.bf16.msra.mxu0 %v1822
  %4009 = vmatprep.subr.bf16.mxu0 0
  %4010 = vmatpush1.bf16.msra.mxu0 %v1823
  %4011 = vmatprep.subr.bf16.mxu0 0
  %4012 = vmatpush1.bf16.msra.mxu0 %v1824
  %4013 = vmatprep.subr.bf16.mxu0 0
  %4014 = vmatpush1.bf16.msra.mxu0 %v1825
  %4015 = vmatprep.subr.bf16.mxu0 0
  %4016 = vmatpush1.bf16.msra.mxu0 %v1826
  %4017 = vmatprep.subr.bf16.mxu0 0
  %4018 = vmatpush1.bf16.msra.mxu0 %v1827
  %4019 = vmatprep.subr.bf16.mxu0 0
  %4020 = vmatpush1.bf16.msra.mxu0 %v1828
  %4021 = vmatprep.subr.bf16.mxu0 0
  %4022 = vmatpush1.bf16.msra.mxu0 %v1829
  %4023 = vmatprep.subr.bf16.mxu0 0
  %4024 = vmatpush1.bf16.msra.mxu0 0
  %4025 = vmatprep.subr.bf16.mxu0 0
  %4026 = vmatpush1.bf16.msra.mxu0 0
  %4027 = vmatprep.subr.bf16.mxu0 0
  %4028 = vmatpush1.bf16.msra.mxu0 0
  %4029 = vmatprep.subr.bf16.mxu0 0
  %4030 = vmatpush1.bf16.msra.mxu0 0
  %4031 = vmatprep.subr.bf16.mxu0 0
  %4032 = vmatpush1.bf16.msra.mxu0 0
  %4033 = vmatprep.subr.bf16.mxu0 0
  %4034 = vmatpush1.bf16.msra.mxu0 0
  %4035 = vmatprep.subr.bf16.mxu0 0
  %4036 = vmatpush1.bf16.msra.mxu0 0
  %4037 = vmatprep.subr.bf16.mxu0 0
  %4038 = vmatpush1.bf16.msra.mxu0 0
  %4039 = vmatprep.mubr.bf16.mxu0 0
  %4040 = vmatmul.mubr.bf16.gmra.mrb[0].mxu0 %v3634
  %v4041 = vpop.f32.mrb[0].mxu0
  %v4042 = vadd.f32 %v4002, %v4041
  %v4043 = vpop.f32.mrb[0].mxu0
  %v4044 = vpop.f32.mrb[0].mxu0
  %v4045 = vpop.f32.mrb[0].mxu0
  %4046 = vdwg.mxu0
  %v4047 = vadd.f32 %v4042, %v244
  %v4048 = vmax.f32 %v4047, 0.0
  %v4049 = vpack.c.bf16 %v4048, %v4048
  %4050 = vmatprep.subr.bf16.mxu0 0
  %4051 = vmatpush1.bf16.msra.mxu0 %v2321
  %4052 = vmatprep.subr.bf16.mxu0 0
  %4053 = vmatpush1.bf16.msra.mxu0 %v2322
  %4054 = vmatprep.subr.bf16.mxu0 0
  %4055 = vmatpush1.bf16.msra.mxu0 %v2323
  %4056 = vmatprep.subr.bf16.mxu0 0
  %4057 = vmatpush1.bf16.msra.mxu0 %v2324
  %4058 = vmatprep.subr.bf16.mxu0 0
  %4059 = vmatpush1.bf16.msra.mxu0 %v2325
  %4060 = vmatprep.subr.bf16.mxu0 0
  %4061 = vmatpush1.bf16.msra.mxu0 %v2326
  %4062 = vmatprep.subr.bf16.mxu0 0
  %4063 = vmatpush1.bf16.msra.mxu0 %v2327
  %4064 = vmatprep.subr.bf16.mxu0 0
  %4065 = vmatpush1.bf16.msra.mxu0 %v2328
  %4066 = vmatprep.subr.bf16.mxu0 0
  %4067 = vmatpush1.bf16.msra.mxu0 0
  %4068 = vmatprep.subr.bf16.mxu0 0
  %4069 = vmatpush1.bf16.msra.mxu0 0
  %4070 = vmatprep.subr.bf16.mxu0 0
  %4071 = vmatpush1.bf16.msra.mxu0 0
  %4072 = vmatprep.subr.bf16.mxu0 0
  %4073 = vmatpush1.bf16.msra.mxu0 0
  %4074 = vmatprep.subr.bf16.mxu0 0
  %4075 = vmatpush1.bf16.msra.mxu0 0
  %4076 = vmatprep.subr.bf16.mxu0 0
  %4077 = vmatpush1.bf16.msra.mxu0 0
  %4078 = vmatprep.subr.bf16.mxu0 0
  %4079 = vmatpush1.bf16.msra.mxu0 0
  %4080 = vmatprep.subr.bf16.mxu0 0
  %4081 = vmatpush1.bf16.msra.mxu0 0
  %4082 = vmatprep.mubr.bf16.mxu0 0
  %4083 = vmatmul.mubr.bf16.gmra.mrb[0].mxu0 %v3800
  %v4084 = vpop.f32.mrb[0].mxu0
  %v4085 = vadd.f32 0.0, %v4084
  %v4086 = vpop.f32.mrb[0].mxu0
  %v4087 = vpop.f32.mrb[0].mxu0
  %v4088 = vpop.f32.mrb[0].mxu0
  %4089 = vdwg.mxu0
  %4090 = vmatprep.subr.bf16.mxu0 0
  %4091 = vmatpush1.bf16.msra.mxu0 %v2409
  %4092 = vmatprep.subr.bf16.mxu0 0
  %4093 = vmatpush1.bf16.msra.mxu0 %v2410
  %4094 = vmatprep.subr.bf16.mxu0 0
  %4095 = vmatpush1.bf16.msra.mxu0 %v2411
  %4096 = vmatprep.subr.bf16.mxu0 0
  %4097 = vmatpush1.bf16.msra.mxu0 %v2412
  %4098 = vmatprep.subr.bf16.mxu0 0
  %4099 = vmatpush1.bf16.msra.mxu0 %v2413
  %4100 = vmatprep.subr.bf16.mxu0 0
  %4101 = vmatpush1.bf16.msra.mxu0 %v2414
  %4102 = vmatprep.subr.bf16.mxu0 0
  %4103 = vmatpush1.bf16.msra.mxu0 %v2415
  %4104 = vmatprep.subr.bf16.mxu0 0
  %4105 = vmatpush1.bf16.msra.mxu0 %v2416
  %4106 = vmatprep.subr.bf16.mxu0 0
  %4107 = vmatpush1.bf16.msra.mxu0 0
  %4108 = vmatprep.subr.bf16.mxu0 0
  %4109 = vmatpush1.bf16.msra.mxu0 0
  %4110 = vmatprep.subr.bf16.mxu0 0
  %4111 = vmatpush1.bf16.msra.mxu0 0
  %4112 = vmatprep.subr.bf16.mxu0 0
  %4113 = vmatpush1.bf16.msra.mxu0 0
  %4114 = vmatprep.subr.bf16.mxu0 0
  %4115 = vmatpush1.bf16.msra.mxu0 0
  %4116 = vmatprep.subr.bf16.mxu0 0
  %4117 = vmatpush1.bf16.msra.mxu0 0
  %4118 = vmatprep.subr.bf16.mxu0 0
  %4119 = vmatpush1.bf16.msra.mxu0 0
  %4120 = vmatprep.subr.bf16.mxu0 0
  %4121 = vmatpush1.bf16.msra.mxu0 0
  %4122 = vmatprep.mubr.bf16.mxu0 0
  %4123 = vmatmul.mubr.bf16.gmra.mrb[0].mxu0 %v3717
  %v4124 = vpop.f32.mrb[0].mxu0
  %v4125 = vadd.f32 %v4085, %v4124
  %v4126 = vpop.f32.mrb[0].mxu0
  %v4127 = vpop.f32.mrb[0].mxu0
  %v4128 = vpop.f32.mrb[0].mxu0
  %4129 = vdwg.mxu0
  %v4130 = vadd.f32 %v4125, %v253
  %v4131 = vmax.f32 %v4130, 0.0
  %v4132 = vpack.c.bf16 %v4131, %v4131
  %4133 = vmatprep.subr.bf16.mxu0 0
  %4134 = vmatpush1.bf16.msra.mxu0 %v1230
  %4135 = vmatprep.subr.bf16.mxu0 0
  %4136 = vmatpush1.bf16.msra.mxu0 %v1231
  %4137 = vmatprep.subr.bf16.mxu0 0
  %4138 = vmatpush1.bf16.msra.mxu0 %v1232
  %4139 = vmatprep.subr.bf16.mxu0 0
  %4140 = vmatpush1.bf16.msra.mxu0 %v1233
  %4141 = vmatprep.subr.bf16.mxu0 0
  %4142 = vmatpush1.bf16.msra.mxu0 %v1234
  %4143 = vmatprep.subr.bf16.mxu0 0
  %4144 = vmatpush1.bf16.msra.mxu0 %v1235
  %4145 = vmatprep.subr.bf16.mxu0 0
  %4146 = vmatpush1.bf16.msra.mxu0 %v1236
  %4147 = vmatprep.subr.bf16.mxu0 0
  %4148 = vmatpush1.bf16.msra.mxu0 %v1237
  %4149 = vmatprep.subr.bf16.mxu0 0
  %4150 = vmatpush1.bf16.msra.mxu0 0
  %4151 = vmatprep.subr.bf16.mxu0 0
  %4152 = vmatpush1.bf16.msra.mxu0 0
  %4153 = vmatprep.subr.bf16.mxu0 0
  %4154 = vmatpush1.bf16.msra.mxu0 0
  %4155 = vmatprep.subr.bf16.mxu0 0
  %4156 = vmatpush1.bf16.msra.mxu0 0
  %4157 = vmatprep.subr.bf16.mxu0 0
  %4158 = vmatpush1.bf16.msra.mxu0 0
  %4159 = vmatprep.subr.bf16.mxu0 0
  %4160 = vmatpush1.bf16.msra.mxu0 0
  %4161 = vmatprep.subr.bf16.mxu0 0
  %4162 = vmatpush1.bf16.msra.mxu0 0
  %4163 = vmatprep.subr.bf16.mxu0 0
  %4164 = vmatpush1.bf16.msra.mxu0 0
  %4165 = vmatprep.mubr.bf16.mxu0 0
  %4166 = vmatmul.mubr.bf16.gmra.mrb[0].mxu0 %v3966
  %v4167 = vpop.f32.mrb[0].mxu0
  %v4168 = vadd.f32 0.0, %v4167
  %v4169 = vpop.f32.mrb[0].mxu0
  %v4170 = vpop.f32.mrb[0].mxu0
  %v4171 = vpop.f32.mrb[0].mxu0
  %4172 = vdwg.mxu0
  %4173 = vmatprep.subr.bf16.mxu0 0
  %4174 = vmatpush1.bf16.msra.mxu0 %v1318
  %4175 = vmatprep.subr.bf16.mxu0 0
  %4176 = vmatpush1.bf16.msra.mxu0 %v1319
  %4177 = vmatprep.subr.bf16.mxu0 0
  %4178 = vmatpush1.bf16.msra.mxu0 %v1320
  %4179 = vmatprep.subr.bf16.mxu0 0
  %4180 = vmatpush1.bf16.msra.mxu0 %v1321
  %4181 = vmatprep.subr.bf16.mxu0 0
  %4182 = vmatpush1.bf16.msra.mxu0 %v1322
  %4183 = vmatprep.subr.bf16.mxu0 0
  %4184 = vmatpush1.bf16.msra.mxu0 %v1323
  %4185 = vmatprep.subr.bf16.mxu0 0
  %4186 = vmatpush1.bf16.msra.mxu0 %v1324
  %4187 = vmatprep.subr.bf16.mxu0 0
  %4188 = vmatpush1.bf16.msra.mxu0 %v1325
  %4189 = vmatprep.subr.bf16.mxu0 0
  %4190 = vmatpush1.bf16.msra.mxu0 0
  %4191 = vmatprep.subr.bf16.mxu0 0
  %4192 = vmatpush1.bf16.msra.mxu0 0
  %4193 = vmatprep.subr.bf16.mxu0 0
  %4194 = vmatpush1.bf16.msra.mxu0 0
  %4195 = vmatprep.subr.bf16.mxu0 0
  %4196 = vmatpush1.bf16.msra.mxu0 0
  %4197 = vmatprep.subr.bf16.mxu0 0
  %4198 = vmatpush1.bf16.msra.mxu0 0
  %4199 = vmatprep.subr.bf16.mxu0 0
  %4200 = vmatpush1.bf16.msra.mxu0 0
  %4201 = vmatprep.subr.bf16.mxu0 0
  %4202 = vmatpush1.bf16.msra.mxu0 0
  %4203 = vmatprep.subr.bf16.mxu0 0
  %4204 = vmatpush1.bf16.msra.mxu0 0
  %4205 = vmatprep.mubr.bf16.mxu0 0
  %4206 = vmatmul.mubr.bf16.gmra.mrb[0].mxu0 %v3883
  %v4207 = vpop.f32.mrb[0].mxu0
  %v4208 = vadd.f32 %v4168, %v4207
  %v4209 = vpop.f32.mrb[0].mxu0
  %v4210 = vpop.f32.mrb[0].mxu0
  %v4211 = vpop.f32.mrb[0].mxu0
  %4212 = vdwg.mxu0
  %v4213 = vadd.f32 %v4208, %v235
  %v4214 = vmax.f32 %v4213, 0.0
  %v4215 = vpack.c.bf16 %v4214, %v4214
  %4216 = vmatprep.subr.bf16.mxu0 0
  %4217 = vmatpush1.bf16.msra.mxu0 %v1734
  %4218 = vmatprep.subr.bf16.mxu0 0
  %4219 = vmatpush1.bf16.msra.mxu0 %v1735
  %4220 = vmatprep.subr.bf16.mxu0 0
  %4221 = vmatpush1.bf16.msra.mxu0 %v1736
  %4222 = vmatprep.subr.bf16.mxu0 0
  %4223 = vmatpush1.bf16.msra.mxu0 %v1737
  %4224 = vmatprep.subr.bf16.mxu0 0
  %4225 = vmatpush1.bf16.msra.mxu0 %v1738
  %4226 = vmatprep.subr.bf16.mxu0 0
  %4227 = vmatpush1.bf16.msra.mxu0 %v1739
  %4228 = vmatprep.subr.bf16.mxu0 0
  %4229 = vmatpush1.bf16.msra.mxu0 %v1740
  %4230 = vmatprep.subr.bf16.mxu0 0
  %4231 = vmatpush1.bf16.msra.mxu0 %v1741
  %4232 = vmatprep.subr.bf16.mxu0 0
  %4233 = vmatpush1.bf16.msra.mxu0 0
  %4234 = vmatprep.subr.bf16.mxu0 0
  %4235 = vmatpush1.bf16.msra.mxu0 0
  %4236 = vmatprep.subr.bf16.mxu0 0
  %4237 = vmatpush1.bf16.msra.mxu0 0
  %4238 = vmatprep.subr.bf16.mxu0 0
  %4239 = vmatpush1.bf16.msra.mxu0 0
  %4240 = vmatprep.subr.bf16.mxu0 0
  %4241 = vmatpush1.bf16.msra.mxu0 0
  %4242 = vmatprep.subr.bf16.mxu0 0
  %4243 = vmatpush1.bf16.msra.mxu0 0
  %4244 = vmatprep.subr.bf16.mxu0 0
  %4245 = vmatpush1.bf16.msra.mxu0 0
  %4246 = vmatprep.subr.bf16.mxu0 0
  %4247 = vmatpush1.bf16.msra.mxu0 0
  %4248 = vmatprep.mubr.bf16.mxu0 0
  %4249 = vmatmul.mubr.bf16.gmra.mrb[0].mxu0 %v4049
  %v4250 = vpop.f32.mrb[0].mxu0
  %v4251 = vadd.f32 0.0, %v4250
  %v4252 = vpop.f32.mrb[0].mxu0
  %v4253 = vpop.f32.mrb[0].mxu0
  %v4254 = vpop.f32.mrb[0].mxu0
  %4255 = vdwg.mxu0
  %4256 = vmatprep.subr.bf16.mxu0 0
  %4257 = vmatpush1.bf16.msra.mxu0 %v1822
  %4258 = vmatprep.subr.bf16.mxu0 0
  %4259 = vmatpush1.bf16.msra.mxu0 %v1823
  %4260 = vmatprep.subr.bf16.mxu0 0
  %4261 = vmatpush1.bf16.msra.mxu0 %v1824
  %4262 = vmatprep.subr.bf16.mxu0 0
  %4263 = vmatpush1.bf16.msra.mxu0 %v1825
  %4264 = vmatprep.subr.bf16.mxu0 0
  %4265 = vmatpush1.bf16.msra.mxu0 %v1826
  %4266 = vmatprep.subr.bf16.mxu0 0
  %4267 = vmatpush1.bf16.msra.mxu0 %v1827
  %4268 = vmatprep.subr.bf16.mxu0 0
  %4269 = vmatpush1.bf16.msra.mxu0 %v1828
  %4270 = vmatprep.subr.bf16.mxu0 0
  %4271 = vmatpush1.bf16.msra.mxu0 %v1829
  %4272 = vmatprep.subr.bf16.mxu0 0
  %4273 = vmatpush1.bf16.msra.mxu0 0
  %4274 = vmatprep.subr.bf16.mxu0 0
  %4275 = vmatpush1.bf16.msra.mxu0 0
  %4276 = vmatprep.subr.bf16.mxu0 0
  %4277 = vmatpush1.bf16.msra.mxu0 0
  %4278 = vmatprep.subr.bf16.mxu0 0
  %4279 = vmatpush1.bf16.msra.mxu0 0
  %4280 = vmatprep.subr.bf16.mxu0 0
  %4281 = vmatpush1.bf16.msra.mxu0 0
  %4282 = vmatprep.subr.bf16.mxu0 0
  %4283 = vmatpush1.bf16.msra.mxu0 0
  %4284 = vmatprep.subr.bf16.mxu0 0
  %4285 = vmatpush1.bf16.msra.mxu0 0
  %4286 = vmatprep.subr.bf16.mxu0 0
  %4287 = vmatpush1.bf16.msra.mxu0 0
  %4288 = vmatprep.mubr.bf16.mxu0 0
  %4289 = vmatmul.mubr.bf16.gmra.mrb[0].mxu0 %v3966
  %v4290 = vpop.f32.mrb[0].mxu0
  %v4291 = vadd.f32 %v4251, %v4290
  %v4292 = vpop.f32.mrb[0].mxu0
  %v4293 = vpop.f32.mrb[0].mxu0
  %v4294 = vpop.f32.mrb[0].mxu0
  %4295 = vdwg.mxu0
  %v4296 = vadd.f32 %v4291, %v244
  %v4297 = vmax.f32 %v4296, 0.0
  %v4298 = vpack.c.bf16 %v4297, %v4297
  %4299 = vmatprep.subr.bf16.mxu0 0
  %4300 = vmatpush1.bf16.msra.mxu0 %v2321
  %4301 = vmatprep.subr.bf16.mxu0 0
  %4302 = vmatpush1.bf16.msra.mxu0 %v2322
  %4303 = vmatprep.subr.bf16.mxu0 0
  %4304 = vmatpush1.bf16.msra.mxu0 %v2323
  %4305 = vmatprep.subr.bf16.mxu0 0
  %4306 = vmatpush1.bf16.msra.mxu0 %v2324
  %4307 = vmatprep.subr.bf16.mxu0 0
  %4308 = vmatpush1.bf16.msra.mxu0 %v2325
  %4309 = vmatprep.subr.bf16.mxu0 0
  %4310 = vmatpush1.bf16.msra.mxu0 %v2326
  %4311 = vmatprep.subr.bf16.mxu0 0
  %4312 = vmatpush1.bf16.msra.mxu0 %v2327
  %4313 = vmatprep.subr.bf16.mxu0 0
  %4314 = vmatpush1.bf16.msra.mxu0 %v2328
  %4315 = vmatprep.subr.bf16.mxu0 0
  %4316 = vmatpush1.bf16.msra.mxu0 0
  %4317 = vmatprep.subr.bf16.mxu0 0
  %4318 = vmatpush1.bf16.msra.mxu0 0
  %4319 = vmatprep.subr.bf16.mxu0 0
  %4320 = vmatpush1.bf16.msra.mxu0 0
  %4321 = vmatprep.subr.bf16.mxu0 0
  %4322 = vmatpush1.bf16.msra.mxu0 0
  %4323 = vmatprep.subr.bf16.mxu0 0
  %4324 = vmatpush1.bf16.msra.mxu0 0
  %4325 = vmatprep.subr.bf16.mxu0 0
  %4326 = vmatpush1.bf16.msra.mxu0 0
  %4327 = vmatprep.subr.bf16.mxu0 0
  %4328 = vmatpush1.bf16.msra.mxu0 0
  %4329 = vmatprep.subr.bf16.mxu0 0
  %4330 = vmatpush1.bf16.msra.mxu0 0
  %4331 = vmatprep.mubr.bf16.mxu0 0
  %4332 = vmatmul.mubr.bf16.gmra.mrb[0].mxu0 %v4132
  %v4333 = vpop.f32.mrb[0].mxu0
  %v4334 = vadd.f32 0.0, %v4333
  %v4335 = vpop.f32.mrb[0].mxu0
  %v4336 = vpop.f32.mrb[0].mxu0
  %v4337 = vpop.f32.mrb[0].mxu0
  %4338 = vdwg.mxu0
  %4339 = vmatprep.subr.bf16.mxu0 0
  %4340 = vmatpush1.bf16.msra.mxu0 %v2409
  %4341 = vmatprep.subr.bf16.mxu0 0
  %4342 = vmatpush1.bf16.msra.mxu0 %v2410
  %4343 = vmatprep.subr.bf16.mxu0 0
  %4344 = vmatpush1.bf16.msra.mxu0 %v2411
  %4345 = vmatprep.subr.bf16.mxu0 0
  %4346 = vmatpush1.bf16.msra.mxu0 %v2412
  %4347 = vmatprep.subr.bf16.mxu0 0
  %4348 = vmatpush1.bf16.msra.mxu0 %v2413
  %4349 = vmatprep.subr.bf16.mxu0 0
  %4350 = vmatpush1.bf16.msra.mxu0 %v2414
  %4351 = vmatprep.subr.bf16.mxu0 0
  %4352 = vmatpush1.bf16.msra.mxu0 %v2415
  %4353 = vmatprep.subr.bf16.mxu0 0
  %4354 = vmatpush1.bf16.msra.mxu0 %v2416
  %4355 = vmatprep.subr.bf16.mxu0 0
  %4356 = vmatpush1.bf16.msra.mxu0 0
  %4357 = vmatprep.subr.bf16.mxu0 0
  %4358 = vmatpush1.bf16.msra.mxu0 0
  %4359 = vmatprep.subr.bf16.mxu0 0
  %4360 = vmatpush1.bf16.msra.mxu0 0
  %4361 = vmatprep.subr.bf16.mxu0 0
  %4362 = vmatpush1.bf16.msra.mxu0 0
  %4363 = vmatprep.subr.bf16.mxu0 0
  %4364 = vmatpush1.bf16.msra.mxu0 0
  %4365 = vmatprep.subr.bf16.mxu0 0
  %4366 = vmatpush1.bf16.msra.mxu0 0
  %4367 = vmatprep.subr.bf16.mxu0 0
  %4368 = vmatpush1.bf16.msra.mxu0 0
  %4369 = vmatprep.subr.bf16.mxu0 0
  %4370 = vmatpush1.bf16.msra.mxu0 0
  %4371 = vmatprep.mubr.bf16.mxu0 0
  %4372 = vmatmul.mubr.bf16.gmra.mrb[0].mxu0 %v4049
  %v4373 = vpop.f32.mrb[0].mxu0
  %v4374 = vadd.f32 %v4334, %v4373
  %v4375 = vpop.f32.mrb[0].mxu0
  %v4376 = vpop.f32.mrb[0].mxu0
  %v4377 = vpop.f32.mrb[0].mxu0
  %4378 = vdwg.mxu0
  %v4379 = vadd.f32 %v4374, %v253
  %v4380 = vmax.f32 %v4379, 0.0
  %v4381 = vpack.c.bf16 %v4380, %v4380
  %4382 = vmatprep.subr.bf16.mxu0 0
  %4383 = vmatpush1.bf16.msra.mxu0 %v1734
  %4384 = vmatprep.subr.bf16.mxu0 0
  %4385 = vmatpush1.bf16.msra.mxu0 %v1735
  %4386 = vmatprep.subr.bf16.mxu0 0
  %4387 = vmatpush1.bf16.msra.mxu0 %v1736
  %4388 = vmatprep.subr.bf16.mxu0 0
  %4389 = vmatpush1.bf16.msra.mxu0 %v1737
  %4390 = vmatprep.subr.bf16.mxu0 0
  %4391 = vmatpush1.bf16.msra.mxu0 %v1738
  %4392 = vmatprep.subr.bf16.mxu0 0
  %4393 = vmatpush1.bf16.msra.mxu0 %v1739
  %4394 = vmatprep.subr.bf16.mxu0 0
  %4395 = vmatpush1.bf16.msra.mxu0 %v1740
  %4396 = vmatprep.subr.bf16.mxu0 0
  %4397 = vmatpush1.bf16.msra.mxu0 %v1741
  %4398 = vmatprep.subr.bf16.mxu0 0
  %4399 = vmatpush1.bf16.msra.mxu0 0
  %4400 = vmatprep.subr.bf16.mxu0 0
  %4401 = vmatpush1.bf16.msra.mxu0 0
  %4402 = vmatprep.subr.bf16.mxu0 0
  %4403 = vmatpush1.bf16.msra.mxu0 0
  %4404 = vmatprep.subr.bf16.mxu0 0
  %4405 = vmatpush1.bf16.msra.mxu0 0
  %4406 = vmatprep.subr.bf16.mxu0 0
  %4407 = vmatpush1.bf16.msra.mxu0 0
  %4408 = vmatprep.subr.bf16.mxu0 0
  %4409 = vmatpush1.bf16.msra.mxu0 0
  %4410 = vmatprep.subr.bf16.mxu0 0
  %4411 = vmatpush1.bf16.msra.mxu0 0
  %4412 = vmatprep.subr.bf16.mxu0 0
  %4413 = vmatpush1.bf16.msra.mxu0 0
  %4414 = vmatprep.mubr.bf16.mxu0 0
  %4415 = vmatmul.mubr.bf16.gmra.mrb[0].mxu0 %v4298
  %v4416 = vpop.f32.mrb[0].mxu0
  %v4417 = vadd.f32 0.0, %v4416
  %v4418 = vpop.f32.mrb[0].mxu0
  %v4419 = vpop.f32.mrb[0].mxu0
  %v4420 = vpop.f32.mrb[0].mxu0
  %4421 = vdwg.mxu0
  %4422 = vmatprep.subr.bf16.mxu0 0
  %4423 = vmatpush1.bf16.msra.mxu0 %v1822
  %4424 = vmatprep.subr.bf16.mxu0 0
  %4425 = vmatpush1.bf16.msra.mxu0 %v1823
  %4426 = vmatprep.subr.bf16.mxu0 0
  %4427 = vmatpush1.bf16.msra.mxu0 %v1824
  %4428 = vmatprep.subr.bf16.mxu0 0
  %4429 = vmatpush1.bf16.msra.mxu0 %v1825
  %4430 = vmatprep.subr.bf16.mxu0 0
  %4431 = vmatpush1.bf16.msra.mxu0 %v1826
  %4432 = vmatprep.subr.bf16.mxu0 0
  %4433 = vmatpush1.bf16.msra.mxu0 %v1827
  %4434 = vmatprep.subr.bf16.mxu0 0
  %4435 = vmatpush1.bf16.msra.mxu0 %v1828
  %4436 = vmatprep.subr.bf16.mxu0 0
  %4437 = vmatpush1.bf16.msra.mxu0 %v1829
  %4438 = vmatprep.subr.bf16.mxu0 0
  %4439 = vmatpush1.bf16.msra.mxu0 0
  %4440 = vmatprep.subr.bf16.mxu0 0
  %4441 = vmatpush1.bf16.msra.mxu0 0
  %4442 = vmatprep.subr.bf16.mxu0 0
  %4443 = vmatpush1.bf16.msra.mxu0 0
  %4444 = vmatprep.subr.bf16.mxu0 0
  %4445 = vmatpush1.bf16.msra.mxu0 0
  %4446 = vmatprep.subr.bf16.mxu0 0
  %4447 = vmatpush1.bf16.msra.mxu0 0
  %4448 = vmatprep.subr.bf16.mxu0 0
  %4449 = vmatpush1.bf16.msra.mxu0 0
  %4450 = vmatprep.subr.bf16.mxu0 0
  %4451 = vmatpush1.bf16.msra.mxu0 0
  %4452 = vmatprep.subr.bf16.mxu0 0
  %4453 = vmatpush1.bf16.msra.mxu0 0
  %4454 = vmatprep.mubr.bf16.mxu0 0
  %4455 = vmatmul.mubr.bf16.gmra.mrb[0].mxu0 %v4215
  %v4456 = vpop.f32.mrb[0].mxu0
  %v4457 = vadd.f32 %v4417, %v4456
  %v4458 = vpop.f32.mrb[0].mxu0
  %v4459 = vpop.f32.mrb[0].mxu0
  %v4460 = vpop.f32.mrb[0].mxu0
  %4461 = vdwg.mxu0
  %v4462 = vadd.f32 %v4457, %v244
  %v4463 = vmax.f32 %v4462, 0.0
  %v4464 = vpack.c.bf16 %v4463, %v4463
  %4465 = vmatprep.subr.bf16.mxu0 0
  %4466 = vmatpush1.bf16.msra.mxu0 %v2321
  %4467 = vmatprep.subr.bf16.mxu0 0
  %4468 = vmatpush1.bf16.msra.mxu0 %v2322
  %4469 = vmatprep.subr.bf16.mxu0 0
  %4470 = vmatpush1.bf16.msra.mxu0 %v2323
  %4471 = vmatprep.subr.bf16.mxu0 0
  %4472 = vmatpush1.bf16.msra.mxu0 %v2324
  %4473 = vmatprep.subr.bf16.mxu0 0
  %4474 = vmatpush1.bf16.msra.mxu0 %v2325
  %4475 = vmatprep.subr.bf16.mxu0 0
  %4476 = vmatpush1.bf16.msra.mxu0 %v2326
  %4477 = vmatprep.subr.bf16.mxu0 0
  %4478 = vmatpush1.bf16.msra.mxu0 %v2327
  %4479 = vmatprep.subr.bf16.mxu0 0
  %4480 = vmatpush1.bf16.msra.mxu0 %v2328
  %4481 = vmatprep.subr.bf16.mxu0 0
  %4482 = vmatpush1.bf16.msra.mxu0 0
  %4483 = vmatprep.subr.bf16.mxu0 0
  %4484 = vmatpush1.bf16.msra.mxu0 0
  %4485 = vmatprep.subr.bf16.mxu0 0
  %4486 = vmatpush1.bf16.msra.mxu0 0
  %4487 = vmatprep.subr.bf16.mxu0 0
  %4488 = vmatpush1.bf16.msra.mxu0 0
  %4489 = vmatprep.subr.bf16.mxu0 0
  %4490 = vmatpush1.bf16.msra.mxu0 0
  %4491 = vmatprep.subr.bf16.mxu0 0
  %4492 = vmatpush1.bf16.msra.mxu0 0
  %4493 = vmatprep.subr.bf16.mxu0 0
  %4494 = vmatpush1.bf16.msra.mxu0 0
  %4495 = vmatprep.subr.bf16.mxu0 0
  %4496 = vmatpush1.bf16.msra.mxu0 0
  %4497 = vmatprep.mubr.bf16.mxu0 0
  %4498 = vmatmul.mubr.bf16.gmra.mrb[0].mxu0 %v4381
  %v4499 = vpop.f32.mrb[0].mxu0
  %v4500 = vadd.f32 0.0, %v4499
  %v4501 = vpop.f32.mrb[0].mxu0
  %v4502 = vpop.f32.mrb[0].mxu0
  %v4503 = vpop.f32.mrb[0].mxu0
  %4504 = vdwg.mxu0
  %4505 = vmatprep.subr.bf16.mxu0 0
  %4506 = vmatpush1.bf16.msra.mxu0 %v2409
  %4507 = vmatprep.subr.bf16.mxu0 0
  %4508 = vmatpush1.bf16.msra.mxu0 %v2410
  %4509 = vmatprep.subr.bf16.mxu0 0
  %4510 = vmatpush1.bf16.msra.mxu0 %v2411
  %4511 = vmatprep.subr.bf16.mxu0 0
  %4512 = vmatpush1.bf16.msra.mxu0 %v2412
  %4513 = vmatprep.subr.bf16.mxu0 0
  %4514 = vmatpush1.bf16.msra.mxu0 %v2413
  %4515 = vmatprep.subr.bf16.mxu0 0
  %4516 = vmatpush1.bf16.msra.mxu0 %v2414
  %4517 = vmatprep.subr.bf16.mxu0 0
  %4518 = vmatpush1.bf16.msra.mxu0 %v2415
  %4519 = vmatprep.subr.bf16.mxu0 0
  %4520 = vmatpush1.bf16.msra.mxu0 %v2416
  %4521 = vmatprep.subr.bf16.mxu0 0
  %4522 = vmatpush1.bf16.msra.mxu0 0
  %4523 = vmatprep.subr.bf16.mxu0 0
  %4524 = vmatpush1.bf16.msra.mxu0 0
  %4525 = vmatprep.subr.bf16.mxu0 0
  %4526 = vmatpush1.bf16.msra.mxu0 0
  %4527 = vmatprep.subr.bf16.mxu0 0
  %4528 = vmatpush1.bf16.msra.mxu0 0
  %4529 = vmatprep.subr.bf16.mxu0 0
  %4530 = vmatpush1.bf16.msra.mxu0 0
  %4531 = vmatprep.subr.bf16.mxu0 0
  %4532 = vmatpush1.bf16.msra.mxu0 0
  %4533 = vmatprep.subr.bf16.mxu0 0
  %4534 = vmatpush1.bf16.msra.mxu0 0
  %4535 = vmatprep.subr.bf16.mxu0 0
  %4536 = vmatpush1.bf16.msra.mxu0 0
  %4537 = vmatprep.mubr.bf16.mxu0 0
  %4538 = vmatmul.mubr.bf16.gmra.mrb[0].mxu0 %v4298
  %v4539 = vpop.f32.mrb[0].mxu0
  %v4540 = vadd.f32 %v4500, %v4539
  %v4541 = vpop.f32.mrb[0].mxu0
  %v4542 = vpop.f32.mrb[0].mxu0
  %v4543 = vpop.f32.mrb[0].mxu0
  %4544 = vdwg.mxu0
  %v4545 = vadd.f32 %v4540, %v253
  %v4546 = vmax.f32 %v4545, 0.0
  %v4547 = vpack.c.bf16 %v4546, %v4546
  %4548 = vmatprep.subr.bf16.mxu0 0
  %4549 = vmatpush1.bf16.msra.mxu0 %v2321
  %4550 = vmatprep.subr.bf16.mxu0 0
  %4551 = vmatpush1.bf16.msra.mxu0 %v2322
  %4552 = vmatprep.subr.bf16.mxu0 0
  %4553 = vmatpush1.bf16.msra.mxu0 %v2323
  %4554 = vmatprep.subr.bf16.mxu0 0
  %4555 = vmatpush1.bf16.msra.mxu0 %v2324
  %4556 = vmatprep.subr.bf16.mxu0 0
  %4557 = vmatpush1.bf16.msra.mxu0 %v2325
  %4558 = vmatprep.subr.bf16.mxu0 0
  %4559 = vmatpush1.bf16.msra.mxu0 %v2326
  %4560 = vmatprep.subr.bf16.mxu0 0
  %4561 = vmatpush1.bf16.msra.mxu0 %v2327
  %4562 = vmatprep.subr.bf16.mxu0 0
  %4563 = vmatpush1.bf16.msra.mxu0 %v2328
  %4564 = vmatprep.subr.bf16.mxu0 0
  %4565 = vmatpush1.bf16.msra.mxu0 0
  %4566 = vmatprep.subr.bf16.mxu0 0
  %4567 = vmatpush1.bf16.msra.mxu0 0
  %4568 = vmatprep.subr.bf16.mxu0 0
  %4569 = vmatpush1.bf16.msra.mxu0 0
  %4570 = vmatprep.subr.bf16.mxu0 0
  %4571 = vmatpush1.bf16.msra.mxu0 0
  %4572 = vmatprep.subr.bf16.mxu0 0
  %4573 = vmatpush1.bf16.msra.mxu0 0
  %4574 = vmatprep.subr.bf16.mxu0 0
  %4575 = vmatpush1.bf16.msra.mxu0 0
  %4576 = vmatprep.subr.bf16.mxu0 0
  %4577 = vmatpush1.bf16.msra.mxu0 0
  %4578 = vmatprep.subr.bf16.mxu0 0
  %4579 = vmatpush1.bf16.msra.mxu0 0
  %4580 = vmatprep.mubr.bf16.mxu0 0
  %4581 = vmatmul.mubr.bf16.gmra.mrb[0].mxu0 %v4547
  %v4582 = vpop.f32.mrb[0].mxu0
  %v4583 = vadd.f32 0.0, %v4582
  %v4584 = vpop.f32.mrb[0].mxu0
  %v4585 = vpop.f32.mrb[0].mxu0
  %v4586 = vpop.f32.mrb[0].mxu0
  %4587 = vdwg.mxu0
  %4588 = vmatprep.subr.bf16.mxu0 0
  %4589 = vmatpush1.bf16.msra.mxu0 %v2409
  %4590 = vmatprep.subr.bf16.mxu0 0
  %4591 = vmatpush1.bf16.msra.mxu0 %v2410
  %4592 = vmatprep.subr.bf16.mxu0 0
  %4593 = vmatpush1.bf16.msra.mxu0 %v2411
  %4594 = vmatprep.subr.bf16.mxu0 0
  %4595 = vmatpush1.bf16.msra.mxu0 %v2412
  %4596 = vmatprep.subr.bf16.mxu0 0
  %4597 = vmatpush1.bf16.msra.mxu0 %v2413
  %4598 = vmatprep.subr.bf16.mxu0 0
  %4599 = vmatpush1.bf16.msra.mxu0 %v2414
  %4600 = vmatprep.subr.bf16.mxu0 0
  %4601 = vmatpush1.bf16.msra.mxu0 %v2415
  %4602 = vmatprep.subr.bf16.mxu0 0
  %4603 = vmatpush1.bf16.msra.mxu0 %v2416
  %4604 = vmatprep.subr.bf16.mxu0 0
  %4605 = vmatpush1.bf16.msra.mxu0 0
  %4606 = vmatprep.subr.bf16.mxu0 0
  %4607 = vmatpush1.bf16.msra.mxu0 0
  %4608 = vmatprep.subr.bf16.mxu0 0
  %4609 = vmatpush1.bf16.msra.mxu0 0
  %4610 = vmatprep.subr.bf16.mxu0 0
  %4611 = vmatpush1.bf16.msra.mxu0 0
  %4612 = vmatprep.subr.bf16.mxu0 0
  %4613 = vmatpush1.bf16.msra.mxu0 0
  %4614 = vmatprep.subr.bf16.mxu0 0
  %4615 = vmatpush1.bf16.msra.mxu0 0
  %4616 = vmatprep.subr.bf16.mxu0 0
  %4617 = vmatpush1.bf16.msra.mxu0 0
  %4618 = vmatprep.subr.bf16.mxu0 0
  %4619 = vmatpush1.bf16.msra.mxu0 0
  %4620 = vmatprep.mubr.bf16.mxu0 0
  %4621 = vmatmul.mubr.bf16.gmra.mrb[0].mxu0 %v4464
  %v4622 = vpop.f32.mrb[0].mxu0
  %v4623 = vadd.f32 %v4583, %v4622
  %v4624 = vpop.f32.mrb[0].mxu0
  %v4625 = vpop.f32.mrb[0].mxu0
  %v4626 = vpop.f32.mrb[0].mxu0
  %4627 = vdwg.mxu0
  %v4628 = vadd.f32 %v4623, %v253
  %v4629 = vmax.f32 %v4628, 0.0
  %v4630 = vpack.c.bf16 %v4629, %v4629
  %v4631 = vld [vmem:[%s25] sm:$0xf]
  %v4632 = vld [vmem:[%s25 + $0x4] sm:$0xf]
  %v4633 = vld [vmem:[%s25 + $0x8] sm:$0xf]
  %v4634 = vld [vmem:[%s25 + $0xc] sm:$0xf]
  %v4635 = vld [vmem:[%s25 + $0x10] sm:$0xf]
  %v4636 = vld [vmem:[%s25 + $0x14] sm:$0xf]
  %v4637 = vld [vmem:[%s25 + $0x18] sm:$0xf]
  %v4638 = vld [vmem:[%s25 + $0x1c] sm:$0xf]
  %v4639 = vld [vmem:[%s25 + $0x20] sm:$0xf]
  %v4640 = vld [vmem:[%s25 + $0x24] sm:$0xf]
  %v4641 = vld [vmem:[%s25 + $0x28] sm:$0xf]
  %v4642 = vld [vmem:[%s25 + $0x2c] sm:$0xf]
  %v4643 = vld [vmem:[%s25 + $0x30] sm:$0xf]
  %v4644 = vld [vmem:[%s25 + $0x34] sm:$0xf]
  %v4645 = vld [vmem:[%s25 + $0x38] sm:$0xf]
  %v4646 = vld [vmem:[%s25 + $0x3c] sm:$0xf]
  %v4647 = vld [vmem:[%s26] sm:$0x1]
  %v4649 = vlaneseq
  %v4650 = vshrl.u32 %v4649, 7
  %v4651 = vsub.s32 0, %v4650
  %v4652 = vrot.slane %v4647, %v4651
  %v4670 = vunpack.c.l.b16 %v4631
  %v4671 = vunpack.c.l.b16 %v4632
  %v4672 = vunpack.c.l.b16 %v4633
  %v4673 = vunpack.c.l.b16 %v4634
  %v4674 = vunpack.c.l.b16 %v4635
  %v4675 = vunpack.c.l.b16 %v4636
  %v4676 = vunpack.c.l.b16 %v4637
  %v4677 = vunpack.c.l.b16 %v4638
  %v4678 = vunpack.c.l.b16 %v4639
  %v4679 = vunpack.c.l.b16 %v4640
  %v4680 = vunpack.c.l.b16 %v4641
  %v4681 = vunpack.c.l.b16 %v4642
  %v4682 = vunpack.c.l.b16 %v4643
  %v4683 = vunpack.c.l.b16 %v4644
  %v4684 = vunpack.c.l.b16 %v4645
  %v4685 = vunpack.c.l.b16 %v4646
  %v4686 = vpack.c.b16 %v4671, %v4670
  %v4687 = vpack.c.b16 %v4673, %v4672
  %v4688 = vpack.c.b16 %v4675, %v4674
  %v4689 = vpack.c.b16 %v4677, %v4676
  %v4690 = vpack.c.b16 %v4679, %v4678
  %v4691 = vpack.c.b16 %v4681, %v4680
  %v4692 = vpack.c.b16 %v4683, %v4682
  %v4693 = vpack.c.b16 %v4685, %v4684
  %4702 = vmatprep.subr.bf16.mxu0 0
  %4703 = vmatpush1.bf16.msra.mxu0 %v4686
  %4704 = vmatprep.subr.bf16.mxu0 0
  %4705 = vmatpush1.bf16.msra.mxu0 %v4687
  %4706 = vmatprep.subr.bf16.mxu0 0
  %4707 = vmatpush1.bf16.msra.mxu0 %v4688
  %4708 = vmatprep.subr.bf16.mxu0 0
  %4709 = vmatpush1.bf16.msra.mxu0 %v4689
  %4710 = vmatprep.subr.bf16.mxu0 0
  %4711 = vmatpush1.bf16.msra.mxu0 %v4690
  %4712 = vmatprep.subr.bf16.mxu0 0
  %4713 = vmatpush1.bf16.msra.mxu0 %v4691
  %4714 = vmatprep.subr.bf16.mxu0 0
  %4715 = vmatpush1.bf16.msra.mxu0 %v4692
  %4716 = vmatprep.subr.bf16.mxu0 0
  %4717 = vmatpush1.bf16.msra.mxu0 %v4693
  %4718 = vmatprep.subr.bf16.mxu0 0
  %4719 = vmatpush1.bf16.msra.mxu0 0
  %4720 = vmatprep.subr.bf16.mxu0 0
  %4721 = vmatpush1.bf16.msra.mxu0 0
  %4722 = vmatprep.subr.bf16.mxu0 0
  %4723 = vmatpush1.bf16.msra.mxu0 0
  %4724 = vmatprep.subr.bf16.mxu0 0
  %4725 = vmatpush1.bf16.msra.mxu0 0
  %4726 = vmatprep.subr.bf16.mxu0 0
  %4727 = vmatpush1.bf16.msra.mxu0 0
  %4728 = vmatprep.subr.bf16.mxu0 0
  %4729 = vmatpush1.bf16.msra.mxu0 0
  %4730 = vmatprep.subr.bf16.mxu0 0
  %4731 = vmatpush1.bf16.msra.mxu0 0
  %4732 = vmatprep.subr.bf16.mxu0 0
  %4733 = vmatpush1.bf16.msra.mxu0 0
  %4734 = vmatprep.mubr.bf16.mxu0 0
  %4735 = vmatmul.mubr.bf16.gmra.mrb[0].mxu0 %v4630
  %v4736 = vpop.f32.mrb[0].mxu0
  %v4737 = vadd.f32 %v4652, %v4736
  %v4738 = vpop.f32.mrb[0].mxu0
  %v4739 = vpop.f32.mrb[0].mxu0
  %v4740 = vpop.f32.mrb[0].mxu0
  %4741 = vdwg.mxu0
  %4742 = vst [vmem:[%s27] sm:$0xff] %v4737
  // Predicated region
  $region110: #{rnn_forward.1} parent=0 // pred_check
    _
  $region111: #{rnn_forward.1} parent=0 // pred_check_branch
    %4744 = sbr.rel (0) target = $region113
  $region112: #{rnn_forward.1} parent=0 // pred_region
    _
  $region113: #{rnn_forward.1} parent=0 // pred_fallthru
    _
  // Predicated region
  $region114: #{rnn_forward.1} parent=0 // pred_check
    _
  $region115: #{rnn_forward.1} parent=0 // pred_check_branch
    %4746 = sbr.rel (0) target = $region117
  $region116: #{rnn_forward.1} parent=0 // pred_region
    _
  $region117: #{rnn_forward.1} parent=0 // pred_fallthru
    _

</llo_original>
